<compile_context>
chip_gen: v6e
topology: v6e:2x2x1
jax: 0.10.0
libtpu: 0.0.40
codegen_flags: <defaults>
</compile_context>

<pallas_src>
import jax
import jax.numpy as jnp
from jax.experimental import pallas as pl
from jax.experimental.pallas import tpu as pltpu

CP = 128  # lane-padded channel width


def _make_kernel(H, W, cp):
    Hp, Wp = H + 2, W + 2
    HW = H * W
    TAPS = [(dy, dx) for dy in range(3) for dx in range(3)]

    def im2col(view):
        """view(dy, dx) -> (H, W, cp) f32; returns the (HW, 9*cp) bf16 im2col operand."""
        cols = jnp.concatenate(
            [view(dy, dx).astype(jnp.bfloat16) for dy, dx in TAPS], axis=-1)
        return cols.reshape(HW, 9 * cp)

    def kernel(x_ref, w1_ref, wr_ref, b1_ref, br_ref, w2_ref, b2_ref, o_ref,
               hbuf, pbuf):
        x = x_ref[0]  # (Hp, Wp, cp) f32, zero halo already in place

        # ---- residual 1x1 conv (+ folded residual-BN): one small matmul on the interior
        xc = x[1:1 + H, 1:1 + W, :].reshape(HW, cp)
        res = jnp.dot(xc.astype(jnp.bfloat16), wr_ref[...],
                      preferred_element_type=jnp.float32) + br_ref[...]

        # ---- stage 1: depthwise3x3 -> pointwise1x1 -> BN1 scale, one K=9*cp matmul
        cols1 = im2col(lambda dy, dx: x[dy:dy + H, dx:dx + W, :])
        h = jnp.dot(cols1, w1_ref[...], preferred_element_type=jnp.float32)
        h = jnp.maximum(h + b1_ref[...], 0.0)                    # BN1 bias + ReLU

        # re-embed h into a zero-halo frame (zero-padding semantics of conv #2)
        hbuf[...] = jnp.zeros((Hp, Wp, cp), jnp.float32)
        hbuf[pl.ds(1, H), pl.ds(1, W), :] = h.reshape(H, W, cp)

        # ---- stage 2: depthwise3x3 -> pointwise1x1 -> BN2 scale, one K=9*cp matmul
        cols2 = im2col(lambda dy, dx: hbuf[pl.ds(dy, H), pl.ds(dx, W), :])
        h2 = jnp.dot(cols2, w2_ref[...], preferred_element_type=jnp.float32) + b2_ref[...]

        # ---- MaxPool 3x3 / stride 1 / pad 1: -inf-halo frame, running max of 9 views
        pbuf[...] = jnp.full((Hp, Wp, cp), -jnp.inf, jnp.float32)
        pbuf[pl.ds(1, H), pl.ds(1, W), :] = h2.reshape(H, W, cp)
        mp = pbuf[pl.ds(0, H), pl.ds(0, W), :]
        for dy, dx in TAPS[1:]:
            mp = jnp.maximum(mp, pbuf[pl.ds(dy, H), pl.ds(dx, W), :])

        o_ref[0] = mp + res.reshape(H, W, cp)

    return kernel


def _bn_fold(gamma, beta, mean, var, eps=1e-5):
    scale = gamma / jnp.sqrt(var + eps)
    bias = beta - mean * scale
    return scale.astype(jnp.float32), bias.astype(jnp.float32)


def residual_xception_block(x_nchw, params):
    """x_nchw: (B, Cin, H, W) f32 -> (B, Cout, H, W) f32 (inference-mode BN)."""
    B, Cin, H, W = x_nchw.shape
    Cout = params["wpw1"].shape[1]
    Hp, Wp = H + 2, W + 2

    s1, b1 = _bn_fold(*params["bn1"])
    s2, b2 = _bn_fold(*params["bn2"])
    sr, br = _bn_fold(*params["rbn"])

    # Per-tap composed weights W[t, c, o] = wdw[t, c] * wpw[c, o] * bn_scale[o],
    # stacked tap-major along K to match the kernel's im2col lane order.
    w1_main = params["wdw1"].reshape(9, Cin, 1) * (params["wpw1"] * s1[None, :])[None]
    w2_main = params["wdw2"].reshape(9, Cout, 1) * (params["wpw2"] * s2[None, :])[None]

    W1 = (jnp.zeros((9, CP, CP), jnp.float32)
          .at[:, :Cin, :Cout].set(w1_main.astype(jnp.float32))
          .reshape(9 * CP, CP).astype(jnp.bfloat16))
    W2 = (jnp.zeros((9, CP, CP), jnp.float32)
          .at[:, :Cout, :Cout].set(w2_main.astype(jnp.float32))
          .reshape(9 * CP, CP).astype(jnp.bfloat16))
    WR = (jnp.zeros((CP, CP), jnp.float32)
          .at[:Cin, :Cout].set((params["wres"] * sr[None, :]).astype(jnp.float32))
          .astype(jnp.bfloat16))

    b1p = jnp.zeros((1, CP), jnp.float32).at[0, :Cout].set(b1)
    b2p = jnp.zeros((1, CP), jnp.float32).at[0, :Cout].set(b2)
    brp = jnp.zeros((1, CP), jnp.float32).at[0, :Cout].set(br)

    # NCHW -> NHWC, channel-pad to CP lanes, zero spatial halo of 1 (conv zero padding).
    x_nhwc = jnp.transpose(x_nchw, (0, 2, 3, 1)).astype(jnp.float32)
    xp = jnp.zeros((B, Hp, Wp, CP), jnp.float32).at[:, 1:H + 1, 1:W + 1, :Cin].set(x_nhwc)

    kernel = _make_kernel(H, W, CP)
    out = pl.pallas_call(
        kernel,
        out_shape=jax.ShapeDtypeStruct((B, H, W, CP), jnp.float32),
        grid=(B,),
        in_specs=[
            pl.BlockSpec((1, Hp, Wp, CP), lambda b: (b, 0, 0, 0)),   # x (zero-halo frame)
            pl.BlockSpec((9 * CP, CP), lambda b: (0, 0)),            # W1 (stage-1 im2col weights)
            pl.BlockSpec((CP, CP), lambda b: (0, 0)),                # WR (residual 1x1)
            pl.BlockSpec((1, CP), lambda b: (0, 0)),                 # b1
            pl.BlockSpec((1, CP), lambda b: (0, 0)),                 # br
            pl.BlockSpec((9 * CP, CP), lambda b: (0, 0)),            # W2 (stage-2 im2col weights)
            pl.BlockSpec((1, CP), lambda b: (0, 0)),                 # b2
        ],
        out_specs=pl.BlockSpec((1, H, W, CP), lambda b: (b, 0, 0, 0)),
        scratch_shapes=[
            pltpu.VMEM((Hp, Wp, CP), jnp.float32),   # zero-halo frame for h
            pltpu.VMEM((Hp, Wp, CP), jnp.float32),   # -inf-halo frame for the maxpool
        ],
        compiler_params=pltpu.CompilerParams(dimension_semantics=("parallel",)),
    )(xp, W1, WR, b1p, brp, W2, b2p)

    return jnp.transpose(out[..., :Cout], (0, 3, 1, 2))  # back to NCHW


# ----------------------------- pure-JAX reference -----------------------------
def reference(x_nchw, p, eps=1e-5):
    hi = jax.lax.Precision.HIGHEST
    x = jnp.transpose(x_nchw, (0, 2, 3, 1)).astype(jnp.float32)

    def bn(h, g, b, m, v):
        return (h - m) / jnp.sqrt(v + eps) * g + b

    def dwconv(h, w):                       # w: (3, 3, C)
        C = h.shape[-1]
        f = w.reshape(3, 3, 1, C)
        return jax.lax.conv_general_dilated(
            h, f, (1, 1), "SAME",
            dimension_numbers=("NHWC", "HWIO", "NHWC"),
            feature_group_count=C, precision=hi)

    def pwconv(h, w):
        return jnp.einsum("nhwc,cd->nhwd", h, w, precision=hi)

    res = bn(pwconv(x, p["wres"]), *p["rbn"])
    h = pwconv(dwconv(x, p["wdw1"]), p["wpw1"])
    h = jnp.maximum(bn(h, *p["bn1"]), 0.0)
    h = pwconv(dwconv(h, p["wdw2"]), p["wpw2"])
    h = bn(h, *p["bn2"])
    h = jax.lax.reduce_window(h, -jnp.inf, jax.lax.max,
                              (1, 3, 3, 1), (1, 1, 1, 1),
                              padding=((0, 0), (1, 1), (1, 1), (0, 0)))
    return jnp.transpose(h + res, (0, 3, 1, 2))


# ----------------------------------- main -----------------------------------
if __name__ == "__main__":
    B, Cin, Cout, H, W = 2, 4, 8, 16, 16

    key = jax.random.PRNGKey(0)
    ks = jax.random.split(key, 20)

    def bn_params(k):
        k1, k2, k3, k4 = jax.random.split(k, 4)
        gamma = 1.0 + 0.1 * jax.random.normal(k1, (Cout,), jnp.float32)
        beta = 0.1 * jax.random.normal(k2, (Cout,), jnp.float32)
        mean = 0.1 * jax.random.normal(k3, (Cout,), jnp.float32)
        var = 0.5 + jnp.abs(jax.random.normal(k4, (Cout,), jnp.float32)) * 0.5
        return (gamma, beta, mean, var)

    params = {
        "wdw1": 0.2 * jax.random.normal(ks[0], (3, 3, Cin), jnp.float32),
        "wpw1": 0.2 * jax.random.normal(ks[1], (Cin, Cout), jnp.float32),
        "wdw2": 0.2 * jax.random.normal(ks[2], (3, 3, Cout), jnp.float32),
        "wpw2": 0.2 * jax.random.normal(ks[3], (Cout, Cout), jnp.float32),
        "wres": 0.2 * jax.random.normal(ks[4], (Cin, Cout), jnp.float32),
        "bn1": bn_params(ks[5]),
        "bn2": bn_params(ks[6]),
        "rbn": bn_params(ks[7]),
    }

    x = jax.random.normal(ks[8], (B, Cin, H, W), jnp.float32)

    out = jax.block_until_ready(residual_xception_block(x, params))
    ref = jax.block_until_ready(reference(x, params))

    assert out.shape == (B, Cout, H, W)
    # bf16 MXU operands (per review) vs. a HIGHEST-precision f32 reference: allow bf16-level error.
    err = float(jnp.max(jnp.abs(out - ref)))
    assert jnp.allclose(out, ref, rtol=2e-2, atol=2e-2), f"max abs err = {err}"

    print("KERNEL_OK")
</pallas_src>

<mosaic_0001>
module attributes {stable_mosaic.version = 11 : i64} {
  func.func @kernel(%arg0: i32, %arg1: memref<1x18x18x128xf32, #tpu.memory_space<vmem>>, %arg2: memref<1152x128xbf16, #tpu.memory_space<vmem>>, %arg3: memref<128x128xbf16, #tpu.memory_space<vmem>>, %arg4: memref<1x128xf32, #tpu.memory_space<vmem>>, %arg5: memref<1x128xf32, #tpu.memory_space<vmem>>, %arg6: memref<1152x128xbf16, #tpu.memory_space<vmem>>, %arg7: memref<1x128xf32, #tpu.memory_space<vmem>>, %arg8: memref<1x16x16x128xf32, #tpu.memory_space<vmem>>, %arg9: memref<18x18x128xf32, #tpu.memory_space<vmem>>, %arg10: memref<18x18x128xf32, #tpu.memory_space<vmem>>) attributes {dimension_semantics = [#tpu.dimension_semantics<parallel>], iteration_bounds = array<i64: 2>, scalar_prefetch = 0 : i64, scratch_operands = 2 : i64, tpu.core_type = #tpu.core_type<tc>, window_params = [{transform_indices = @transform_0, window_bounds = array<i64: 1, 18, 18, 128>}, {pipeline_mode = #tpu.pipeline_mode<synchronous>, transform_indices = @transform_1, window_bounds = array<i64: 1152, 128>}, {pipeline_mode = #tpu.pipeline_mode<synchronous>, transform_indices = @transform_2, window_bounds = array<i64: 128, 128>}, {pipeline_mode = #tpu.pipeline_mode<synchronous>, transform_indices = @transform_3, window_bounds = array<i64: 1, 128>}, {pipeline_mode = #tpu.pipeline_mode<synchronous>, transform_indices = @transform_4, window_bounds = array<i64: 1, 128>}, {pipeline_mode = #tpu.pipeline_mode<synchronous>, transform_indices = @transform_5, window_bounds = array<i64: 1152, 128>}, {pipeline_mode = #tpu.pipeline_mode<synchronous>, transform_indices = @transform_6, window_bounds = array<i64: 1, 128>}, {transform_indices = @transform_7, window_bounds = array<i64: 1, 16, 16, 128>}]} {
    %c0 = arith.constant 0 : index
    %c0_0 = arith.constant 0 : index
    %c0_1 = arith.constant 0 : index
    %c0_2 = arith.constant 0 : index
    %0 = vector.load %arg1[%c0, %c0_0, %c0_1, %c0_2] : memref<1x18x18x128xf32, #tpu.memory_space<vmem>>, vector<1x18x18x128xf32>
    %1 = vector.shape_cast %0 : vector<1x18x18x128xf32> to vector<18x18x128xf32>
    %2 = vector.extract_strided_slice %1 {offsets = [1, 1, 0], sizes = [16, 16, 128], strides = [1, 1, 1]} : vector<18x18x128xf32> to vector<16x16x128xf32>
    %3 = vector.shape_cast %2 : vector<16x16x128xf32> to vector<256x128xf32>
    %4 = arith.truncf %3 : vector<256x128xf32> to vector<256x128xbf16>
    %c0_3 = arith.constant 0 : index
    %c0_4 = arith.constant 0 : index
    %5 = vector.load %arg3[%c0_3, %c0_4] : memref<128x128xbf16, #tpu.memory_space<vmem>>, vector<128x128xbf16>
    %cst = arith.constant dense<0.000000e+00> : vector<256x128xf32>
    %6 = tpu.matmul %4, %5, %cst {dimension_numbers = #tpu.dot_dimension_numbers<[1], [0], [0], [1], [0, 0, 1, 1], [], []>} : vector<256x128xbf16>, vector<128x128xbf16>, vector<256x128xf32> -> vector<256x128xf32>
    %c0_5 = arith.constant 0 : index
    %c0_6 = arith.constant 0 : index
    %7 = vector.load %arg5[%c0_5, %c0_6] : memref<1x128xf32, #tpu.memory_space<vmem>>, vector<1x128xf32>
    %8 = vector.broadcast %7 : vector<1x128xf32> to vector<256x128xf32>
    %9 = arith.addf %6, %8 : vector<256x128xf32>
    %10 = vector.extract_strided_slice %1 {offsets = [0, 0, 0], sizes = [16, 16, 128], strides = [1, 1, 1]} : vector<18x18x128xf32> to vector<16x16x128xf32>
    %11 = arith.truncf %10 : vector<16x16x128xf32> to vector<16x16x128xbf16>
    %12 = vector.extract_strided_slice %1 {offsets = [0, 1, 0], sizes = [16, 16, 128], strides = [1, 1, 1]} : vector<18x18x128xf32> to vector<16x16x128xf32>
    %13 = arith.truncf %12 : vector<16x16x128xf32> to vector<16x16x128xbf16>
    %14 = vector.extract_strided_slice %1 {offsets = [0, 2, 0], sizes = [16, 16, 128], strides = [1, 1, 1]} : vector<18x18x128xf32> to vector<16x16x128xf32>
    %15 = arith.truncf %14 : vector<16x16x128xf32> to vector<16x16x128xbf16>
    %16 = vector.extract_strided_slice %1 {offsets = [1, 0, 0], sizes = [16, 16, 128], strides = [1, 1, 1]} : vector<18x18x128xf32> to vector<16x16x128xf32>
    %17 = arith.truncf %16 : vector<16x16x128xf32> to vector<16x16x128xbf16>
    %18 = vector.extract_strided_slice %1 {offsets = [1, 1, 0], sizes = [16, 16, 128], strides = [1, 1, 1]} : vector<18x18x128xf32> to vector<16x16x128xf32>
    %19 = arith.truncf %18 : vector<16x16x128xf32> to vector<16x16x128xbf16>
    %20 = vector.extract_strided_slice %1 {offsets = [1, 2, 0], sizes = [16, 16, 128], strides = [1, 1, 1]} : vector<18x18x128xf32> to vector<16x16x128xf32>
    %21 = arith.truncf %20 : vector<16x16x128xf32> to vector<16x16x128xbf16>
    %22 = vector.extract_strided_slice %1 {offsets = [2, 0, 0], sizes = [16, 16, 128], strides = [1, 1, 1]} : vector<18x18x128xf32> to vector<16x16x128xf32>
    %23 = arith.truncf %22 : vector<16x16x128xf32> to vector<16x16x128xbf16>
    %24 = vector.extract_strided_slice %1 {offsets = [2, 1, 0], sizes = [16, 16, 128], strides = [1, 1, 1]} : vector<18x18x128xf32> to vector<16x16x128xf32>
    %25 = arith.truncf %24 : vector<16x16x128xf32> to vector<16x16x128xbf16>
    %26 = vector.extract_strided_slice %1 {offsets = [2, 2, 0], sizes = [16, 16, 128], strides = [1, 1, 1]} : vector<18x18x128xf32> to vector<16x16x128xf32>
    %27 = arith.truncf %26 : vector<16x16x128xf32> to vector<16x16x128xbf16>
    %28 = tpu.concatenate %11, %13, %15, %17, %19, %21, %23, %25, %27 in 2 : vector<16x16x128xbf16>, vector<16x16x128xbf16>, vector<16x16x128xbf16>, vector<16x16x128xbf16>, vector<16x16x128xbf16>, vector<16x16x128xbf16>, vector<16x16x128xbf16>, vector<16x16x128xbf16>, vector<16x16x128xbf16> -> vector<16x16x1152xbf16>
    %29 = vector.shape_cast %28 : vector<16x16x1152xbf16> to vector<256x1152xbf16>
    %c0_7 = arith.constant 0 : index
    %c0_8 = arith.constant 0 : index
    %30 = vector.load %arg2[%c0_7, %c0_8] : memref<1152x128xbf16, #tpu.memory_space<vmem>>, vector<1152x128xbf16>
    %cst_9 = arith.constant dense<0.000000e+00> : vector<256x128xf32>
    %31 = tpu.matmul %29, %30, %cst_9 {dimension_numbers = #tpu.dot_dimension_numbers<[1], [0], [0], [1], [0, 0, 1, 1], [], []>} : vector<256x1152xbf16>, vector<1152x128xbf16>, vector<256x128xf32> -> vector<256x128xf32>
    %c0_10 = arith.constant 0 : index
    %c0_11 = arith.constant 0 : index
    %32 = vector.load %arg4[%c0_10, %c0_11] : memref<1x128xf32, #tpu.memory_space<vmem>>, vector<1x128xf32>
    %33 = vector.broadcast %32 : vector<1x128xf32> to vector<256x128xf32>
    %34 = arith.addf %31, %33 : vector<256x128xf32>
    %cst_12 = arith.constant 0.000000e+00 : f32
    %35 = vector.broadcast %cst_12 : f32 to vector<256x128xf32>
    %36 = arith.maximumf %34, %35 : vector<256x128xf32>
    %cst_13 = arith.constant 0.000000e+00 : f32
    %37 = vector.broadcast %cst_13 : f32 to vector<18x18x128xf32>
    %c0_14 = arith.constant 0 : index
    %c0_15 = arith.constant 0 : index
    %c0_16 = arith.constant 0 : index
    %38 = vector.load %arg9[%c0_14, %c0_15, %c0_16] : memref<18x18x128xf32, #tpu.memory_space<vmem>>, vector<18x18x128xf32>
    tpu.vector_store %arg9[%c0_14, %c0_15, %c0_16], %37 {strides = array<i32>} : memref<18x18x128xf32, #tpu.memory_space<vmem>>, vector<18x18x128xf32>,
    %39 = vector.shape_cast %36 : vector<256x128xf32> to vector<16x16x128xf32>
    %c1 = arith.constant 1 : index
    %c1_17 = arith.constant 1 : index
    %c0_18 = arith.constant 0 : index
    %40 = vector.load %arg9[%c1, %c1_17, %c0_18] : memref<18x18x128xf32, #tpu.memory_space<vmem>>, vector<16x16x128xf32>
    tpu.vector_store %arg9[%c1, %c1_17, %c0_18], %39 {strides = array<i32>} : memref<18x18x128xf32, #tpu.memory_space<vmem>>, vector<16x16x128xf32>,
    %c0_19 = arith.constant 0 : index
    %c0_20 = arith.constant 0 : index
    %c0_21 = arith.constant 0 : index
    %41 = vector.load %arg9[%c0_19, %c0_20, %c0_21] : memref<18x18x128xf32, #tpu.memory_space<vmem>>, vector<16x16x128xf32>
    %42 = arith.truncf %41 : vector<16x16x128xf32> to vector<16x16x128xbf16>
    %c0_22 = arith.constant 0 : index
    %c1_23 = arith.constant 1 : index
    %c0_24 = arith.constant 0 : index
    %43 = vector.load %arg9[%c0_22, %c1_23, %c0_24] : memref<18x18x128xf32, #tpu.memory_space<vmem>>, vector<16x16x128xf32>
    %44 = arith.truncf %43 : vector<16x16x128xf32> to vector<16x16x128xbf16>
    %c0_25 = arith.constant 0 : index
    %c2 = arith.constant 2 : index
    %c0_26 = arith.constant 0 : index
    %45 = vector.load %arg9[%c0_25, %c2, %c0_26] : memref<18x18x128xf32, #tpu.memory_space<vmem>>, vector<16x16x128xf32>
    %46 = arith.truncf %45 : vector<16x16x128xf32> to vector<16x16x128xbf16>
    %c1_27 = arith.constant 1 : index
    %c0_28 = arith.constant 0 : index
    %c0_29 = arith.constant 0 : index
    %47 = vector.load %arg9[%c1_27, %c0_28, %c0_29] : memref<18x18x128xf32, #tpu.memory_space<vmem>>, vector<16x16x128xf32>
    %48 = arith.truncf %47 : vector<16x16x128xf32> to vector<16x16x128xbf16>
    %c1_30 = arith.constant 1 : index
    %c1_31 = arith.constant 1 : index
    %c0_32 = arith.constant 0 : index
    %49 = vector.load %arg9[%c1_30, %c1_31, %c0_32] : memref<18x18x128xf32, #tpu.memory_space<vmem>>, vector<16x16x128xf32>
    %50 = arith.truncf %49 : vector<16x16x128xf32> to vector<16x16x128xbf16>
    %c1_33 = arith.constant 1 : index
    %c2_34 = arith.constant 2 : index
    %c0_35 = arith.constant 0 : index
    %51 = vector.load %arg9[%c1_33, %c2_34, %c0_35] : memref<18x18x128xf32, #tpu.memory_space<vmem>>, vector<16x16x128xf32>
    %52 = arith.truncf %51 : vector<16x16x128xf32> to vector<16x16x128xbf16>
    %c2_36 = arith.constant 2 : index
    %c0_37 = arith.constant 0 : index
    %c0_38 = arith.constant 0 : index
    %53 = vector.load %arg9[%c2_36, %c0_37, %c0_38] : memref<18x18x128xf32, #tpu.memory_space<vmem>>, vector<16x16x128xf32>
    %54 = arith.truncf %53 : vector<16x16x128xf32> to vector<16x16x128xbf16>
    %c2_39 = arith.constant 2 : index
    %c1_40 = arith.constant 1 : index
    %c0_41 = arith.constant 0 : index
    %55 = vector.load %arg9[%c2_39, %c1_40, %c0_41] : memref<18x18x128xf32, #tpu.memory_space<vmem>>, vector<16x16x128xf32>
    %56 = arith.truncf %55 : vector<16x16x128xf32> to vector<16x16x128xbf16>
    %c2_42 = arith.constant 2 : index
    %c2_43 = arith.constant 2 : index
    %c0_44 = arith.constant 0 : index
    %57 = vector.load %arg9[%c2_42, %c2_43, %c0_44] : memref<18x18x128xf32, #tpu.memory_space<vmem>>, vector<16x16x128xf32>
    %58 = arith.truncf %57 : vector<16x16x128xf32> to vector<16x16x128xbf16>
    %59 = tpu.concatenate %42, %44, %46, %48, %50, %52, %54, %56, %58 in 2 : vector<16x16x128xbf16>, vector<16x16x128xbf16>, vector<16x16x128xbf16>, vector<16x16x128xbf16>, vector<16x16x128xbf16>, vector<16x16x128xbf16>, vector<16x16x128xbf16>, vector<16x16x128xbf16>, vector<16x16x128xbf16> -> vector<16x16x1152xbf16>
    %60 = vector.shape_cast %59 : vector<16x16x1152xbf16> to vector<256x1152xbf16>
    %c0_45 = arith.constant 0 : index
    %c0_46 = arith.constant 0 : index
    %61 = vector.load %arg6[%c0_45, %c0_46] : memref<1152x128xbf16, #tpu.memory_space<vmem>>, vector<1152x128xbf16>
    %cst_47 = arith.constant dense<0.000000e+00> : vector<256x128xf32>
    %62 = tpu.matmul %60, %61, %cst_47 {dimension_numbers = #tpu.dot_dimension_numbers<[1], [0], [0], [1], [0, 0, 1, 1], [], []>} : vector<256x1152xbf16>, vector<1152x128xbf16>, vector<256x128xf32> -> vector<256x128xf32>
    %c0_48 = arith.constant 0 : index
    %c0_49 = arith.constant 0 : index
    %63 = vector.load %arg7[%c0_48, %c0_49] : memref<1x128xf32, #tpu.memory_space<vmem>>, vector<1x128xf32>
    %64 = vector.broadcast %63 : vector<1x128xf32> to vector<256x128xf32>
    %65 = arith.addf %62, %64 : vector<256x128xf32>
    %cst_50 = arith.constant 0xFF800000 : f32
    %66 = vector.broadcast %cst_50 : f32 to vector<18x18x128xf32>
    %c0_51 = arith.constant 0 : index
    %c0_52 = arith.constant 0 : index
    %c0_53 = arith.constant 0 : index
    %67 = vector.load %arg10[%c0_51, %c0_52, %c0_53] : memref<18x18x128xf32, #tpu.memory_space<vmem>>, vector<18x18x128xf32>
    tpu.vector_store %arg10[%c0_51, %c0_52, %c0_53], %66 {strides = array<i32>} : memref<18x18x128xf32, #tpu.memory_space<vmem>>, vector<18x18x128xf32>,
    %68 = vector.shape_cast %65 : vector<256x128xf32> to vector<16x16x128xf32>
    %c1_54 = arith.constant 1 : index
    %c1_55 = arith.constant 1 : index
    %c0_56 = arith.constant 0 : index
    %69 = vector.load %arg10[%c1_54, %c1_55, %c0_56] : memref<18x18x128xf32, #tpu.memory_space<vmem>>, vector<16x16x128xf32>
    tpu.vector_store %arg10[%c1_54, %c1_55, %c0_56], %68 {strides = array<i32>} : memref<18x18x128xf32, #tpu.memory_space<vmem>>, vector<16x16x128xf32>,
    %c0_57 = arith.constant 0 : index
    %c0_58 = arith.constant 0 : index
    %c0_59 = arith.constant 0 : index
    %70 = vector.load %arg10[%c0_57, %c0_58, %c0_59] : memref<18x18x128xf32, #tpu.memory_space<vmem>>, vector<16x16x128xf32>
    %c0_60 = arith.constant 0 : index
    %c1_61 = arith.constant 1 : index
    %c0_62 = arith.constant 0 : index
    %71 = vector.load %arg10[%c0_60, %c1_61, %c0_62] : memref<18x18x128xf32, #tpu.memory_space<vmem>>, vector<16x16x128xf32>
    %72 = arith.maximumf %70, %71 : vector<16x16x128xf32>
    %c0_63 = arith.constant 0 : index
    %c2_64 = arith.constant 2 : index
    %c0_65 = arith.constant 0 : index
    %73 = vector.load %arg10[%c0_63, %c2_64, %c0_65] : memref<18x18x128xf32, #tpu.memory_space<vmem>>, vector<16x16x128xf32>
    %74 = arith.maximumf %72, %73 : vector<16x16x128xf32>
    %c1_66 = arith.constant 1 : index
    %c0_67 = arith.constant 0 : index
    %c0_68 = arith.constant 0 : index
    %75 = vector.load %arg10[%c1_66, %c0_67, %c0_68] : memref<18x18x128xf32, #tpu.memory_space<vmem>>, vector<16x16x128xf32>
    %76 = arith.maximumf %74, %75 : vector<16x16x128xf32>
    %c1_69 = arith.constant 1 : index
    %c1_70 = arith.constant 1 : index
    %c0_71 = arith.constant 0 : index
    %77 = vector.load %arg10[%c1_69, %c1_70, %c0_71] : memref<18x18x128xf32, #tpu.memory_space<vmem>>, vector<16x16x128xf32>
    %78 = arith.maximumf %76, %77 : vector<16x16x128xf32>
    %c1_72 = arith.constant 1 : index
    %c2_73 = arith.constant 2 : index
    %c0_74 = arith.constant 0 : index
    %79 = vector.load %arg10[%c1_72, %c2_73, %c0_74] : memref<18x18x128xf32, #tpu.memory_space<vmem>>, vector<16x16x128xf32>
    %80 = arith.maximumf %78, %79 : vector<16x16x128xf32>
    %c2_75 = arith.constant 2 : index
    %c0_76 = arith.constant 0 : index
    %c0_77 = arith.constant 0 : index
    %81 = vector.load %arg10[%c2_75, %c0_76, %c0_77] : memref<18x18x128xf32, #tpu.memory_space<vmem>>, vector<16x16x128xf32>
    %82 = arith.maximumf %80, %81 : vector<16x16x128xf32>
    %c2_78 = arith.constant 2 : index
    %c1_79 = arith.constant 1 : index
    %c0_80 = arith.constant 0 : index
    %83 = vector.load %arg10[%c2_78, %c1_79, %c0_80] : memref<18x18x128xf32, #tpu.memory_space<vmem>>, vector<16x16x128xf32>
    %84 = arith.maximumf %82, %83 : vector<16x16x128xf32>
    %c2_81 = arith.constant 2 : index
    %c2_82 = arith.constant 2 : index
    %c0_83 = arith.constant 0 : index
    %85 = vector.load %arg10[%c2_81, %c2_82, %c0_83] : memref<18x18x128xf32, #tpu.memory_space<vmem>>, vector<16x16x128xf32>
    %86 = arith.maximumf %84, %85 : vector<16x16x128xf32>
    %87 = vector.shape_cast %9 : vector<256x128xf32> to vector<16x16x128xf32>
    %88 = arith.addf %86, %87 : vector<16x16x128xf32>
    %c0_84 = arith.constant 0 : index
    %c0_85 = arith.constant 0 : index
    %c0_86 = arith.constant 0 : index
    %c0_87 = arith.constant 0 : index
    %89 = vector.load %arg8[%c0_84, %c0_85, %c0_86, %c0_87] : memref<1x16x16x128xf32, #tpu.memory_space<vmem>>, vector<1x16x16x128xf32>
    %90 = vector.shape_cast %89 : vector<1x16x16x128xf32> to vector<16x16x128xf32>
    %91 = vector.shape_cast %88 : vector<16x16x128xf32> to vector<1x16x16x128xf32>
    tpu.vector_store %arg8[%c0_84, %c0_85, %c0_86, %c0_87], %91 {strides = array<i32>} : memref<1x16x16x128xf32, #tpu.memory_space<vmem>>, vector<1x16x16x128xf32>,
    return
  }
  func.func @transform_0(%arg0: i32) -> (i32, i32, i32, i32) {
    %c0_i32 = arith.constant 0 : i32
    %c0_i32_0 = arith.constant 0 : i32
    %c0_i32_1 = arith.constant 0 : i32
    %c0_i32_2 = arith.constant 0 : i32
    return %arg0, %c0_i32, %c0_i32_0, %c0_i32_1 : i32, i32, i32, i32
  }
  func.func @transform_1(%arg0: i32) -> (i32, i32) {
    %c0_i32 = arith.constant 0 : i32
    %c0_i32_0 = arith.constant 0 : i32
    %c0_i32_1 = arith.constant 0 : i32
    return %c0_i32, %c0_i32_0 : i32, i32
  }
  func.func @transform_2(%arg0: i32) -> (i32, i32) {
    %c0_i32 = arith.constant 0 : i32
    %c0_i32_0 = arith.constant 0 : i32
    %c0_i32_1 = arith.constant 0 : i32
    return %c0_i32, %c0_i32_0 : i32, i32
  }
  func.func @transform_3(%arg0: i32) -> (i32, i32) {
    %c0_i32 = arith.constant 0 : i32
    %c0_i32_0 = arith.constant 0 : i32
    %c0_i32_1 = arith.constant 0 : i32
    return %c0_i32, %c0_i32_0 : i32, i32
  }
  func.func @transform_4(%arg0: i32) -> (i32, i32) {
    %c0_i32 = arith.constant 0 : i32
    %c0_i32_0 = arith.constant 0 : i32
    %c0_i32_1 = arith.constant 0 : i32
    return %c0_i32, %c0_i32_0 : i32, i32
  }
  func.func @transform_5(%arg0: i32) -> (i32, i32) {
    %c0_i32 = arith.constant 0 : i32
    %c0_i32_0 = arith.constant 0 : i32
    %c0_i32_1 = arith.constant 0 : i32
    return %c0_i32, %c0_i32_0 : i32, i32
  }
  func.func @transform_6(%arg0: i32) -> (i32, i32) {
    %c0_i32 = arith.constant 0 : i32
    %c0_i32_0 = arith.constant 0 : i32
    %c0_i32_1 = arith.constant 0 : i32
    return %c0_i32, %c0_i32_0 : i32, i32
  }
  func.func @transform_7(%arg0: i32) -> (i32, i32, i32, i32) {
    %c0_i32 = arith.constant 0 : i32
    %c0_i32_0 = arith.constant 0 : i32
    %c0_i32_1 = arith.constant 0 : i32
    %c0_i32_2 = arith.constant 0 : i32
    return %arg0, %c0_i32, %c0_i32_0, %c0_i32_1 : i32, i32, i32, i32
  }
}

</mosaic_0001>

<llo_original>
// kernel: tpu_custom_call.1
$region0: #{tpu_custom_call.1}
  #allocation0 [shape = 'u32[]', space=smem, size = 0x4, offset = 0x4, fixed_abs, tag = 'smem constant byte address 0x4 - core index']
  #allocation1 [shape = 'u32[144,128]{1,0:T(1,128)}', space=vmem, size = 0x12000, scoped, tag = 'internal scratch']
  #allocation2 [shape = 'f32[18,18,128]{2,1,0:T(8,128)}', space=vmem, size = 0x36000, scoped, tag = 'scratch operand']
  #allocation3 [shape = 'f32[18,18,128]{2,1,0:T(8,128)}', space=vmem, size = 0x36000, scoped, tag = 'scratch operand']
  %s0 = inlined_call_operand.vmem [shape: f32[2,18,18,128], index: 0, kind: input, shape index: {}]
  %s1 = inlined_call_operand.vmem [shape: bf16[1152,128], index: 1, kind: input, shape index: {}]
  %s2 = inlined_call_operand.vmem [shape: bf16[128,128], index: 2, kind: input, shape index: {}]
  %s3 = inlined_call_operand.vmem [shape: f32[1,128], index: 3, kind: input, shape index: {}]
  %s4 = inlined_call_operand.vmem [shape: f32[1,128], index: 4, kind: input, shape index: {}]
  %s5 = inlined_call_operand.vmem [shape: bf16[1152,128], index: 5, kind: input, shape index: {}]
  %s6 = inlined_call_operand.vmem [shape: f32[1,128], index: 6, kind: input, shape index: {}]
  %s7 = inlined_call_operand.hbm [shape: f32[2,16,16,128], index: 7, kind: output, shape index: {}]
  %s8 = sld [smem:[#allocation0]]
  $region61: #{tpu_custom_call.1} parent=0
    _
  %s10 = ssub.s32 1, %s8
  %s11 = scalar_select 0, %s10, %s8
  $region1: #{tpu_custom_call.1} parent=0
    #allocation4 [shape = 'u8[262144]{0}', space=vmem, size = 0x40000, scoped, tag = 'output window, operand 0']
    #allocation5 [shape = 's32[2]{0}', space=sflag, size = 0x8, scoped, tag = 'scoped memory for tpu_custom_call.1']
    %12 = vsyncpa [#allocation5], 0
    %s13 = scalar_lea.sflag [#allocation5], 1
    %14 = vsyncpa %s13, 0
    loop: start=0, step=1, limit=4
    $region2: #{tpu_custom_call.1} parent=1 // loop_pre_header
      _
    $region3: #{tpu_custom_call.1} parent=1 // loop_header
      %s16 = sphi 0, %s20
      %p17 = scmp.ge.s32.totalorder %s16, 4
      %s26 = sphi 0, %s28
      %s29 = sphi 0, %s26
      %s30 = sphi 0, %s29
      %s46 = sphi 0, %s30
      %s50 = sphi 0, %s50
      %s52 = sphi 0, %s50
      %s53 = sphi 0, %s52
      %s67 = sphi 0, %s53
      %s71 = sphi 0, %s71
      %s73 = sphi 0, %s71
      %s74 = sphi 0, %s73
      %s88 = sphi 0, %s74
      %s92 = sphi 0, %s92
      %s94 = sphi 0, %s92
      %s95 = sphi 0, %s94
      %s109 = sphi 0, %s95
      %s113 = sphi 0, %s113
      %s115 = sphi 0, %s113
      %s116 = sphi 0, %s115
      %s130 = sphi 0, %s116
      %s134 = sphi 0, %s134
      %s136 = sphi 0, %s134
      %s137 = sphi 0, %s136
      %s151 = sphi 0, %s137
      %s155 = sphi 0, %s155
      %s157 = sphi 0, %s155
      %s158 = sphi 0, %s157
      %s172 = sphi 0, %s158
      %s178 = sphi 0, %s180
      %s181 = sphi 0, %s178
      %s182 = sphi 0, %s181
      %s198 = sphi 0, %s182
    $region4: #{tpu_custom_call.1} parent=1 // loop_header_branch
      %19 = sbr.rel (%p17) target = $region8
    $region5: #{tpu_custom_call.1} parent=1 // loop_body
      %s21 = ssub.s32 %s16, 1
      %s22 = ssub.s32 %s16, 2
      %s23 = sadd.s32 %s16, 1
      %s24 = ssub.s32 %s16, %s23
      %p25 = scmp.eq.s32.totalorder %s24, 0
      %s27 = sadd.s32 %s26, 1
      %s28 = scalar_select %p25, %s26, %s27
      %p31 = pneg %p25
      %p32 = scmp.eq.s32.totalorder %s16, 1
      %p33 = por %p31, %p32
      %p34 = scmp.ne.s32.totalorder %s26, %s29
      %p35 = scmp.eq.s32.totalorder %s16, 0
      %p36 = por %p34, %p35
      %p37 = scmp.ne.s32.totalorder %s26, %s29
      %p38 = scmp.eq.s32.totalorder %s21, 1
      %p39 = por %p37, %p38
      %p40 = scmp.ne.s32.totalorder %s29, %s30
      %p41 = scmp.eq.s32.totalorder %s21, 0
      %p42 = por %p40, %p41
      %p43 = scmp.ne.s32.totalorder %s29, %s30
      %p44 = scmp.eq.s32.totalorder %s22, 1
      %p45 = por %p43, %p44
      %p47 = scmp.ne.s32.totalorder %s30, %s46
      %p48 = scmp.eq.s32.totalorder %s22, 0
      %p49 = por %p47, %p48
      %s51 = sadd.s32 %s50, 1
      %p54 = scmp.eq.s32.totalorder %s16, 1
      %p55 = scmp.ne.s32.totalorder %s50, %s52
      %p56 = scmp.eq.s32.totalorder %s16, 0
      %p57 = por %p55, %p56
      %p58 = scmp.ne.s32.totalorder %s50, %s52
      %p59 = scmp.eq.s32.totalorder %s21, 1
      %p60 = por %p58, %p59
      %p61 = scmp.ne.s32.totalorder %s52, %s53
      %p62 = scmp.eq.s32.totalorder %s21, 0
      %p63 = por %p61, %p62
      %p64 = scmp.ne.s32.totalorder %s52, %s53
      %p65 = scmp.eq.s32.totalorder %s22, 1
      %p66 = por %p64, %p65
      %p68 = scmp.ne.s32.totalorder %s53, %s67
      %p69 = scmp.eq.s32.totalorder %s22, 0
      %p70 = por %p68, %p69
      %s72 = sadd.s32 %s71, 1
      %p75 = scmp.eq.s32.totalorder %s16, 1
      %p76 = scmp.ne.s32.totalorder %s71, %s73
      %p77 = scmp.eq.s32.totalorder %s16, 0
      %p78 = por %p76, %p77
      %p79 = scmp.ne.s32.totalorder %s71, %s73
      %p80 = scmp.eq.s32.totalorder %s21, 1
      %p81 = por %p79, %p80
      %p82 = scmp.ne.s32.totalorder %s73, %s74
      %p83 = scmp.eq.s32.totalorder %s21, 0
      %p84 = por %p82, %p83
      %p85 = scmp.ne.s32.totalorder %s73, %s74
      %p86 = scmp.eq.s32.totalorder %s22, 1
      %p87 = por %p85, %p86
      %p89 = scmp.ne.s32.totalorder %s74, %s88
      %p90 = scmp.eq.s32.totalorder %s22, 0
      %p91 = por %p89, %p90
      %s93 = sadd.s32 %s92, 1
      %p96 = scmp.eq.s32.totalorder %s16, 1
      %p97 = scmp.ne.s32.totalorder %s92, %s94
      %p98 = scmp.eq.s32.totalorder %s16, 0
      %p99 = por %p97, %p98
      %p100 = scmp.ne.s32.totalorder %s92, %s94
      %p101 = scmp.eq.s32.totalorder %s21, 1
      %p102 = por %p100, %p101
      %p103 = scmp.ne.s32.totalorder %s94, %s95
      %p104 = scmp.eq.s32.totalorder %s21, 0
      %p105 = por %p103, %p104
      %p106 = scmp.ne.s32.totalorder %s94, %s95
      %p107 = scmp.eq.s32.totalorder %s22, 1
      %p108 = por %p106, %p107
      %p110 = scmp.ne.s32.totalorder %s95, %s109
      %p111 = scmp.eq.s32.totalorder %s22, 0
      %p112 = por %p110, %p111
      %s114 = sadd.s32 %s113, 1
      %p117 = scmp.eq.s32.totalorder %s16, 1
      %p118 = scmp.ne.s32.totalorder %s113, %s115
      %p119 = scmp.eq.s32.totalorder %s16, 0
      %p120 = por %p118, %p119
      %p121 = scmp.ne.s32.totalorder %s113, %s115
      %p122 = scmp.eq.s32.totalorder %s21, 1
      %p123 = por %p121, %p122
      %p124 = scmp.ne.s32.totalorder %s115, %s116
      %p125 = scmp.eq.s32.totalorder %s21, 0
      %p126 = por %p124, %p125
      %p127 = scmp.ne.s32.totalorder %s115, %s116
      %p128 = scmp.eq.s32.totalorder %s22, 1
      %p129 = por %p127, %p128
      %p131 = scmp.ne.s32.totalorder %s116, %s130
      %p132 = scmp.eq.s32.totalorder %s22, 0
      %p133 = por %p131, %p132
      %s135 = sadd.s32 %s134, 1
      %p138 = scmp.eq.s32.totalorder %s16, 1
      %p139 = scmp.ne.s32.totalorder %s134, %s136
      %p140 = scmp.eq.s32.totalorder %s16, 0
      %p141 = por %p139, %p140
      %p142 = scmp.ne.s32.totalorder %s134, %s136
      %p143 = scmp.eq.s32.totalorder %s21, 1
      %p144 = por %p142, %p143
      %p145 = scmp.ne.s32.totalorder %s136, %s137
      %p146 = scmp.eq.s32.totalorder %s21, 0
      %p147 = por %p145, %p146
      %p148 = scmp.ne.s32.totalorder %s136, %s137
      %p149 = scmp.eq.s32.totalorder %s22, 1
      %p150 = por %p148, %p149
      %p152 = scmp.ne.s32.totalorder %s137, %s151
      %p153 = scmp.eq.s32.totalorder %s22, 0
      %p154 = por %p152, %p153
      %s156 = sadd.s32 %s155, 1
      %p159 = scmp.eq.s32.totalorder %s16, 1
      %p160 = scmp.ne.s32.totalorder %s155, %s157
      %p161 = scmp.eq.s32.totalorder %s16, 0
      %p162 = por %p160, %p161
      %p163 = scmp.ne.s32.totalorder %s155, %s157
      %p164 = scmp.eq.s32.totalorder %s21, 1
      %p165 = por %p163, %p164
      %p166 = scmp.ne.s32.totalorder %s157, %s158
      %p167 = scmp.eq.s32.totalorder %s21, 0
      %p168 = por %p166, %p167
      %p169 = scmp.ne.s32.totalorder %s157, %s158
      %p170 = scmp.eq.s32.totalorder %s22, 1
      %p171 = por %p169, %p170
      %p173 = scmp.ne.s32.totalorder %s158, %s172
      %p174 = scmp.eq.s32.totalorder %s22, 0
      %p175 = por %p173, %p174
      %s176 = ssub.s32 %s16, %s23
      %p177 = scmp.eq.s32.totalorder %s176, 0
      %s179 = sadd.s32 %s178, 1
      %s180 = scalar_select %p177, %s178, %s179
      %p183 = pneg %p177
      %p184 = scmp.eq.s32.totalorder %s16, 1
      %p185 = por %p183, %p184
      %p186 = scmp.ne.s32.totalorder %s178, %s181
      %p187 = scmp.eq.s32.totalorder %s16, 0
      %p188 = por %p186, %p187
      %p189 = scmp.ne.s32.totalorder %s178, %s181
      %p190 = scmp.eq.s32.totalorder %s21, 1
      %p191 = por %p189, %p190
      %p192 = scmp.ne.s32.totalorder %s181, %s182
      %p193 = scmp.eq.s32.totalorder %s21, 0
      %p194 = por %p192, %p193
      %p195 = scmp.ne.s32.totalorder %s181, %s182
      %p196 = scmp.eq.s32.totalorder %s22, 1
      %p197 = por %p195, %p196
      %p199 = scmp.ne.s32.totalorder %s182, %s198
      %p200 = scmp.eq.s32.totalorder %s22, 0
      %p201 = por %p199, %p200
      %p202 = scmp.le.s32.totalorder 1, %s16
      %p203 = scmp.lt.s32.totalorder %s16, 3
      %p204 = pnand %p202, %p203
      %p205 = pneg %p204
      // Predicated region
      $region9: #{tpu_custom_call.1} parent=5 // pred_check
        _
      $region10: #{tpu_custom_call.1} parent=5 // pred_check_branch
        %207 = sbr.rel (%p204) target = $region12
      $region11: #{tpu_custom_call.1} parent=5 // pred_region
        %s208 = ssub.s32 %s16, 1
        // Predicated region
        $region13: #{tpu_custom_call.1} parent=11 // pred_check
          %p209 = pneg %p63
        $region14: #{tpu_custom_call.1} parent=11 // pred_check_branch
          %211 = sbr.rel (%p209) target = $region16
        $region15: #{tpu_custom_call.1} parent=11 // pred_region
          _
        $region16: #{tpu_custom_call.1} parent=11 // pred_fallthru
          _
        // Predicated region
        $region17: #{tpu_custom_call.1} parent=11 // pred_check
          %p212 = pneg %p84
        $region18: #{tpu_custom_call.1} parent=11 // pred_check_branch
          %214 = sbr.rel (%p212) target = $region20
        $region19: #{tpu_custom_call.1} parent=11 // pred_region
          _
        $region20: #{tpu_custom_call.1} parent=11 // pred_fallthru
          _
        // Predicated region
        $region21: #{tpu_custom_call.1} parent=11 // pred_check
          %p215 = pneg %p105
        $region22: #{tpu_custom_call.1} parent=11 // pred_check_branch
          %217 = sbr.rel (%p215) target = $region24
        $region23: #{tpu_custom_call.1} parent=11 // pred_region
          _
        $region24: #{tpu_custom_call.1} parent=11 // pred_fallthru
          _
        // Predicated region
        $region25: #{tpu_custom_call.1} parent=11 // pred_check
          %p218 = pneg %p126
        $region26: #{tpu_custom_call.1} parent=11 // pred_check_branch
          %220 = sbr.rel (%p218) target = $region28
        $region27: #{tpu_custom_call.1} parent=11 // pred_region
          _
        $region28: #{tpu_custom_call.1} parent=11 // pred_fallthru
          _
        // Predicated region
        $region29: #{tpu_custom_call.1} parent=11 // pred_check
          %p221 = pneg %p147
        $region30: #{tpu_custom_call.1} parent=11 // pred_check_branch
          %223 = sbr.rel (%p221) target = $region32
        $region31: #{tpu_custom_call.1} parent=11 // pred_region
          _
        $region32: #{tpu_custom_call.1} parent=11 // pred_fallthru
          _
        // Predicated region
        $region33: #{tpu_custom_call.1} parent=11 // pred_check
          %p224 = pneg %p168
        $region34: #{tpu_custom_call.1} parent=11 // pred_check_branch
          %226 = sbr.rel (%p224) target = $region36
        $region35: #{tpu_custom_call.1} parent=11 // pred_region
          _
        $region36: #{tpu_custom_call.1} parent=11 // pred_fallthru
          _
      $region12: #{tpu_custom_call.1} parent=5 // pred_fallthru
        _
      %p227 = scmp.lt.s32.totalorder %s16, 2
      // Predicated region
      $region37: #{tpu_custom_call.1} parent=5 // pred_check
        %p228 = pneg %p227
      $region38: #{tpu_custom_call.1} parent=5 // pred_check_branch
        %230 = sbr.rel (%p228) target = $region40
      $region39: #{tpu_custom_call.1} parent=5 // pred_region
        // Predicated region
        $region41: #{tpu_custom_call.1} parent=39 // pred_check
          %p231 = pneg %p36
        $region42: #{tpu_custom_call.1} parent=39 // pred_check_branch
          %233 = sbr.rel (%p231) target = $region44
        $region43: #{tpu_custom_call.1} parent=39 // pred_region
          %p234 = scmp.lt.s32.totalorder %s16, 1
          %s235 = scalar_select %p234, %s16, 1
          %s236 = smul.addr %s235, 54
          %s237 = smul.addr %s236, 8
          %s238 = scalar_lea.vmem %s0, %s237
        $region44: #{tpu_custom_call.1} parent=39 // pred_fallthru
          _
      $region40: #{tpu_custom_call.1} parent=5 // pred_fallthru
        _
      %p239 = scmp.le.s32.totalorder 1, %s16
      %p240 = scmp.lt.s32.totalorder %s16, 3
      %p241 = pnand %p239, %p240
      %p242 = pneg %p241
      // Predicated region
      $region45: #{tpu_custom_call.1} parent=5 // pred_check
        _
      $region46: #{tpu_custom_call.1} parent=5 // pred_check_branch
        %244 = sbr.rel (%p241) target = $region48
      $region47: #{tpu_custom_call.1} parent=5 // pred_region
        %s245 = ssub.s32 %s16, 1
        %p246 = scmp.lt.s32.totalorder %s21, 1
        %s247 = scalar_select %p246, %s21, 1
        %s248 = smul.addr %s247, 54
        %s249 = smul.addr %s248, 8
        %s250 = scalar_lea.vmem %s0, %s249
        %p251 = pneg %p42
        %p252 = pneg %p39
        %p253 = pneg %p63
        %p254 = pneg %p60
        %p255 = pneg %p84
        %p256 = pneg %p81
        %p257 = pneg %p105
        %p258 = pneg %p102
        %p259 = pneg %p126
        %p260 = pneg %p123
        %p261 = pneg %p147
        %p262 = pneg %p144
        %p263 = pneg %p168
        %p264 = pneg %p165
        %p265 = pneg %p194
        %p266 = pneg %p191
        %s267 = sand.u32 %s181, 1
        %s268 = scalar_lea.sflag [#allocation5], %s267
        %s269 = sand.u32 %s181, 1
        %s270 = smul.addr %s269, 256
        %s271 = scalar_lea.vmem [#allocation4], %s270
        %p272 = scmp.lt.s32.totalorder %s21, 1
        %s273 = scalar_select %p272, %s21, 1
        %s274 = smul.addr %s273, 54
        %s275 = smul.addr %s274, 8
        %s276 = scalar_lea.vmem %s0, %s275
        %v278 = vld [vmem:[%s276] sm:$0xff]
        %v279 = vld [vmem:[%s276 + $0x8] sm:$0xff]
        %v280 = vld [vmem:[%s276 + $0x10] sm:$0x3]
        %v281 = vld [vmem:[%s276 + $0x18] sm:$0xff]
        %v282 = vld [vmem:[%s276 + $0x20] sm:$0xff]
        %v283 = vld [vmem:[%s276 + $0x28] sm:$0x3]
        %v284 = vld [vmem:[%s276 + $0x30] sm:$0xff]
        %v285 = vld [vmem:[%s276 + $0x38] sm:$0xff]
        %v286 = vld [vmem:[%s276 + $0x40] sm:$0x3]
        %v287 = vld [vmem:[%s276 + $0x48] sm:$0xff]
        %v288 = vld [vmem:[%s276 + $0x50] sm:$0xff]
        %v289 = vld [vmem:[%s276 + $0x58] sm:$0x3]
        %v290 = vld [vmem:[%s276 + $0x60] sm:$0xff]
        %v291 = vld [vmem:[%s276 + $0x68] sm:$0xff]
        %v292 = vld [vmem:[%s276 + $0x70] sm:$0x3]
        %v293 = vld [vmem:[%s276 + $0x78] sm:$0xff]
        %v294 = vld [vmem:[%s276 + $0x80] sm:$0xff]
        %v295 = vld [vmem:[%s276 + $0x88] sm:$0x3]
        %v296 = vld [vmem:[%s276 + $0x90] sm:$0xff]
        %v297 = vld [vmem:[%s276 + $0x98] sm:$0xff]
        %v298 = vld [vmem:[%s276 + $0xa0] sm:$0x3]
        %v299 = vld [vmem:[%s276 + $0xa8] sm:$0xff]
        %v300 = vld [vmem:[%s276 + $0xb0] sm:$0xff]
        %v301 = vld [vmem:[%s276 + $0xb8] sm:$0x3]
        %v302 = vld [vmem:[%s276 + $0xc0] sm:$0xff]
        %v303 = vld [vmem:[%s276 + $0xc8] sm:$0xff]
        %v304 = vld [vmem:[%s276 + $0xd0] sm:$0x3]
        %v305 = vld [vmem:[%s276 + $0xd8] sm:$0xff]
        %v306 = vld [vmem:[%s276 + $0xe0] sm:$0xff]
        %v307 = vld [vmem:[%s276 + $0xe8] sm:$0x3]
        %v308 = vld [vmem:[%s276 + $0xf0] sm:$0xff]
        %v309 = vld [vmem:[%s276 + $0xf8] sm:$0xff]
        %v310 = vld [vmem:[%s276 + $0x100] sm:$0x3]
        %v311 = vld [vmem:[%s276 + $0x108] sm:$0xff]
        %v312 = vld [vmem:[%s276 + $0x110] sm:$0xff]
        %v313 = vld [vmem:[%s276 + $0x118] sm:$0x3]
        %v314 = vld [vmem:[%s276 + $0x120] sm:$0xff]
        %v315 = vld [vmem:[%s276 + $0x128] sm:$0xff]
        %v316 = vld [vmem:[%s276 + $0x130] sm:$0x3]
        %v317 = vld [vmem:[%s276 + $0x138] sm:$0xff]
        %v318 = vld [vmem:[%s276 + $0x140] sm:$0xff]
        %v319 = vld [vmem:[%s276 + $0x148] sm:$0x3]
        %v320 = vld [vmem:[%s276 + $0x150] sm:$0xff]
        %v321 = vld [vmem:[%s276 + $0x158] sm:$0xff]
        %v322 = vld [vmem:[%s276 + $0x160] sm:$0x3]
        %v323 = vld [vmem:[%s276 + $0x168] sm:$0xff]
        %v324 = vld [vmem:[%s276 + $0x170] sm:$0xff]
        %v325 = vld [vmem:[%s276 + $0x178] sm:$0x3]
        %v326 = vld [vmem:[%s276 + $0x180] sm:$0xff]
        %v327 = vld [vmem:[%s276 + $0x188] sm:$0xff]
        %v328 = vld [vmem:[%s276 + $0x190] sm:$0x3]
        %v329 = vld [vmem:[%s276 + $0x198] sm:$0xff]
        %v330 = vld [vmem:[%s276 + $0x1a0] sm:$0xff]
        %v331 = vld [vmem:[%s276 + $0x1a8] sm:$0x3]
        %vm380 = vcmask 1046528
        %v381 = vrot.slane %v281, 1
        %v382 = vrot.slane %v282, 1
        %v383 = vsel %vm380, %v381, %v382
        %v384 = vrot.slane %v283, 1
        %v385 = vsel %vm380, %v382, %v384
        %v386 = vrot.slane %v284, 1
        %v387 = vrot.slane %v285, 1
        %v388 = vsel %vm380, %v386, %v387
        %v389 = vrot.slane %v286, 1
        %v390 = vsel %vm380, %v387, %v389
        %v391 = vrot.slane %v287, 1
        %v392 = vrot.slane %v288, 1
        %v393 = vsel %vm380, %v391, %v392
        %v394 = vrot.slane %v289, 1
        %v395 = vsel %vm380, %v392, %v394
        %v396 = vrot.slane %v290, 1
        %v397 = vrot.slane %v291, 1
        %v398 = vsel %vm380, %v396, %v397
        %v399 = vrot.slane %v292, 1
        %v400 = vsel %vm380, %v397, %v399
        %v401 = vrot.slane %v293, 1
        %v402 = vrot.slane %v294, 1
        %v403 = vsel %vm380, %v401, %v402
        %v404 = vrot.slane %v295, 1
        %v405 = vsel %vm380, %v402, %v404
        %v406 = vrot.slane %v296, 1
        %v407 = vrot.slane %v297, 1
        %v408 = vsel %vm380, %v406, %v407
        %v409 = vrot.slane %v298, 1
        %v410 = vsel %vm380, %v407, %v409
        %v411 = vrot.slane %v299, 1
        %v412 = vrot.slane %v300, 1
        %v413 = vsel %vm380, %v411, %v412
        %v414 = vrot.slane %v301, 1
        %v415 = vsel %vm380, %v412, %v414
        %v416 = vrot.slane %v302, 1
        %v417 = vrot.slane %v303, 1
        %v418 = vsel %vm380, %v416, %v417
        %v419 = vrot.slane %v304, 1
        %v420 = vsel %vm380, %v417, %v419
        %v421 = vrot.slane %v305, 1
        %v422 = vrot.slane %v306, 1
        %v423 = vsel %vm380, %v421, %v422
        %v424 = vrot.slane %v307, 1
        %v425 = vsel %vm380, %v422, %v424
        %v426 = vrot.slane %v308, 1
        %v427 = vrot.slane %v309, 1
        %v428 = vsel %vm380, %v426, %v427
        %v429 = vrot.slane %v310, 1
        %v430 = vsel %vm380, %v427, %v429
        %v431 = vrot.slane %v311, 1
        %v432 = vrot.slane %v312, 1
        %v433 = vsel %vm380, %v431, %v432
        %v434 = vrot.slane %v313, 1
        %v435 = vsel %vm380, %v432, %v434
        %v436 = vrot.slane %v314, 1
        %v437 = vrot.slane %v315, 1
        %v438 = vsel %vm380, %v436, %v437
        %v439 = vrot.slane %v316, 1
        %v440 = vsel %vm380, %v437, %v439
        %v441 = vrot.slane %v317, 1
        %v442 = vrot.slane %v318, 1
        %v443 = vsel %vm380, %v441, %v442
        %v444 = vrot.slane %v319, 1
        %v445 = vsel %vm380, %v442, %v444
        %v446 = vrot.slane %v320, 1
        %v447 = vrot.slane %v321, 1
        %v448 = vsel %vm380, %v446, %v447
        %v449 = vrot.slane %v322, 1
        %v450 = vsel %vm380, %v447, %v449
        %v451 = vrot.slane %v323, 1
        %v452 = vrot.slane %v324, 1
        %v453 = vsel %vm380, %v451, %v452
        %v454 = vrot.slane %v325, 1
        %v455 = vsel %vm380, %v452, %v454
        %v456 = vrot.slane %v326, 1
        %v457 = vrot.slane %v327, 1
        %v458 = vsel %vm380, %v456, %v457
        %v459 = vrot.slane %v328, 1
        %v460 = vsel %vm380, %v457, %v459
        %v493 = vpack.c.bf16 %v385, %v383
        %v494 = vpack.c.bf16 %v390, %v388
        %v495 = vpack.c.bf16 %v395, %v393
        %v496 = vpack.c.bf16 %v400, %v398
        %v497 = vpack.c.bf16 %v405, %v403
        %v498 = vpack.c.bf16 %v410, %v408
        %v499 = vpack.c.bf16 %v415, %v413
        %v500 = vpack.c.bf16 %v420, %v418
        %v501 = vpack.c.bf16 %v425, %v423
        %v502 = vpack.c.bf16 %v430, %v428
        %v503 = vpack.c.bf16 %v435, %v433
        %v504 = vpack.c.bf16 %v440, %v438
        %v505 = vpack.c.bf16 %v445, %v443
        %v506 = vpack.c.bf16 %v450, %v448
        %v507 = vpack.c.bf16 %v455, %v453
        %v508 = vpack.c.bf16 %v460, %v458
        %v509 = vld [vmem:[%s2] sm:$0xf]
        %v510 = vld [vmem:[%s2 + $0x4] sm:$0xf]
        %v511 = vld [vmem:[%s2 + $0x8] sm:$0xf]
        %v512 = vld [vmem:[%s2 + $0xc] sm:$0xf]
        %v513 = vld [vmem:[%s2 + $0x10] sm:$0xf]
        %v514 = vld [vmem:[%s2 + $0x14] sm:$0xf]
        %v515 = vld [vmem:[%s2 + $0x18] sm:$0xf]
        %v516 = vld [vmem:[%s2 + $0x1c] sm:$0xf]
        %v517 = vld [vmem:[%s2 + $0x20] sm:$0xf]
        %v518 = vld [vmem:[%s2 + $0x24] sm:$0xf]
        %v519 = vld [vmem:[%s2 + $0x28] sm:$0xf]
        %v520 = vld [vmem:[%s2 + $0x2c] sm:$0xf]
        %v521 = vld [vmem:[%s2 + $0x30] sm:$0xf]
        %v522 = vld [vmem:[%s2 + $0x34] sm:$0xf]
        %v523 = vld [vmem:[%s2 + $0x38] sm:$0xf]
        %v524 = vld [vmem:[%s2 + $0x3c] sm:$0xf]
        %v525 = vld [vmem:[%s4] sm:$0x1]
        %v527 = vlaneseq
        %v528 = vshrl.u32 %v527, 7
        %v529 = vsub.s32 0, %v528
        %v530 = vrot.slane %v525, %v529
        %v548 = vunpack.c.l.b16 %v509
        %v549 = vunpack.c.l.b16 %v510
        %v550 = vunpack.c.l.b16 %v511
        %v551 = vunpack.c.l.b16 %v512
        %v552 = vunpack.c.l.b16 %v513
        %v553 = vunpack.c.l.b16 %v514
        %v554 = vunpack.c.l.b16 %v515
        %v555 = vunpack.c.l.b16 %v516
        %v556 = vunpack.c.l.b16 %v517
        %v557 = vunpack.c.l.b16 %v518
        %v558 = vunpack.c.l.b16 %v519
        %v559 = vunpack.c.l.b16 %v520
        %v560 = vunpack.c.l.b16 %v521
        %v561 = vunpack.c.l.b16 %v522
        %v562 = vunpack.c.l.b16 %v523
        %v563 = vunpack.c.l.b16 %v524
        %v564 = vpack.c.b16 %v549, %v548
        %v565 = vpack.c.b16 %v551, %v550
        %v566 = vpack.c.b16 %v553, %v552
        %v567 = vpack.c.b16 %v555, %v554
        %v568 = vpack.c.b16 %v557, %v556
        %v569 = vpack.c.b16 %v559, %v558
        %v570 = vpack.c.b16 %v561, %v560
        %v571 = vpack.c.b16 %v563, %v562
        %580 = vmatprep.subr.bf16.mxu0 0
        %581 = vmatpush1.bf16.msra.mxu0 %v571
        %582 = vmatprep.subr.bf16.mxu0 0
        %583 = vmatpush1.bf16.msra.mxu0 %v570
        %584 = vmatprep.subr.bf16.mxu0 0
        %585 = vmatpush1.bf16.msra.mxu0 %v569
        %586 = vmatprep.subr.bf16.mxu0 0
        %587 = vmatpush1.bf16.msra.mxu0 %v568
        %588 = vmatprep.subr.bf16.mxu0 0
        %589 = vmatpush1.bf16.msra.mxu0 %v567
        %590 = vmatprep.subr.bf16.mxu0 0
        %591 = vmatpush1.bf16.msra.mxu0 %v566
        %592 = vmatprep.subr.bf16.mxu0 0
        %593 = vmatpush1.bf16.msra.mxu0 %v565
        %594 = vmatprep.subr.bf16.mxu0 0
        %595 = vmatpush1.bf16.msra.mxu0 %v564
        %596 = vmatprep.subr.bf16.mxu0 0
        %597 = vmatpush2.bf16.msra.mxu0 0
        %598 = vmatprep.subr.bf16.mxu0 0
        %599 = vmatpush2.bf16.msra.mxu0 0
        %600 = vmatprep.subr.bf16.mxu0 0
        %601 = vmatpush2.bf16.msra.mxu0 0
        %602 = vmatprep.subr.bf16.mxu0 0
        %603 = vmatpush2.bf16.msra.mxu0 0
        %604 = vmatprep.subr.bf16.mxu0 0
        %605 = vmatpush2.bf16.msra.mxu0 0
        %606 = vmatprep.subr.bf16.mxu0 0
        %607 = vmatpush2.bf16.msra.mxu0 0
        %608 = vmatprep.subr.bf16.mxu0 0
        %609 = vmatpush2.bf16.msra.mxu0 0
        %610 = vmatprep.subr.bf16.mxu0 0
        %611 = vmatpush2.bf16.msra.mxu0 0
        %612 = vmatprep.mubr.bf16.mxu0 0
        %613 = vmatmul.mubr.bf16.gmra.mxu0 %v493
        %v614 = vpop.f32.mrf.mxu0
        %v615 = vadd.f32 %v530, %v614
        %v616 = vpop.f32.mrf.mxu0
        %v617 = vpop.f32.mrf.mxu0
        %v618 = vadd.f32 %v530, %v617
        %v619 = vpop.f32.mrf.mxu0
        %620 = vmatprep.mubr.bf16.mxu0 0
        %621 = vmatmul.mubr.bf16.gmra.mxu0 %v494
        %v622 = vpop.f32.mrf.mxu0
        %v623 = vadd.f32 %v530, %v622
        %v624 = vpop.f32.mrf.mxu0
        %v625 = vpop.f32.mrf.mxu0
        %v626 = vadd.f32 %v530, %v625
        %v627 = vpop.f32.mrf.mxu0
        %628 = vmatprep.mubr.bf16.mxu0 0
        %629 = vmatmul.mubr.bf16.gmra.mxu0 %v495
        %v630 = vpop.f32.mrf.mxu0
        %v631 = vadd.f32 %v530, %v630
        %v632 = vpop.f32.mrf.mxu0
        %v633 = vpop.f32.mrf.mxu0
        %v634 = vadd.f32 %v530, %v633
        %v635 = vpop.f32.mrf.mxu0
        %636 = vmatprep.mubr.bf16.mxu0 0
        %637 = vmatmul.mubr.bf16.gmra.mxu0 %v496
        %v638 = vpop.f32.mrf.mxu0
        %v639 = vadd.f32 %v530, %v638
        %v640 = vpop.f32.mrf.mxu0
        %v641 = vpop.f32.mrf.mxu0
        %v642 = vadd.f32 %v530, %v641
        %v643 = vpop.f32.mrf.mxu0
        %644 = vmatprep.mubr.bf16.mxu0 0
        %645 = vmatmul.mubr.bf16.gmra.mxu0 %v497
        %v646 = vpop.f32.mrf.mxu0
        %v647 = vadd.f32 %v530, %v646
        %v648 = vpop.f32.mrf.mxu0
        %v649 = vpop.f32.mrf.mxu0
        %v650 = vadd.f32 %v530, %v649
        %v651 = vpop.f32.mrf.mxu0
        %652 = vmatprep.mubr.bf16.mxu0 0
        %653 = vmatmul.mubr.bf16.gmra.mxu0 %v498
        %v654 = vpop.f32.mrf.mxu0
        %v655 = vadd.f32 %v530, %v654
        %v656 = vpop.f32.mrf.mxu0
        %v657 = vpop.f32.mrf.mxu0
        %v658 = vadd.f32 %v530, %v657
        %v659 = vpop.f32.mrf.mxu0
        %660 = vmatprep.mubr.bf16.mxu0 0
        %661 = vmatmul.mubr.bf16.gmra.mxu0 %v499
        %v662 = vpop.f32.mrf.mxu0
        %v663 = vadd.f32 %v530, %v662
        %v664 = vpop.f32.mrf.mxu0
        %v665 = vpop.f32.mrf.mxu0
        %v666 = vadd.f32 %v530, %v665
        %v667 = vpop.f32.mrf.mxu0
        %668 = vmatprep.mubr.bf16.mxu0 0
        %669 = vmatmul.mubr.bf16.gmra.mxu0 %v500
        %v670 = vpop.f32.mrf.mxu0
        %v671 = vadd.f32 %v530, %v670
        %v672 = vpop.f32.mrf.mxu0
        %v673 = vpop.f32.mrf.mxu0
        %v674 = vadd.f32 %v530, %v673
        %v675 = vpop.f32.mrf.mxu0
        %676 = vmatprep.mubr.bf16.mxu0 0
        %677 = vmatmul.mubr.bf16.gmra.mxu0 %v501
        %v678 = vpop.f32.mrf.mxu0
        %v679 = vadd.f32 %v530, %v678
        %v680 = vpop.f32.mrf.mxu0
        %v681 = vpop.f32.mrf.mxu0
        %v682 = vadd.f32 %v530, %v681
        %v683 = vpop.f32.mrf.mxu0
        %684 = vmatprep.mubr.bf16.mxu0 0
        %685 = vmatmul.mubr.bf16.gmra.mxu0 %v502
        %v686 = vpop.f32.mrf.mxu0
        %v687 = vadd.f32 %v530, %v686
        %v688 = vpop.f32.mrf.mxu0
        %v689 = vpop.f32.mrf.mxu0
        %v690 = vadd.f32 %v530, %v689
        %v691 = vpop.f32.mrf.mxu0
        %692 = vmatprep.mubr.bf16.mxu0 0
        %693 = vmatmul.mubr.bf16.gmra.mxu0 %v503
        %v694 = vpop.f32.mrf.mxu0
        %v695 = vadd.f32 %v530, %v694
        %v696 = vpop.f32.mrf.mxu0
        %v697 = vpop.f32.mrf.mxu0
        %v698 = vadd.f32 %v530, %v697
        %v699 = vpop.f32.mrf.mxu0
        %700 = vmatprep.mubr.bf16.mxu0 0
        %701 = vmatmul.mubr.bf16.gmra.mxu0 %v504
        %v702 = vpop.f32.mrf.mxu0
        %v703 = vadd.f32 %v530, %v702
        %v704 = vpop.f32.mrf.mxu0
        %v705 = vpop.f32.mrf.mxu0
        %v706 = vadd.f32 %v530, %v705
        %v707 = vpop.f32.mrf.mxu0
        %708 = vmatprep.mubr.bf16.mxu0 0
        %709 = vmatmul.mubr.bf16.gmra.mxu0 %v505
        %v710 = vpop.f32.mrf.mxu0
        %v711 = vadd.f32 %v530, %v710
        %v712 = vpop.f32.mrf.mxu0
        %v713 = vpop.f32.mrf.mxu0
        %v714 = vadd.f32 %v530, %v713
        %v715 = vpop.f32.mrf.mxu0
        %716 = vmatprep.mubr.bf16.mxu0 0
        %717 = vmatmul.mubr.bf16.gmra.mxu0 %v506
        %v718 = vpop.f32.mrf.mxu0
        %v719 = vadd.f32 %v530, %v718
        %v720 = vpop.f32.mrf.mxu0
        %v721 = vpop.f32.mrf.mxu0
        %v722 = vadd.f32 %v530, %v721
        %v723 = vpop.f32.mrf.mxu0
        %724 = vmatprep.mubr.bf16.mxu0 0
        %725 = vmatmul.mubr.bf16.gmra.mxu0 %v507
        %v726 = vpop.f32.mrf.mxu0
        %v727 = vadd.f32 %v530, %v726
        %v728 = vpop.f32.mrf.mxu0
        %v729 = vpop.f32.mrf.mxu0
        %v730 = vadd.f32 %v530, %v729
        %v731 = vpop.f32.mrf.mxu0
        %732 = vmatprep.mubr.bf16.mxu0 0
        %733 = vmatmul.mubr.bf16.gmra.mxu0 %v508
        %v734 = vpop.f32.mrf.mxu0
        %v735 = vadd.f32 %v530, %v734
        %v736 = vpop.f32.mrf.mxu0
        %v737 = vpop.f32.mrf.mxu0
        %v738 = vadd.f32 %v530, %v737
        %v739 = vpop.f32.mrf.mxu0
        %740 = vdwg.mxu0
        %v741 = vpack.c.bf16 %v279, %v278
        %v742 = vpack.c.bf16 %v282, %v281
        %v743 = vpack.c.bf16 %v285, %v284
        %v744 = vpack.c.bf16 %v288, %v287
        %v745 = vpack.c.bf16 %v291, %v290
        %v746 = vpack.c.bf16 %v294, %v293
        %v747 = vpack.c.bf16 %v297, %v296
        %v748 = vpack.c.bf16 %v300, %v299
        %v749 = vpack.c.bf16 %v303, %v302
        %v750 = vpack.c.bf16 %v306, %v305
        %v751 = vpack.c.bf16 %v309, %v308
        %v752 = vpack.c.bf16 %v312, %v311
        %v753 = vpack.c.bf16 %v315, %v314
        %v754 = vpack.c.bf16 %v318, %v317
        %v755 = vpack.c.bf16 %v321, %v320
        %v756 = vpack.c.bf16 %v324, %v323
        %v757 = vpack.c.bf16 %v280, %v280
        %v758 = vpack.c.bf16 %v283, %v283
        %v759 = vpack.c.bf16 %v286, %v286
        %v760 = vpack.c.bf16 %v289, %v289
        %v761 = vpack.c.bf16 %v292, %v292
        %v762 = vpack.c.bf16 %v295, %v295
        %v763 = vpack.c.bf16 %v298, %v298
        %v764 = vpack.c.bf16 %v301, %v301
        %v765 = vpack.c.bf16 %v304, %v304
        %v766 = vpack.c.bf16 %v307, %v307
        %v767 = vpack.c.bf16 %v310, %v310
        %v768 = vpack.c.bf16 %v313, %v313
        %v769 = vpack.c.bf16 %v316, %v316
        %v770 = vpack.c.bf16 %v319, %v319
        %v771 = vpack.c.bf16 %v322, %v322
        %v772 = vpack.c.bf16 %v325, %v325
        %v773 = vpack.c.bf16 %v327, %v326
        %v774 = vpack.c.bf16 %v328, %v328
        %v775 = vpack.c.bf16 %v330, %v329
        %v776 = vpack.c.bf16 %v331, %v331
        %vm777 = vsmask.f32 7424
        %v779 = vshrl.u32 %v741, 16
        %v781 = vshll.u32 %v741, 16
        %v783 = vrot.slane %v781, 1
        %v784 = vor.u32 %v779, %v783
        %v786 = vshll.u32 %v757, 16
        %v788 = vrot.slane %v786, 1
        %v789 = vsel %vm777, %v784, %v788
        %v791 = vshrl.u32 %v742, 16
        %v793 = vshll.u32 %v742, 16
        %v795 = vrot.slane %v793, 1
        %v796 = vor.u32 %v791, %v795
        %v798 = vshll.u32 %v758, 16
        %v800 = vrot.slane %v798, 1
        %v801 = vsel %vm777, %v796, %v800
        %v803 = vshrl.u32 %v743, 16
        %v805 = vshll.u32 %v743, 16
        %v807 = vrot.slane %v805, 1
        %v808 = vor.u32 %v803, %v807
        %v810 = vshll.u32 %v759, 16
        %v812 = vrot.slane %v810, 1
        %v813 = vsel %vm777, %v808, %v812
        %v815 = vshrl.u32 %v744, 16
        %v817 = vshll.u32 %v744, 16
        %v819 = vrot.slane %v817, 1
        %v820 = vor.u32 %v815, %v819
        %v822 = vshll.u32 %v760, 16
        %v824 = vrot.slane %v822, 1
        %v825 = vsel %vm777, %v820, %v824
        %v827 = vshrl.u32 %v745, 16
        %v829 = vshll.u32 %v745, 16
        %v831 = vrot.slane %v829, 1
        %v832 = vor.u32 %v827, %v831
        %v834 = vshll.u32 %v761, 16
        %v836 = vrot.slane %v834, 1
        %v837 = vsel %vm777, %v832, %v836
        %v839 = vshrl.u32 %v746, 16
        %v841 = vshll.u32 %v746, 16
        %v843 = vrot.slane %v841, 1
        %v844 = vor.u32 %v839, %v843
        %v846 = vshll.u32 %v762, 16
        %v848 = vrot.slane %v846, 1
        %v849 = vsel %vm777, %v844, %v848
        %v851 = vshrl.u32 %v747, 16
        %v853 = vshll.u32 %v747, 16
        %v855 = vrot.slane %v853, 1
        %v856 = vor.u32 %v851, %v855
        %v858 = vshll.u32 %v763, 16
        %v860 = vrot.slane %v858, 1
        %v861 = vsel %vm777, %v856, %v860
        %v863 = vshrl.u32 %v748, 16
        %v865 = vshll.u32 %v748, 16
        %v867 = vrot.slane %v865, 1
        %v868 = vor.u32 %v863, %v867
        %v870 = vshll.u32 %v764, 16
        %v872 = vrot.slane %v870, 1
        %v873 = vsel %vm777, %v868, %v872
        %v875 = vshrl.u32 %v749, 16
        %v877 = vshll.u32 %v749, 16
        %v879 = vrot.slane %v877, 1
        %v880 = vor.u32 %v875, %v879
        %v882 = vshll.u32 %v765, 16
        %v884 = vrot.slane %v882, 1
        %v885 = vsel %vm777, %v880, %v884
        %v887 = vshrl.u32 %v750, 16
        %v889 = vshll.u32 %v750, 16
        %v891 = vrot.slane %v889, 1
        %v892 = vor.u32 %v887, %v891
        %v894 = vshll.u32 %v766, 16
        %v896 = vrot.slane %v894, 1
        %v897 = vsel %vm777, %v892, %v896
        %v899 = vshrl.u32 %v751, 16
        %v901 = vshll.u32 %v751, 16
        %v903 = vrot.slane %v901, 1
        %v904 = vor.u32 %v899, %v903
        %v906 = vshll.u32 %v767, 16
        %v908 = vrot.slane %v906, 1
        %v909 = vsel %vm777, %v904, %v908
        %v911 = vshrl.u32 %v752, 16
        %v913 = vshll.u32 %v752, 16
        %v915 = vrot.slane %v913, 1
        %v916 = vor.u32 %v911, %v915
        %v918 = vshll.u32 %v768, 16
        %v920 = vrot.slane %v918, 1
        %v921 = vsel %vm777, %v916, %v920
        %v923 = vshrl.u32 %v753, 16
        %v925 = vshll.u32 %v753, 16
        %v927 = vrot.slane %v925, 1
        %v928 = vor.u32 %v923, %v927
        %v930 = vshll.u32 %v769, 16
        %v932 = vrot.slane %v930, 1
        %v933 = vsel %vm777, %v928, %v932
        %v935 = vshrl.u32 %v754, 16
        %v937 = vshll.u32 %v754, 16
        %v939 = vrot.slane %v937, 1
        %v940 = vor.u32 %v935, %v939
        %v942 = vshll.u32 %v770, 16
        %v944 = vrot.slane %v942, 1
        %v945 = vsel %vm777, %v940, %v944
        %v947 = vshrl.u32 %v755, 16
        %v949 = vshll.u32 %v755, 16
        %v951 = vrot.slane %v949, 1
        %v952 = vor.u32 %v947, %v951
        %v954 = vshll.u32 %v771, 16
        %v956 = vrot.slane %v954, 1
        %v957 = vsel %vm777, %v952, %v956
        %v959 = vshrl.u32 %v756, 16
        %v961 = vshll.u32 %v756, 16
        %v963 = vrot.slane %v961, 1
        %v964 = vor.u32 %v959, %v963
        %v966 = vshll.u32 %v772, 16
        %v968 = vrot.slane %v966, 1
        %v969 = vsel %vm777, %v964, %v968
        %vm1018 = vcmask 1046528
        %v1019 = vrot.slane %v741, 1
        %v1020 = vrot.slane %v757, 1
        %v1021 = vsel %vm1018, %v1019, %v1020
        %v1022 = vrot.slane %v742, 1
        %v1023 = vrot.slane %v758, 1
        %v1024 = vsel %vm1018, %v1022, %v1023
        %v1025 = vrot.slane %v743, 1
        %v1026 = vrot.slane %v759, 1
        %v1027 = vsel %vm1018, %v1025, %v1026
        %v1028 = vrot.slane %v744, 1
        %v1029 = vrot.slane %v760, 1
        %v1030 = vsel %vm1018, %v1028, %v1029
        %v1031 = vrot.slane %v745, 1
        %v1032 = vrot.slane %v761, 1
        %v1033 = vsel %vm1018, %v1031, %v1032
        %v1034 = vrot.slane %v746, 1
        %v1035 = vrot.slane %v762, 1
        %v1036 = vsel %vm1018, %v1034, %v1035
        %v1037 = vrot.slane %v747, 1
        %v1038 = vrot.slane %v763, 1
        %v1039 = vsel %vm1018, %v1037, %v1038
        %v1040 = vrot.slane %v748, 1
        %v1041 = vrot.slane %v764, 1
        %v1042 = vsel %vm1018, %v1040, %v1041
        %v1043 = vrot.slane %v749, 1
        %v1044 = vrot.slane %v765, 1
        %v1045 = vsel %vm1018, %v1043, %v1044
        %v1046 = vrot.slane %v750, 1
        %v1047 = vrot.slane %v766, 1
        %v1048 = vsel %vm1018, %v1046, %v1047
        %v1049 = vrot.slane %v751, 1
        %v1050 = vrot.slane %v767, 1
        %v1051 = vsel %vm1018, %v1049, %v1050
        %v1052 = vrot.slane %v752, 1
        %v1053 = vrot.slane %v768, 1
        %v1054 = vsel %vm1018, %v1052, %v1053
        %v1055 = vrot.slane %v753, 1
        %v1056 = vrot.slane %v769, 1
        %v1057 = vsel %vm1018, %v1055, %v1056
        %v1058 = vrot.slane %v754, 1
        %v1059 = vrot.slane %v770, 1
        %v1060 = vsel %vm1018, %v1058, %v1059
        %v1061 = vrot.slane %v755, 1
        %v1062 = vrot.slane %v771, 1
        %v1063 = vsel %vm1018, %v1061, %v1062
        %v1064 = vrot.slane %v756, 1
        %v1065 = vrot.slane %v772, 1
        %v1066 = vsel %vm1018, %v1064, %v1065
        %v1084 = vshrl.u32 %v773, 16
        %v1086 = vshll.u32 %v773, 16
        %v1088 = vrot.slane %v1086, 1
        %v1089 = vor.u32 %v1084, %v1088
        %v1091 = vshll.u32 %v774, 16
        %v1093 = vrot.slane %v1091, 1
        %v1094 = vsel %vm777, %v1089, %v1093
        %v1098 = vrot.slane %v773, 1
        %v1099 = vrot.slane %v774, 1
        %v1100 = vsel %vm1018, %v1098, %v1099
        %v1103 = vshrl.u32 %v775, 16
        %v1105 = vshll.u32 %v775, 16
        %v1107 = vrot.slane %v1105, 1
        %v1108 = vor.u32 %v1103, %v1107
        %v1110 = vshll.u32 %v776, 16
        %v1112 = vrot.slane %v1110, 1
        %v1113 = vsel %vm777, %v1108, %v1112
        %v1117 = vrot.slane %v775, 1
        %v1118 = vrot.slane %v776, 1
        %v1119 = vsel %vm1018, %v1117, %v1118
        %v1121 = vld [vmem:[%s1] sm:$0xf]
        %v1122 = vld [vmem:[%s1 + $0x4] sm:$0xf]
        %v1123 = vld [vmem:[%s1 + $0x8] sm:$0xf]
        %v1124 = vld [vmem:[%s1 + $0xc] sm:$0xf]
        %v1125 = vld [vmem:[%s1 + $0x10] sm:$0xf]
        %v1126 = vld [vmem:[%s1 + $0x14] sm:$0xf]
        %v1127 = vld [vmem:[%s1 + $0x18] sm:$0xf]
        %v1128 = vld [vmem:[%s1 + $0x1c] sm:$0xf]
        %v1129 = vld [vmem:[%s1 + $0x20] sm:$0xf]
        %v1130 = vld [vmem:[%s1 + $0x24] sm:$0xf]
        %v1131 = vld [vmem:[%s1 + $0x28] sm:$0xf]
        %v1132 = vld [vmem:[%s1 + $0x2c] sm:$0xf]
        %v1133 = vld [vmem:[%s1 + $0x30] sm:$0xf]
        %v1134 = vld [vmem:[%s1 + $0x34] sm:$0xf]
        %v1135 = vld [vmem:[%s1 + $0x38] sm:$0xf]
        %v1136 = vld [vmem:[%s1 + $0x3c] sm:$0xf]
        %v1137 = vld [vmem:[%s1 + $0x40] sm:$0xf]
        %v1138 = vld [vmem:[%s1 + $0x44] sm:$0xf]
        %v1139 = vld [vmem:[%s1 + $0x48] sm:$0xf]
        %v1140 = vld [vmem:[%s1 + $0x4c] sm:$0xf]
        %v1141 = vld [vmem:[%s1 + $0x50] sm:$0xf]
        %v1142 = vld [vmem:[%s1 + $0x54] sm:$0xf]
        %v1143 = vld [vmem:[%s1 + $0x58] sm:$0xf]
        %v1144 = vld [vmem:[%s1 + $0x5c] sm:$0xf]
        %v1145 = vld [vmem:[%s1 + $0x60] sm:$0xf]
        %v1146 = vld [vmem:[%s1 + $0x64] sm:$0xf]
        %v1147 = vld [vmem:[%s1 + $0x68] sm:$0xf]
        %v1148 = vld [vmem:[%s1 + $0x6c] sm:$0xf]
        %v1149 = vld [vmem:[%s1 + $0x70] sm:$0xf]
        %v1150 = vld [vmem:[%s1 + $0x74] sm:$0xf]
        %v1151 = vld [vmem:[%s1 + $0x78] sm:$0xf]
        %v1152 = vld [vmem:[%s1 + $0x7c] sm:$0xf]
        %v1153 = vld [vmem:[%s1 + $0x80] sm:$0xf]
        %v1154 = vld [vmem:[%s1 + $0x84] sm:$0xf]
        %v1155 = vld [vmem:[%s1 + $0x88] sm:$0xf]
        %v1156 = vld [vmem:[%s1 + $0x8c] sm:$0xf]
        %v1157 = vld [vmem:[%s1 + $0x90] sm:$0xf]
        %v1158 = vld [vmem:[%s1 + $0x94] sm:$0xf]
        %v1159 = vld [vmem:[%s1 + $0x98] sm:$0xf]
        %v1160 = vld [vmem:[%s1 + $0x9c] sm:$0xf]
        %v1161 = vld [vmem:[%s1 + $0xa0] sm:$0xf]
        %v1162 = vld [vmem:[%s1 + $0xa4] sm:$0xf]
        %v1163 = vld [vmem:[%s1 + $0xa8] sm:$0xf]
        %v1164 = vld [vmem:[%s1 + $0xac] sm:$0xf]
        %v1165 = vld [vmem:[%s1 + $0xb0] sm:$0xf]
        %v1166 = vld [vmem:[%s1 + $0xb4] sm:$0xf]
        %v1167 = vld [vmem:[%s1 + $0xb8] sm:$0xf]
        %v1168 = vld [vmem:[%s1 + $0xbc] sm:$0xf]
        %v1169 = vld [vmem:[%s1 + $0xc0] sm:$0xf]
        %v1170 = vld [vmem:[%s1 + $0xc4] sm:$0xf]
        %v1171 = vld [vmem:[%s1 + $0xc8] sm:$0xf]
        %v1172 = vld [vmem:[%s1 + $0xcc] sm:$0xf]
        %v1173 = vld [vmem:[%s1 + $0xd0] sm:$0xf]
        %v1174 = vld [vmem:[%s1 + $0xd4] sm:$0xf]
        %v1175 = vld [vmem:[%s1 + $0xd8] sm:$0xf]
        %v1176 = vld [vmem:[%s1 + $0xdc] sm:$0xf]
        %v1177 = vld [vmem:[%s1 + $0xe0] sm:$0xf]
        %v1178 = vld [vmem:[%s1 + $0xe4] sm:$0xf]
        %v1179 = vld [vmem:[%s1 + $0xe8] sm:$0xf]
        %v1180 = vld [vmem:[%s1 + $0xec] sm:$0xf]
        %v1181 = vld [vmem:[%s1 + $0xf0] sm:$0xf]
        %v1182 = vld [vmem:[%s1 + $0xf4] sm:$0xf]
        %v1183 = vld [vmem:[%s1 + $0xf8] sm:$0xf]
        %v1184 = vld [vmem:[%s1 + $0xfc] sm:$0xf]
        %v1185 = vld [vmem:[%s1 + $0x100] sm:$0xf]
        %v1186 = vld [vmem:[%s1 + $0x104] sm:$0xf]
        %v1187 = vld [vmem:[%s1 + $0x108] sm:$0xf]
        %v1188 = vld [vmem:[%s1 + $0x10c] sm:$0xf]
        %v1189 = vld [vmem:[%s1 + $0x110] sm:$0xf]
        %v1190 = vld [vmem:[%s1 + $0x114] sm:$0xf]
        %v1191 = vld [vmem:[%s1 + $0x118] sm:$0xf]
        %v1192 = vld [vmem:[%s1 + $0x11c] sm:$0xf]
        %v1193 = vld [vmem:[%s1 + $0x120] sm:$0xf]
        %v1194 = vld [vmem:[%s1 + $0x124] sm:$0xf]
        %v1195 = vld [vmem:[%s1 + $0x128] sm:$0xf]
        %v1196 = vld [vmem:[%s1 + $0x12c] sm:$0xf]
        %v1197 = vld [vmem:[%s1 + $0x130] sm:$0xf]
        %v1198 = vld [vmem:[%s1 + $0x134] sm:$0xf]
        %v1199 = vld [vmem:[%s1 + $0x138] sm:$0xf]
        %v1200 = vld [vmem:[%s1 + $0x13c] sm:$0xf]
        %v1201 = vld [vmem:[%s1 + $0x140] sm:$0xf]
        %v1202 = vld [vmem:[%s1 + $0x144] sm:$0xf]
        %v1203 = vld [vmem:[%s1 + $0x148] sm:$0xf]
        %v1204 = vld [vmem:[%s1 + $0x14c] sm:$0xf]
        %v1205 = vld [vmem:[%s1 + $0x150] sm:$0xf]
        %v1206 = vld [vmem:[%s1 + $0x154] sm:$0xf]
        %v1207 = vld [vmem:[%s1 + $0x158] sm:$0xf]
        %v1208 = vld [vmem:[%s1 + $0x15c] sm:$0xf]
        %v1209 = vld [vmem:[%s1 + $0x160] sm:$0xf]
        %v1210 = vld [vmem:[%s1 + $0x164] sm:$0xf]
        %v1211 = vld [vmem:[%s1 + $0x168] sm:$0xf]
        %v1212 = vld [vmem:[%s1 + $0x16c] sm:$0xf]
        %v1213 = vld [vmem:[%s1 + $0x170] sm:$0xf]
        %v1214 = vld [vmem:[%s1 + $0x174] sm:$0xf]
        %v1215 = vld [vmem:[%s1 + $0x178] sm:$0xf]
        %v1216 = vld [vmem:[%s1 + $0x17c] sm:$0xf]
        %v1217 = vld [vmem:[%s1 + $0x180] sm:$0xf]
        %v1218 = vld [vmem:[%s1 + $0x184] sm:$0xf]
        %v1219 = vld [vmem:[%s1 + $0x188] sm:$0xf]
        %v1220 = vld [vmem:[%s1 + $0x18c] sm:$0xf]
        %v1221 = vld [vmem:[%s1 + $0x190] sm:$0xf]
        %v1222 = vld [vmem:[%s1 + $0x194] sm:$0xf]
        %v1223 = vld [vmem:[%s1 + $0x198] sm:$0xf]
        %v1224 = vld [vmem:[%s1 + $0x19c] sm:$0xf]
        %v1225 = vld [vmem:[%s1 + $0x1a0] sm:$0xf]
        %v1226 = vld [vmem:[%s1 + $0x1a4] sm:$0xf]
        %v1227 = vld [vmem:[%s1 + $0x1a8] sm:$0xf]
        %v1228 = vld [vmem:[%s1 + $0x1ac] sm:$0xf]
        %v1229 = vld [vmem:[%s1 + $0x1b0] sm:$0xf]
        %v1230 = vld [vmem:[%s1 + $0x1b4] sm:$0xf]
        %v1231 = vld [vmem:[%s1 + $0x1b8] sm:$0xf]
        %v1232 = vld [vmem:[%s1 + $0x1bc] sm:$0xf]
        %v1233 = vld [vmem:[%s1 + $0x1c0] sm:$0xf]
        %v1234 = vld [vmem:[%s1 + $0x1c4] sm:$0xf]
        %v1235 = vld [vmem:[%s1 + $0x1c8] sm:$0xf]
        %v1236 = vld [vmem:[%s1 + $0x1cc] sm:$0xf]
        %v1237 = vld [vmem:[%s1 + $0x1d0] sm:$0xf]
        %v1238 = vld [vmem:[%s1 + $0x1d4] sm:$0xf]
        %v1239 = vld [vmem:[%s1 + $0x1d8] sm:$0xf]
        %v1240 = vld [vmem:[%s1 + $0x1dc] sm:$0xf]
        %v1241 = vld [vmem:[%s1 + $0x1e0] sm:$0xf]
        %v1242 = vld [vmem:[%s1 + $0x1e4] sm:$0xf]
        %v1243 = vld [vmem:[%s1 + $0x1e8] sm:$0xf]
        %v1244 = vld [vmem:[%s1 + $0x1ec] sm:$0xf]
        %v1245 = vld [vmem:[%s1 + $0x1f0] sm:$0xf]
        %v1246 = vld [vmem:[%s1 + $0x1f4] sm:$0xf]
        %v1247 = vld [vmem:[%s1 + $0x1f8] sm:$0xf]
        %v1248 = vld [vmem:[%s1 + $0x1fc] sm:$0xf]
        %v1249 = vld [vmem:[%s1 + $0x200] sm:$0xf]
        %v1250 = vld [vmem:[%s1 + $0x204] sm:$0xf]
        %v1251 = vld [vmem:[%s1 + $0x208] sm:$0xf]
        %v1252 = vld [vmem:[%s1 + $0x20c] sm:$0xf]
        %v1253 = vld [vmem:[%s1 + $0x210] sm:$0xf]
        %v1254 = vld [vmem:[%s1 + $0x214] sm:$0xf]
        %v1255 = vld [vmem:[%s1 + $0x218] sm:$0xf]
        %v1256 = vld [vmem:[%s1 + $0x21c] sm:$0xf]
        %v1257 = vld [vmem:[%s1 + $0x220] sm:$0xf]
        %v1258 = vld [vmem:[%s1 + $0x224] sm:$0xf]
        %v1259 = vld [vmem:[%s1 + $0x228] sm:$0xf]
        %v1260 = vld [vmem:[%s1 + $0x22c] sm:$0xf]
        %v1261 = vld [vmem:[%s1 + $0x230] sm:$0xf]
        %v1262 = vld [vmem:[%s1 + $0x234] sm:$0xf]
        %v1263 = vld [vmem:[%s1 + $0x238] sm:$0xf]
        %v1264 = vld [vmem:[%s1 + $0x23c] sm:$0xf]
        %v1265 = vld [vmem:[%s3] sm:$0x1]
        %v1267 = vlaneseq
        %v1268 = vshrl.u32 %v1267, 7
        %v1269 = vsub.s32 0, %v1268
        %v1270 = vrot.slane %v1265, %v1269
        %v1416 = vunpack.c.l.b16 %v1121
        %v1417 = vunpack.c.l.b16 %v1122
        %v1418 = vunpack.c.l.b16 %v1123
        %v1419 = vunpack.c.l.b16 %v1124
        %v1420 = vunpack.c.l.b16 %v1125
        %v1421 = vunpack.c.l.b16 %v1126
        %v1422 = vunpack.c.l.b16 %v1127
        %v1423 = vunpack.c.l.b16 %v1128
        %v1424 = vunpack.c.l.b16 %v1129
        %v1425 = vunpack.c.l.b16 %v1130
        %v1426 = vunpack.c.l.b16 %v1131
        %v1427 = vunpack.c.l.b16 %v1132
        %v1428 = vunpack.c.l.b16 %v1133
        %v1429 = vunpack.c.l.b16 %v1134
        %v1430 = vunpack.c.l.b16 %v1135
        %v1431 = vunpack.c.l.b16 %v1136
        %v1432 = vunpack.c.l.b16 %v1137
        %v1433 = vunpack.c.l.b16 %v1138
        %v1434 = vunpack.c.l.b16 %v1139
        %v1435 = vunpack.c.l.b16 %v1140
        %v1436 = vunpack.c.l.b16 %v1141
        %v1437 = vunpack.c.l.b16 %v1142
        %v1438 = vunpack.c.l.b16 %v1143
        %v1439 = vunpack.c.l.b16 %v1144
        %v1440 = vunpack.c.l.b16 %v1145
        %v1441 = vunpack.c.l.b16 %v1146
        %v1442 = vunpack.c.l.b16 %v1147
        %v1443 = vunpack.c.l.b16 %v1148
        %v1444 = vunpack.c.l.b16 %v1149
        %v1445 = vunpack.c.l.b16 %v1150
        %v1446 = vunpack.c.l.b16 %v1151
        %v1447 = vunpack.c.l.b16 %v1152
        %v1448 = vunpack.c.l.b16 %v1153
        %v1449 = vunpack.c.l.b16 %v1154
        %v1450 = vunpack.c.l.b16 %v1155
        %v1451 = vunpack.c.l.b16 %v1156
        %v1452 = vunpack.c.l.b16 %v1157
        %v1453 = vunpack.c.l.b16 %v1158
        %v1454 = vunpack.c.l.b16 %v1159
        %v1455 = vunpack.c.l.b16 %v1160
        %v1456 = vunpack.c.l.b16 %v1161
        %v1457 = vunpack.c.l.b16 %v1162
        %v1458 = vunpack.c.l.b16 %v1163
        %v1459 = vunpack.c.l.b16 %v1164
        %v1460 = vunpack.c.l.b16 %v1165
        %v1461 = vunpack.c.l.b16 %v1166
        %v1462 = vunpack.c.l.b16 %v1167
        %v1463 = vunpack.c.l.b16 %v1168
        %v1464 = vunpack.c.l.b16 %v1169
        %v1465 = vunpack.c.l.b16 %v1170
        %v1466 = vunpack.c.l.b16 %v1171
        %v1467 = vunpack.c.l.b16 %v1172
        %v1468 = vunpack.c.l.b16 %v1173
        %v1469 = vunpack.c.l.b16 %v1174
        %v1470 = vunpack.c.l.b16 %v1175
        %v1471 = vunpack.c.l.b16 %v1176
        %v1472 = vunpack.c.l.b16 %v1177
        %v1473 = vunpack.c.l.b16 %v1178
        %v1474 = vunpack.c.l.b16 %v1179
        %v1475 = vunpack.c.l.b16 %v1180
        %v1476 = vunpack.c.l.b16 %v1181
        %v1477 = vunpack.c.l.b16 %v1182
        %v1478 = vunpack.c.l.b16 %v1183
        %v1479 = vunpack.c.l.b16 %v1184
        %v1480 = vunpack.c.l.b16 %v1185
        %v1481 = vunpack.c.l.b16 %v1186
        %v1482 = vunpack.c.l.b16 %v1187
        %v1483 = vunpack.c.l.b16 %v1188
        %v1484 = vunpack.c.l.b16 %v1189
        %v1485 = vunpack.c.l.b16 %v1190
        %v1486 = vunpack.c.l.b16 %v1191
        %v1487 = vunpack.c.l.b16 %v1192
        %v1488 = vunpack.c.l.b16 %v1193
        %v1489 = vunpack.c.l.b16 %v1194
        %v1490 = vunpack.c.l.b16 %v1195
        %v1491 = vunpack.c.l.b16 %v1196
        %v1492 = vunpack.c.l.b16 %v1197
        %v1493 = vunpack.c.l.b16 %v1198
        %v1494 = vunpack.c.l.b16 %v1199
        %v1495 = vunpack.c.l.b16 %v1200
        %v1496 = vunpack.c.l.b16 %v1201
        %v1497 = vunpack.c.l.b16 %v1202
        %v1498 = vunpack.c.l.b16 %v1203
        %v1499 = vunpack.c.l.b16 %v1204
        %v1500 = vunpack.c.l.b16 %v1205
        %v1501 = vunpack.c.l.b16 %v1206
        %v1502 = vunpack.c.l.b16 %v1207
        %v1503 = vunpack.c.l.b16 %v1208
        %v1504 = vunpack.c.l.b16 %v1209
        %v1505 = vunpack.c.l.b16 %v1210
        %v1506 = vunpack.c.l.b16 %v1211
        %v1507 = vunpack.c.l.b16 %v1212
        %v1508 = vunpack.c.l.b16 %v1213
        %v1509 = vunpack.c.l.b16 %v1214
        %v1510 = vunpack.c.l.b16 %v1215
        %v1511 = vunpack.c.l.b16 %v1216
        %v1512 = vunpack.c.l.b16 %v1217
        %v1513 = vunpack.c.l.b16 %v1218
        %v1514 = vunpack.c.l.b16 %v1219
        %v1515 = vunpack.c.l.b16 %v1220
        %v1516 = vunpack.c.l.b16 %v1221
        %v1517 = vunpack.c.l.b16 %v1222
        %v1518 = vunpack.c.l.b16 %v1223
        %v1519 = vunpack.c.l.b16 %v1224
        %v1520 = vunpack.c.l.b16 %v1225
        %v1521 = vunpack.c.l.b16 %v1226
        %v1522 = vunpack.c.l.b16 %v1227
        %v1523 = vunpack.c.l.b16 %v1228
        %v1524 = vunpack.c.l.b16 %v1229
        %v1525 = vunpack.c.l.b16 %v1230
        %v1526 = vunpack.c.l.b16 %v1231
        %v1527 = vunpack.c.l.b16 %v1232
        %v1528 = vunpack.c.l.b16 %v1233
        %v1529 = vunpack.c.l.b16 %v1234
        %v1530 = vunpack.c.l.b16 %v1235
        %v1531 = vunpack.c.l.b16 %v1236
        %v1532 = vunpack.c.l.b16 %v1237
        %v1533 = vunpack.c.l.b16 %v1238
        %v1534 = vunpack.c.l.b16 %v1239
        %v1535 = vunpack.c.l.b16 %v1240
        %v1536 = vunpack.c.l.b16 %v1241
        %v1537 = vunpack.c.l.b16 %v1242
        %v1538 = vunpack.c.l.b16 %v1243
        %v1539 = vunpack.c.l.b16 %v1244
        %v1540 = vunpack.c.l.b16 %v1245
        %v1541 = vunpack.c.l.b16 %v1246
        %v1542 = vunpack.c.l.b16 %v1247
        %v1543 = vunpack.c.l.b16 %v1248
        %v1544 = vunpack.c.l.b16 %v1249
        %v1545 = vunpack.c.l.b16 %v1250
        %v1546 = vunpack.c.l.b16 %v1251
        %v1547 = vunpack.c.l.b16 %v1252
        %v1548 = vunpack.c.l.b16 %v1253
        %v1549 = vunpack.c.l.b16 %v1254
        %v1550 = vunpack.c.l.b16 %v1255
        %v1551 = vunpack.c.l.b16 %v1256
        %v1552 = vunpack.c.l.b16 %v1257
        %v1553 = vunpack.c.l.b16 %v1258
        %v1554 = vunpack.c.l.b16 %v1259
        %v1555 = vunpack.c.l.b16 %v1260
        %v1556 = vunpack.c.l.b16 %v1261
        %v1557 = vunpack.c.l.b16 %v1262
        %v1558 = vunpack.c.l.b16 %v1263
        %v1559 = vunpack.c.l.b16 %v1264
        %v1560 = vpack.c.b16 %v1417, %v1416
        %v1561 = vpack.c.b16 %v1419, %v1418
        %v1562 = vpack.c.b16 %v1421, %v1420
        %v1563 = vpack.c.b16 %v1423, %v1422
        %v1564 = vpack.c.b16 %v1425, %v1424
        %v1565 = vpack.c.b16 %v1427, %v1426
        %v1566 = vpack.c.b16 %v1429, %v1428
        %v1567 = vpack.c.b16 %v1431, %v1430
        %v1568 = vpack.c.b16 %v1433, %v1432
        %v1569 = vpack.c.b16 %v1435, %v1434
        %v1570 = vpack.c.b16 %v1437, %v1436
        %v1571 = vpack.c.b16 %v1439, %v1438
        %v1572 = vpack.c.b16 %v1441, %v1440
        %v1573 = vpack.c.b16 %v1443, %v1442
        %v1574 = vpack.c.b16 %v1445, %v1444
        %v1575 = vpack.c.b16 %v1447, %v1446
        %v1576 = vpack.c.b16 %v1449, %v1448
        %v1577 = vpack.c.b16 %v1451, %v1450
        %v1578 = vpack.c.b16 %v1453, %v1452
        %v1579 = vpack.c.b16 %v1455, %v1454
        %v1580 = vpack.c.b16 %v1457, %v1456
        %v1581 = vpack.c.b16 %v1459, %v1458
        %v1582 = vpack.c.b16 %v1461, %v1460
        %v1583 = vpack.c.b16 %v1463, %v1462
        %v1584 = vpack.c.b16 %v1465, %v1464
        %v1585 = vpack.c.b16 %v1467, %v1466
        %v1586 = vpack.c.b16 %v1469, %v1468
        %v1587 = vpack.c.b16 %v1471, %v1470
        %v1588 = vpack.c.b16 %v1473, %v1472
        %v1589 = vpack.c.b16 %v1475, %v1474
        %v1590 = vpack.c.b16 %v1477, %v1476
        %v1591 = vpack.c.b16 %v1479, %v1478
        %v1592 = vpack.c.b16 %v1481, %v1480
        %v1593 = vpack.c.b16 %v1483, %v1482
        %v1594 = vpack.c.b16 %v1485, %v1484
        %v1595 = vpack.c.b16 %v1487, %v1486
        %v1596 = vpack.c.b16 %v1489, %v1488
        %v1597 = vpack.c.b16 %v1491, %v1490
        %v1598 = vpack.c.b16 %v1493, %v1492
        %v1599 = vpack.c.b16 %v1495, %v1494
        %v1600 = vpack.c.b16 %v1497, %v1496
        %v1601 = vpack.c.b16 %v1499, %v1498
        %v1602 = vpack.c.b16 %v1501, %v1500
        %v1603 = vpack.c.b16 %v1503, %v1502
        %v1604 = vpack.c.b16 %v1505, %v1504
        %v1605 = vpack.c.b16 %v1507, %v1506
        %v1606 = vpack.c.b16 %v1509, %v1508
        %v1607 = vpack.c.b16 %v1511, %v1510
        %v1608 = vpack.c.b16 %v1513, %v1512
        %v1609 = vpack.c.b16 %v1515, %v1514
        %v1610 = vpack.c.b16 %v1517, %v1516
        %v1611 = vpack.c.b16 %v1519, %v1518
        %v1612 = vpack.c.b16 %v1521, %v1520
        %v1613 = vpack.c.b16 %v1523, %v1522
        %v1614 = vpack.c.b16 %v1525, %v1524
        %v1615 = vpack.c.b16 %v1527, %v1526
        %v1616 = vpack.c.b16 %v1529, %v1528
        %v1617 = vpack.c.b16 %v1531, %v1530
        %v1618 = vpack.c.b16 %v1533, %v1532
        %v1619 = vpack.c.b16 %v1535, %v1534
        %v1620 = vpack.c.b16 %v1537, %v1536
        %v1621 = vpack.c.b16 %v1539, %v1538
        %v1622 = vpack.c.b16 %v1541, %v1540
        %v1623 = vpack.c.b16 %v1543, %v1542
        %v1624 = vpack.c.b16 %v1545, %v1544
        %v1625 = vpack.c.b16 %v1547, %v1546
        %v1626 = vpack.c.b16 %v1549, %v1548
        %v1627 = vpack.c.b16 %v1551, %v1550
        %v1628 = vpack.c.b16 %v1553, %v1552
        %v1629 = vpack.c.b16 %v1555, %v1554
        %v1630 = vpack.c.b16 %v1557, %v1556
        %v1631 = vpack.c.b16 %v1559, %v1558
        %1704 = vmatprep.subr.bf16.mxu0 0
        %1705 = vmatpush1.bf16.msra.mxu0 %v1567
        %1706 = vmatprep.subr.bf16.mxu0 0
        %1707 = vmatpush1.bf16.msra.mxu0 %v1566
        %1708 = vmatprep.subr.bf16.mxu0 0
        %1709 = vmatpush1.bf16.msra.mxu0 %v1565
        %1710 = vmatprep.subr.bf16.mxu0 0
        %1711 = vmatpush1.bf16.msra.mxu0 %v1564
        %1712 = vmatprep.subr.bf16.mxu0 0
        %1713 = vmatpush1.bf16.msra.mxu0 %v1563
        %1714 = vmatprep.subr.bf16.mxu0 0
        %1715 = vmatpush1.bf16.msra.mxu0 %v1562
        %1716 = vmatprep.subr.bf16.mxu0 0
        %1717 = vmatpush1.bf16.msra.mxu0 %v1561
        %1718 = vmatprep.subr.bf16.mxu0 0
        %1719 = vmatpush1.bf16.msra.mxu0 %v1560
        %1720 = vmatprep.subr.bf16.mxu0 0
        %1721 = vmatpush2.bf16.msra.mxu0 %v1575
        %1722 = vmatprep.subr.bf16.mxu0 0
        %1723 = vmatpush2.bf16.msra.mxu0 %v1574
        %1724 = vmatprep.subr.bf16.mxu0 0
        %1725 = vmatpush2.bf16.msra.mxu0 %v1573
        %1726 = vmatprep.subr.bf16.mxu0 0
        %1727 = vmatpush2.bf16.msra.mxu0 %v1572
        %1728 = vmatprep.subr.bf16.mxu0 0
        %1729 = vmatpush2.bf16.msra.mxu0 %v1571
        %1730 = vmatprep.subr.bf16.mxu0 0
        %1731 = vmatpush2.bf16.msra.mxu0 %v1570
        %1732 = vmatprep.subr.bf16.mxu0 0
        %1733 = vmatpush2.bf16.msra.mxu0 %v1569
        %1734 = vmatprep.subr.bf16.mxu0 0
        %1735 = vmatpush2.bf16.msra.mxu0 %v1568
        %1736 = vmatprep.mubr.bf16.mxu0 %v789
        %1737 = vmatmul.mubr.bf16.gmra.mxu0 %v741
        %v1738 = vpop.f32.mrf.mxu0
        %v1739 = vadd.f32 %v1270, %v1738
        %v1740 = vpop.f32.mrf.mxu0
        %v1741 = vpop.f32.mrf.mxu0
        %v1742 = vadd.f32 %v1270, %v1741
        %v1743 = vpop.f32.mrf.mxu0
        %1744 = vmatprep.mubr.bf16.mxu0 %v801
        %1745 = vmatmul.mubr.bf16.gmra.mxu0 %v742
        %v1746 = vpop.f32.mrf.mxu0
        %v1747 = vadd.f32 %v1270, %v1746
        %v1748 = vpop.f32.mrf.mxu0
        %v1749 = vpop.f32.mrf.mxu0
        %v1750 = vadd.f32 %v1270, %v1749
        %v1751 = vpop.f32.mrf.mxu0
        %1752 = vmatprep.mubr.bf16.mxu0 %v813
        %1753 = vmatmul.mubr.bf16.gmra.mxu0 %v743
        %v1754 = vpop.f32.mrf.mxu0
        %v1755 = vadd.f32 %v1270, %v1754
        %v1756 = vpop.f32.mrf.mxu0
        %v1757 = vpop.f32.mrf.mxu0
        %v1758 = vadd.f32 %v1270, %v1757
        %v1759 = vpop.f32.mrf.mxu0
        %1760 = vmatprep.mubr.bf16.mxu0 %v825
        %1761 = vmatmul.mubr.bf16.gmra.mxu0 %v744
        %v1762 = vpop.f32.mrf.mxu0
        %v1763 = vadd.f32 %v1270, %v1762
        %v1764 = vpop.f32.mrf.mxu0
        %v1765 = vpop.f32.mrf.mxu0
        %v1766 = vadd.f32 %v1270, %v1765
        %v1767 = vpop.f32.mrf.mxu0
        %1768 = vmatprep.mubr.bf16.mxu0 %v837
        %1769 = vmatmul.mubr.bf16.gmra.mxu0 %v745
        %v1770 = vpop.f32.mrf.mxu0
        %v1771 = vadd.f32 %v1270, %v1770
        %v1772 = vpop.f32.mrf.mxu0
        %v1773 = vpop.f32.mrf.mxu0
        %v1774 = vadd.f32 %v1270, %v1773
        %v1775 = vpop.f32.mrf.mxu0
        %1776 = vmatprep.mubr.bf16.mxu0 %v849
        %1777 = vmatmul.mubr.bf16.gmra.mxu0 %v746
        %v1778 = vpop.f32.mrf.mxu0
        %v1779 = vadd.f32 %v1270, %v1778
        %v1780 = vpop.f32.mrf.mxu0
        %v1781 = vpop.f32.mrf.mxu0
        %v1782 = vadd.f32 %v1270, %v1781
        %v1783 = vpop.f32.mrf.mxu0
        %1784 = vmatprep.mubr.bf16.mxu0 %v861
        %1785 = vmatmul.mubr.bf16.gmra.mxu0 %v747
        %v1786 = vpop.f32.mrf.mxu0
        %v1787 = vadd.f32 %v1270, %v1786
        %v1788 = vpop.f32.mrf.mxu0
        %v1789 = vpop.f32.mrf.mxu0
        %v1790 = vadd.f32 %v1270, %v1789
        %v1791 = vpop.f32.mrf.mxu0
        %1792 = vmatprep.mubr.bf16.mxu0 %v873
        %1793 = vmatmul.mubr.bf16.gmra.mxu0 %v748
        %v1794 = vpop.f32.mrf.mxu0
        %v1795 = vadd.f32 %v1270, %v1794
        %v1796 = vpop.f32.mrf.mxu0
        %v1797 = vpop.f32.mrf.mxu0
        %v1798 = vadd.f32 %v1270, %v1797
        %v1799 = vpop.f32.mrf.mxu0
        %1800 = vmatprep.mubr.bf16.mxu0 %v885
        %1801 = vmatmul.mubr.bf16.gmra.mxu0 %v749
        %v1802 = vpop.f32.mrf.mxu0
        %v1803 = vadd.f32 %v1270, %v1802
        %v1804 = vpop.f32.mrf.mxu0
        %v1805 = vpop.f32.mrf.mxu0
        %v1806 = vadd.f32 %v1270, %v1805
        %v1807 = vpop.f32.mrf.mxu0
        %1808 = vmatprep.mubr.bf16.mxu0 %v897
        %1809 = vmatmul.mubr.bf16.gmra.mxu0 %v750
        %v1810 = vpop.f32.mrf.mxu0
        %v1811 = vadd.f32 %v1270, %v1810
        %v1812 = vpop.f32.mrf.mxu0
        %v1813 = vpop.f32.mrf.mxu0
        %v1814 = vadd.f32 %v1270, %v1813
        %v1815 = vpop.f32.mrf.mxu0
        %1816 = vmatprep.mubr.bf16.mxu0 %v909
        %1817 = vmatmul.mubr.bf16.gmra.mxu0 %v751
        %v1818 = vpop.f32.mrf.mxu0
        %v1819 = vadd.f32 %v1270, %v1818
        %v1820 = vpop.f32.mrf.mxu0
        %v1821 = vpop.f32.mrf.mxu0
        %v1822 = vadd.f32 %v1270, %v1821
        %v1823 = vpop.f32.mrf.mxu0
        %1824 = vmatprep.mubr.bf16.mxu0 %v921
        %1825 = vmatmul.mubr.bf16.gmra.mxu0 %v752
        %v1826 = vpop.f32.mrf.mxu0
        %v1827 = vadd.f32 %v1270, %v1826
        %v1828 = vpop.f32.mrf.mxu0
        %v1829 = vpop.f32.mrf.mxu0
        %v1830 = vadd.f32 %v1270, %v1829
        %v1831 = vpop.f32.mrf.mxu0
        %1832 = vmatprep.mubr.bf16.mxu0 %v933
        %1833 = vmatmul.mubr.bf16.gmra.mxu0 %v753
        %v1834 = vpop.f32.mrf.mxu0
        %v1835 = vadd.f32 %v1270, %v1834
        %v1836 = vpop.f32.mrf.mxu0
        %v1837 = vpop.f32.mrf.mxu0
        %v1838 = vadd.f32 %v1270, %v1837
        %v1839 = vpop.f32.mrf.mxu0
        %1840 = vmatprep.mubr.bf16.mxu0 %v945
        %1841 = vmatmul.mubr.bf16.gmra.mxu0 %v754
        %v1842 = vpop.f32.mrf.mxu0
        %v1843 = vadd.f32 %v1270, %v1842
        %v1844 = vpop.f32.mrf.mxu0
        %v1845 = vpop.f32.mrf.mxu0
        %v1846 = vadd.f32 %v1270, %v1845
        %v1847 = vpop.f32.mrf.mxu0
        %1848 = vmatprep.mubr.bf16.mxu0 %v957
        %1849 = vmatmul.mubr.bf16.gmra.mxu0 %v755
        %v1850 = vpop.f32.mrf.mxu0
        %v1851 = vadd.f32 %v1270, %v1850
        %v1852 = vpop.f32.mrf.mxu0
        %v1853 = vpop.f32.mrf.mxu0
        %v1854 = vadd.f32 %v1270, %v1853
        %v1855 = vpop.f32.mrf.mxu0
        %1856 = vmatprep.mubr.bf16.mxu0 %v969
        %1857 = vmatmul.mubr.bf16.gmra.mxu0 %v756
        %v1858 = vpop.f32.mrf.mxu0
        %v1859 = vadd.f32 %v1270, %v1858
        %v1860 = vpop.f32.mrf.mxu0
        %v1861 = vpop.f32.mrf.mxu0
        %v1862 = vadd.f32 %v1270, %v1861
        %v1863 = vpop.f32.mrf.mxu0
        %1864 = vdwg.mxu0
        %1865 = vmatprep.subr.bf16.mxu0 0
        %1866 = vmatpush1.bf16.msra.mxu0 %v1583
        %1867 = vmatprep.subr.bf16.mxu0 0
        %1868 = vmatpush1.bf16.msra.mxu0 %v1582
        %1869 = vmatprep.subr.bf16.mxu0 0
        %1870 = vmatpush1.bf16.msra.mxu0 %v1581
        %1871 = vmatprep.subr.bf16.mxu0 0
        %1872 = vmatpush1.bf16.msra.mxu0 %v1580
        %1873 = vmatprep.subr.bf16.mxu0 0
        %1874 = vmatpush1.bf16.msra.mxu0 %v1579
        %1875 = vmatprep.subr.bf16.mxu0 0
        %1876 = vmatpush1.bf16.msra.mxu0 %v1578
        %1877 = vmatprep.subr.bf16.mxu0 0
        %1878 = vmatpush1.bf16.msra.mxu0 %v1577
        %1879 = vmatprep.subr.bf16.mxu0 0
        %1880 = vmatpush1.bf16.msra.mxu0 %v1576
        %1881 = vmatprep.subr.bf16.mxu0 0
        %1882 = vmatpush2.bf16.msra.mxu0 %v1591
        %1883 = vmatprep.subr.bf16.mxu0 0
        %1884 = vmatpush2.bf16.msra.mxu0 %v1590
        %1885 = vmatprep.subr.bf16.mxu0 0
        %1886 = vmatpush2.bf16.msra.mxu0 %v1589
        %1887 = vmatprep.subr.bf16.mxu0 0
        %1888 = vmatpush2.bf16.msra.mxu0 %v1588
        %1889 = vmatprep.subr.bf16.mxu0 0
        %1890 = vmatpush2.bf16.msra.mxu0 %v1587
        %1891 = vmatprep.subr.bf16.mxu0 0
        %1892 = vmatpush2.bf16.msra.mxu0 %v1586
        %1893 = vmatprep.subr.bf16.mxu0 0
        %1894 = vmatpush2.bf16.msra.mxu0 %v1585
        %1895 = vmatprep.subr.bf16.mxu0 0
        %1896 = vmatpush2.bf16.msra.mxu0 %v1584
        %1897 = vmatprep.mubr.bf16.mxu0 %v742
        %1898 = vmatmul.mubr.bf16.gmra.mxu0 %v1021
        %v1899 = vpop.f32.mrf.mxu0
        %v1900 = vadd.f32 %v1739, %v1899
        %v1901 = vpop.f32.mrf.mxu0
        %v1902 = vpop.f32.mrf.mxu0
        %v1903 = vadd.f32 %v1742, %v1902
        %v1904 = vpop.f32.mrf.mxu0
        %1905 = vmatprep.mubr.bf16.mxu0 %v743
        %1906 = vmatmul.mubr.bf16.gmra.mxu0 %v1024
        %v1907 = vpop.f32.mrf.mxu0
        %v1908 = vadd.f32 %v1747, %v1907
        %v1909 = vpop.f32.mrf.mxu0
        %v1910 = vpop.f32.mrf.mxu0
        %v1911 = vadd.f32 %v1750, %v1910
        %v1912 = vpop.f32.mrf.mxu0
        %1913 = vmatprep.mubr.bf16.mxu0 %v744
        %1914 = vmatmul.mubr.bf16.gmra.mxu0 %v1027
        %v1915 = vpop.f32.mrf.mxu0
        %v1916 = vadd.f32 %v1755, %v1915
        %v1917 = vpop.f32.mrf.mxu0
        %v1918 = vpop.f32.mrf.mxu0
        %v1919 = vadd.f32 %v1758, %v1918
        %v1920 = vpop.f32.mrf.mxu0
        %1921 = vmatprep.mubr.bf16.mxu0 %v745
        %1922 = vmatmul.mubr.bf16.gmra.mxu0 %v1030
        %v1923 = vpop.f32.mrf.mxu0
        %v1924 = vadd.f32 %v1763, %v1923
        %v1925 = vpop.f32.mrf.mxu0
        %v1926 = vpop.f32.mrf.mxu0
        %v1927 = vadd.f32 %v1766, %v1926
        %v1928 = vpop.f32.mrf.mxu0
        %1929 = vmatprep.mubr.bf16.mxu0 %v746
        %1930 = vmatmul.mubr.bf16.gmra.mxu0 %v1033
        %v1931 = vpop.f32.mrf.mxu0
        %v1932 = vadd.f32 %v1771, %v1931
        %v1933 = vpop.f32.mrf.mxu0
        %v1934 = vpop.f32.mrf.mxu0
        %v1935 = vadd.f32 %v1774, %v1934
        %v1936 = vpop.f32.mrf.mxu0
        %1937 = vmatprep.mubr.bf16.mxu0 %v747
        %1938 = vmatmul.mubr.bf16.gmra.mxu0 %v1036
        %v1939 = vpop.f32.mrf.mxu0
        %v1940 = vadd.f32 %v1779, %v1939
        %v1941 = vpop.f32.mrf.mxu0
        %v1942 = vpop.f32.mrf.mxu0
        %v1943 = vadd.f32 %v1782, %v1942
        %v1944 = vpop.f32.mrf.mxu0
        %1945 = vmatprep.mubr.bf16.mxu0 %v748
        %1946 = vmatmul.mubr.bf16.gmra.mxu0 %v1039
        %v1947 = vpop.f32.mrf.mxu0
        %v1948 = vadd.f32 %v1787, %v1947
        %v1949 = vpop.f32.mrf.mxu0
        %v1950 = vpop.f32.mrf.mxu0
        %v1951 = vadd.f32 %v1790, %v1950
        %v1952 = vpop.f32.mrf.mxu0
        %1953 = vmatprep.mubr.bf16.mxu0 %v749
        %1954 = vmatmul.mubr.bf16.gmra.mxu0 %v1042
        %v1955 = vpop.f32.mrf.mxu0
        %v1956 = vadd.f32 %v1795, %v1955
        %v1957 = vpop.f32.mrf.mxu0
        %v1958 = vpop.f32.mrf.mxu0
        %v1959 = vadd.f32 %v1798, %v1958
        %v1960 = vpop.f32.mrf.mxu0
        %1961 = vmatprep.mubr.bf16.mxu0 %v750
        %1962 = vmatmul.mubr.bf16.gmra.mxu0 %v1045
        %v1963 = vpop.f32.mrf.mxu0
        %v1964 = vadd.f32 %v1803, %v1963
        %v1965 = vpop.f32.mrf.mxu0
        %v1966 = vpop.f32.mrf.mxu0
        %v1967 = vadd.f32 %v1806, %v1966
        %v1968 = vpop.f32.mrf.mxu0
        %1969 = vmatprep.mubr.bf16.mxu0 %v751
        %1970 = vmatmul.mubr.bf16.gmra.mxu0 %v1048
        %v1971 = vpop.f32.mrf.mxu0
        %v1972 = vadd.f32 %v1811, %v1971
        %v1973 = vpop.f32.mrf.mxu0
        %v1974 = vpop.f32.mrf.mxu0
        %v1975 = vadd.f32 %v1814, %v1974
        %v1976 = vpop.f32.mrf.mxu0
        %1977 = vmatprep.mubr.bf16.mxu0 %v752
        %1978 = vmatmul.mubr.bf16.gmra.mxu0 %v1051
        %v1979 = vpop.f32.mrf.mxu0
        %v1980 = vadd.f32 %v1819, %v1979
        %v1981 = vpop.f32.mrf.mxu0
        %v1982 = vpop.f32.mrf.mxu0
        %v1983 = vadd.f32 %v1822, %v1982
        %v1984 = vpop.f32.mrf.mxu0
        %1985 = vmatprep.mubr.bf16.mxu0 %v753
        %1986 = vmatmul.mubr.bf16.gmra.mxu0 %v1054
        %v1987 = vpop.f32.mrf.mxu0
        %v1988 = vadd.f32 %v1827, %v1987
        %v1989 = vpop.f32.mrf.mxu0
        %v1990 = vpop.f32.mrf.mxu0
        %v1991 = vadd.f32 %v1830, %v1990
        %v1992 = vpop.f32.mrf.mxu0
        %1993 = vmatprep.mubr.bf16.mxu0 %v754
        %1994 = vmatmul.mubr.bf16.gmra.mxu0 %v1057
        %v1995 = vpop.f32.mrf.mxu0
        %v1996 = vadd.f32 %v1835, %v1995
        %v1997 = vpop.f32.mrf.mxu0
        %v1998 = vpop.f32.mrf.mxu0
        %v1999 = vadd.f32 %v1838, %v1998
        %v2000 = vpop.f32.mrf.mxu0
        %2001 = vmatprep.mubr.bf16.mxu0 %v755
        %2002 = vmatmul.mubr.bf16.gmra.mxu0 %v1060
        %v2003 = vpop.f32.mrf.mxu0
        %v2004 = vadd.f32 %v1843, %v2003
        %v2005 = vpop.f32.mrf.mxu0
        %v2006 = vpop.f32.mrf.mxu0
        %v2007 = vadd.f32 %v1846, %v2006
        %v2008 = vpop.f32.mrf.mxu0
        %2009 = vmatprep.mubr.bf16.mxu0 %v756
        %2010 = vmatmul.mubr.bf16.gmra.mxu0 %v1063
        %v2011 = vpop.f32.mrf.mxu0
        %v2012 = vadd.f32 %v1851, %v2011
        %v2013 = vpop.f32.mrf.mxu0
        %v2014 = vpop.f32.mrf.mxu0
        %v2015 = vadd.f32 %v1854, %v2014
        %v2016 = vpop.f32.mrf.mxu0
        %2017 = vmatprep.mubr.bf16.mxu0 %v773
        %2018 = vmatmul.mubr.bf16.gmra.mxu0 %v1066
        %v2019 = vpop.f32.mrf.mxu0
        %v2020 = vadd.f32 %v1859, %v2019
        %v2021 = vpop.f32.mrf.mxu0
        %v2022 = vpop.f32.mrf.mxu0
        %v2023 = vadd.f32 %v1862, %v2022
        %v2024 = vpop.f32.mrf.mxu0
        %2025 = vdwg.mxu0
        %2026 = vmatprep.subr.bf16.mxu0 0
        %2027 = vmatpush1.bf16.msra.mxu0 %v1599
        %2028 = vmatprep.subr.bf16.mxu0 0
        %2029 = vmatpush1.bf16.msra.mxu0 %v1598
        %2030 = vmatprep.subr.bf16.mxu0 0
        %2031 = vmatpush1.bf16.msra.mxu0 %v1597
        %2032 = vmatprep.subr.bf16.mxu0 0
        %2033 = vmatpush1.bf16.msra.mxu0 %v1596
        %2034 = vmatprep.subr.bf16.mxu0 0
        %2035 = vmatpush1.bf16.msra.mxu0 %v1595
        %2036 = vmatprep.subr.bf16.mxu0 0
        %2037 = vmatpush1.bf16.msra.mxu0 %v1594
        %2038 = vmatprep.subr.bf16.mxu0 0
        %2039 = vmatpush1.bf16.msra.mxu0 %v1593
        %2040 = vmatprep.subr.bf16.mxu0 0
        %2041 = vmatpush1.bf16.msra.mxu0 %v1592
        %2042 = vmatprep.subr.bf16.mxu0 0
        %2043 = vmatpush2.bf16.msra.mxu0 %v1607
        %2044 = vmatprep.subr.bf16.mxu0 0
        %2045 = vmatpush2.bf16.msra.mxu0 %v1606
        %2046 = vmatprep.subr.bf16.mxu0 0
        %2047 = vmatpush2.bf16.msra.mxu0 %v1605
        %2048 = vmatprep.subr.bf16.mxu0 0
        %2049 = vmatpush2.bf16.msra.mxu0 %v1604
        %2050 = vmatprep.subr.bf16.mxu0 0
        %2051 = vmatpush2.bf16.msra.mxu0 %v1603
        %2052 = vmatprep.subr.bf16.mxu0 0
        %2053 = vmatpush2.bf16.msra.mxu0 %v1602
        %2054 = vmatprep.subr.bf16.mxu0 0
        %2055 = vmatpush2.bf16.msra.mxu0 %v1601
        %2056 = vmatprep.subr.bf16.mxu0 0
        %2057 = vmatpush2.bf16.msra.mxu0 %v1600
        %2058 = vmatprep.mubr.bf16.mxu0 %v1024
        %2059 = vmatmul.mubr.bf16.gmra.mxu0 %v801
        %v2060 = vpop.f32.mrf.mxu0
        %v2061 = vadd.f32 %v1900, %v2060
        %v2062 = vpop.f32.mrf.mxu0
        %v2063 = vpop.f32.mrf.mxu0
        %v2064 = vadd.f32 %v1903, %v2063
        %v2065 = vpop.f32.mrf.mxu0
        %2066 = vmatprep.mubr.bf16.mxu0 %v1027
        %2067 = vmatmul.mubr.bf16.gmra.mxu0 %v813
        %v2068 = vpop.f32.mrf.mxu0
        %v2069 = vadd.f32 %v1908, %v2068
        %v2070 = vpop.f32.mrf.mxu0
        %v2071 = vpop.f32.mrf.mxu0
        %v2072 = vadd.f32 %v1911, %v2071
        %v2073 = vpop.f32.mrf.mxu0
        %2074 = vmatprep.mubr.bf16.mxu0 %v1030
        %2075 = vmatmul.mubr.bf16.gmra.mxu0 %v825
        %v2076 = vpop.f32.mrf.mxu0
        %v2077 = vadd.f32 %v1916, %v2076
        %v2078 = vpop.f32.mrf.mxu0
        %v2079 = vpop.f32.mrf.mxu0
        %v2080 = vadd.f32 %v1919, %v2079
        %v2081 = vpop.f32.mrf.mxu0
        %2082 = vmatprep.mubr.bf16.mxu0 %v1033
        %2083 = vmatmul.mubr.bf16.gmra.mxu0 %v837
        %v2084 = vpop.f32.mrf.mxu0
        %v2085 = vadd.f32 %v1924, %v2084
        %v2086 = vpop.f32.mrf.mxu0
        %v2087 = vpop.f32.mrf.mxu0
        %v2088 = vadd.f32 %v1927, %v2087
        %v2089 = vpop.f32.mrf.mxu0
        %2090 = vmatprep.mubr.bf16.mxu0 %v1036
        %2091 = vmatmul.mubr.bf16.gmra.mxu0 %v849
        %v2092 = vpop.f32.mrf.mxu0
        %v2093 = vadd.f32 %v1932, %v2092
        %v2094 = vpop.f32.mrf.mxu0
        %v2095 = vpop.f32.mrf.mxu0
        %v2096 = vadd.f32 %v1935, %v2095
        %v2097 = vpop.f32.mrf.mxu0
        %2098 = vmatprep.mubr.bf16.mxu0 %v1039
        %2099 = vmatmul.mubr.bf16.gmra.mxu0 %v861
        %v2100 = vpop.f32.mrf.mxu0
        %v2101 = vadd.f32 %v1940, %v2100
        %v2102 = vpop.f32.mrf.mxu0
        %v2103 = vpop.f32.mrf.mxu0
        %v2104 = vadd.f32 %v1943, %v2103
        %v2105 = vpop.f32.mrf.mxu0
        %2106 = vmatprep.mubr.bf16.mxu0 %v1042
        %2107 = vmatmul.mubr.bf16.gmra.mxu0 %v873
        %v2108 = vpop.f32.mrf.mxu0
        %v2109 = vadd.f32 %v1948, %v2108
        %v2110 = vpop.f32.mrf.mxu0
        %v2111 = vpop.f32.mrf.mxu0
        %v2112 = vadd.f32 %v1951, %v2111
        %v2113 = vpop.f32.mrf.mxu0
        %2114 = vmatprep.mubr.bf16.mxu0 %v1045
        %2115 = vmatmul.mubr.bf16.gmra.mxu0 %v885
        %v2116 = vpop.f32.mrf.mxu0
        %v2117 = vadd.f32 %v1956, %v2116
        %v2118 = vpop.f32.mrf.mxu0
        %v2119 = vpop.f32.mrf.mxu0
        %v2120 = vadd.f32 %v1959, %v2119
        %v2121 = vpop.f32.mrf.mxu0
        %2122 = vmatprep.mubr.bf16.mxu0 %v1048
        %2123 = vmatmul.mubr.bf16.gmra.mxu0 %v897
        %v2124 = vpop.f32.mrf.mxu0
        %v2125 = vadd.f32 %v1964, %v2124
        %v2126 = vpop.f32.mrf.mxu0
        %v2127 = vpop.f32.mrf.mxu0
        %v2128 = vadd.f32 %v1967, %v2127
        %v2129 = vpop.f32.mrf.mxu0
        %2130 = vmatprep.mubr.bf16.mxu0 %v1051
        %2131 = vmatmul.mubr.bf16.gmra.mxu0 %v909
        %v2132 = vpop.f32.mrf.mxu0
        %v2133 = vadd.f32 %v1972, %v2132
        %v2134 = vpop.f32.mrf.mxu0
        %v2135 = vpop.f32.mrf.mxu0
        %v2136 = vadd.f32 %v1975, %v2135
        %v2137 = vpop.f32.mrf.mxu0
        %2138 = vmatprep.mubr.bf16.mxu0 %v1054
        %2139 = vmatmul.mubr.bf16.gmra.mxu0 %v921
        %v2140 = vpop.f32.mrf.mxu0
        %v2141 = vadd.f32 %v1980, %v2140
        %v2142 = vpop.f32.mrf.mxu0
        %v2143 = vpop.f32.mrf.mxu0
        %v2144 = vadd.f32 %v1983, %v2143
        %v2145 = vpop.f32.mrf.mxu0
        %2146 = vmatprep.mubr.bf16.mxu0 %v1057
        %2147 = vmatmul.mubr.bf16.gmra.mxu0 %v933
        %v2148 = vpop.f32.mrf.mxu0
        %v2149 = vadd.f32 %v1988, %v2148
        %v2150 = vpop.f32.mrf.mxu0
        %v2151 = vpop.f32.mrf.mxu0
        %v2152 = vadd.f32 %v1991, %v2151
        %v2153 = vpop.f32.mrf.mxu0
        %2154 = vmatprep.mubr.bf16.mxu0 %v1060
        %2155 = vmatmul.mubr.bf16.gmra.mxu0 %v945
        %v2156 = vpop.f32.mrf.mxu0
        %v2157 = vadd.f32 %v1996, %v2156
        %v2158 = vpop.f32.mrf.mxu0
        %v2159 = vpop.f32.mrf.mxu0
        %v2160 = vadd.f32 %v1999, %v2159
        %v2161 = vpop.f32.mrf.mxu0
        %2162 = vmatprep.mubr.bf16.mxu0 %v1063
        %2163 = vmatmul.mubr.bf16.gmra.mxu0 %v957
        %v2164 = vpop.f32.mrf.mxu0
        %v2165 = vadd.f32 %v2004, %v2164
        %v2166 = vpop.f32.mrf.mxu0
        %v2167 = vpop.f32.mrf.mxu0
        %v2168 = vadd.f32 %v2007, %v2167
        %v2169 = vpop.f32.mrf.mxu0
        %2170 = vmatprep.mubr.bf16.mxu0 %v1066
        %2171 = vmatmul.mubr.bf16.gmra.mxu0 %v969
        %v2172 = vpop.f32.mrf.mxu0
        %v2173 = vadd.f32 %v2012, %v2172
        %v2174 = vpop.f32.mrf.mxu0
        %v2175 = vpop.f32.mrf.mxu0
        %v2176 = vadd.f32 %v2015, %v2175
        %v2177 = vpop.f32.mrf.mxu0
        %2178 = vmatprep.mubr.bf16.mxu0 %v1100
        %2179 = vmatmul.mubr.bf16.gmra.mxu0 %v1094
        %v2180 = vpop.f32.mrf.mxu0
        %v2181 = vadd.f32 %v2020, %v2180
        %v2182 = vpop.f32.mrf.mxu0
        %v2183 = vpop.f32.mrf.mxu0
        %v2184 = vadd.f32 %v2023, %v2183
        %v2185 = vpop.f32.mrf.mxu0
        %2186 = vdwg.mxu0
        %2187 = vmatprep.subr.bf16.mxu0 0
        %2188 = vmatpush1.bf16.msra.mxu0 %v1615
        %2189 = vmatprep.subr.bf16.mxu0 0
        %2190 = vmatpush1.bf16.msra.mxu0 %v1614
        %2191 = vmatprep.subr.bf16.mxu0 0
        %2192 = vmatpush1.bf16.msra.mxu0 %v1613
        %2193 = vmatprep.subr.bf16.mxu0 0
        %2194 = vmatpush1.bf16.msra.mxu0 %v1612
        %2195 = vmatprep.subr.bf16.mxu0 0
        %2196 = vmatpush1.bf16.msra.mxu0 %v1611
        %2197 = vmatprep.subr.bf16.mxu0 0
        %2198 = vmatpush1.bf16.msra.mxu0 %v1610
        %2199 = vmatprep.subr.bf16.mxu0 0
        %2200 = vmatpush1.bf16.msra.mxu0 %v1609
        %2201 = vmatprep.subr.bf16.mxu0 0
        %2202 = vmatpush1.bf16.msra.mxu0 %v1608
        %2203 = vmatprep.subr.bf16.mxu0 0
        %2204 = vmatpush2.bf16.msra.mxu0 %v1623
        %2205 = vmatprep.subr.bf16.mxu0 0
        %2206 = vmatpush2.bf16.msra.mxu0 %v1622
        %2207 = vmatprep.subr.bf16.mxu0 0
        %2208 = vmatpush2.bf16.msra.mxu0 %v1621
        %2209 = vmatprep.subr.bf16.mxu0 0
        %2210 = vmatpush2.bf16.msra.mxu0 %v1620
        %2211 = vmatprep.subr.bf16.mxu0 0
        %2212 = vmatpush2.bf16.msra.mxu0 %v1619
        %2213 = vmatprep.subr.bf16.mxu0 0
        %2214 = vmatpush2.bf16.msra.mxu0 %v1618
        %2215 = vmatprep.subr.bf16.mxu0 0
        %2216 = vmatpush2.bf16.msra.mxu0 %v1617
        %2217 = vmatprep.subr.bf16.mxu0 0
        %2218 = vmatpush2.bf16.msra.mxu0 %v1616
        %2219 = vmatprep.mubr.bf16.mxu0 %v813
        %2220 = vmatmul.mubr.bf16.gmra.mxu0 %v743
        %v2221 = vpop.f32.mrf.mxu0
        %v2222 = vadd.f32 %v2061, %v2221
        %v2223 = vpop.f32.mrf.mxu0
        %v2224 = vpop.f32.mrf.mxu0
        %v2225 = vadd.f32 %v2064, %v2224
        %v2226 = vpop.f32.mrf.mxu0
        %2227 = vmatprep.mubr.bf16.mxu0 %v825
        %2228 = vmatmul.mubr.bf16.gmra.mxu0 %v744
        %v2229 = vpop.f32.mrf.mxu0
        %v2230 = vadd.f32 %v2069, %v2229
        %v2231 = vpop.f32.mrf.mxu0
        %v2232 = vpop.f32.mrf.mxu0
        %v2233 = vadd.f32 %v2072, %v2232
        %v2234 = vpop.f32.mrf.mxu0
        %2235 = vmatprep.mubr.bf16.mxu0 %v837
        %2236 = vmatmul.mubr.bf16.gmra.mxu0 %v745
        %v2237 = vpop.f32.mrf.mxu0
        %v2238 = vadd.f32 %v2077, %v2237
        %v2239 = vpop.f32.mrf.mxu0
        %v2240 = vpop.f32.mrf.mxu0
        %v2241 = vadd.f32 %v2080, %v2240
        %v2242 = vpop.f32.mrf.mxu0
        %2243 = vmatprep.mubr.bf16.mxu0 %v849
        %2244 = vmatmul.mubr.bf16.gmra.mxu0 %v746
        %v2245 = vpop.f32.mrf.mxu0
        %v2246 = vadd.f32 %v2085, %v2245
        %v2247 = vpop.f32.mrf.mxu0
        %v2248 = vpop.f32.mrf.mxu0
        %v2249 = vadd.f32 %v2088, %v2248
        %v2250 = vpop.f32.mrf.mxu0
        %2251 = vmatprep.mubr.bf16.mxu0 %v861
        %2252 = vmatmul.mubr.bf16.gmra.mxu0 %v747
        %v2253 = vpop.f32.mrf.mxu0
        %v2254 = vadd.f32 %v2093, %v2253
        %v2255 = vpop.f32.mrf.mxu0
        %v2256 = vpop.f32.mrf.mxu0
        %v2257 = vadd.f32 %v2096, %v2256
        %v2258 = vpop.f32.mrf.mxu0
        %2259 = vmatprep.mubr.bf16.mxu0 %v873
        %2260 = vmatmul.mubr.bf16.gmra.mxu0 %v748
        %v2261 = vpop.f32.mrf.mxu0
        %v2262 = vadd.f32 %v2101, %v2261
        %v2263 = vpop.f32.mrf.mxu0
        %v2264 = vpop.f32.mrf.mxu0
        %v2265 = vadd.f32 %v2104, %v2264
        %v2266 = vpop.f32.mrf.mxu0
        %2267 = vmatprep.mubr.bf16.mxu0 %v885
        %2268 = vmatmul.mubr.bf16.gmra.mxu0 %v749
        %v2269 = vpop.f32.mrf.mxu0
        %v2270 = vadd.f32 %v2109, %v2269
        %v2271 = vpop.f32.mrf.mxu0
        %v2272 = vpop.f32.mrf.mxu0
        %v2273 = vadd.f32 %v2112, %v2272
        %v2274 = vpop.f32.mrf.mxu0
        %2275 = vmatprep.mubr.bf16.mxu0 %v897
        %2276 = vmatmul.mubr.bf16.gmra.mxu0 %v750
        %v2277 = vpop.f32.mrf.mxu0
        %v2278 = vadd.f32 %v2117, %v2277
        %v2279 = vpop.f32.mrf.mxu0
        %v2280 = vpop.f32.mrf.mxu0
        %v2281 = vadd.f32 %v2120, %v2280
        %v2282 = vpop.f32.mrf.mxu0
        %2283 = vmatprep.mubr.bf16.mxu0 %v909
        %2284 = vmatmul.mubr.bf16.gmra.mxu0 %v751
        %v2285 = vpop.f32.mrf.mxu0
        %v2286 = vadd.f32 %v2125, %v2285
        %v2287 = vpop.f32.mrf.mxu0
        %v2288 = vpop.f32.mrf.mxu0
        %v2289 = vadd.f32 %v2128, %v2288
        %v2290 = vpop.f32.mrf.mxu0
        %2291 = vmatprep.mubr.bf16.mxu0 %v921
        %2292 = vmatmul.mubr.bf16.gmra.mxu0 %v752
        %v2293 = vpop.f32.mrf.mxu0
        %v2294 = vadd.f32 %v2133, %v2293
        %v2295 = vpop.f32.mrf.mxu0
        %v2296 = vpop.f32.mrf.mxu0
        %v2297 = vadd.f32 %v2136, %v2296
        %v2298 = vpop.f32.mrf.mxu0
        %2299 = vmatprep.mubr.bf16.mxu0 %v933
        %2300 = vmatmul.mubr.bf16.gmra.mxu0 %v753
        %v2301 = vpop.f32.mrf.mxu0
        %v2302 = vadd.f32 %v2141, %v2301
        %v2303 = vpop.f32.mrf.mxu0
        %v2304 = vpop.f32.mrf.mxu0
        %v2305 = vadd.f32 %v2144, %v2304
        %v2306 = vpop.f32.mrf.mxu0
        %2307 = vmatprep.mubr.bf16.mxu0 %v945
        %2308 = vmatmul.mubr.bf16.gmra.mxu0 %v754
        %v2309 = vpop.f32.mrf.mxu0
        %v2310 = vadd.f32 %v2149, %v2309
        %v2311 = vpop.f32.mrf.mxu0
        %v2312 = vpop.f32.mrf.mxu0
        %v2313 = vadd.f32 %v2152, %v2312
        %v2314 = vpop.f32.mrf.mxu0
        %2315 = vmatprep.mubr.bf16.mxu0 %v957
        %2316 = vmatmul.mubr.bf16.gmra.mxu0 %v755
        %v2317 = vpop.f32.mrf.mxu0
        %v2318 = vadd.f32 %v2157, %v2317
        %v2319 = vpop.f32.mrf.mxu0
        %v2320 = vpop.f32.mrf.mxu0
        %v2321 = vadd.f32 %v2160, %v2320
        %v2322 = vpop.f32.mrf.mxu0
        %2323 = vmatprep.mubr.bf16.mxu0 %v969
        %2324 = vmatmul.mubr.bf16.gmra.mxu0 %v756
        %v2325 = vpop.f32.mrf.mxu0
        %v2326 = vadd.f32 %v2165, %v2325
        %v2327 = vpop.f32.mrf.mxu0
        %v2328 = vpop.f32.mrf.mxu0
        %v2329 = vadd.f32 %v2168, %v2328
        %v2330 = vpop.f32.mrf.mxu0
        %2331 = vmatprep.mubr.bf16.mxu0 %v1094
        %2332 = vmatmul.mubr.bf16.gmra.mxu0 %v773
        %v2333 = vpop.f32.mrf.mxu0
        %v2334 = vadd.f32 %v2173, %v2333
        %v2335 = vpop.f32.mrf.mxu0
        %v2336 = vpop.f32.mrf.mxu0
        %v2337 = vadd.f32 %v2176, %v2336
        %v2338 = vpop.f32.mrf.mxu0
        %2339 = vmatprep.mubr.bf16.mxu0 %v1113
        %2340 = vmatmul.mubr.bf16.gmra.mxu0 %v775
        %v2341 = vpop.f32.mrf.mxu0
        %v2342 = vadd.f32 %v2181, %v2341
        %v2343 = vpop.f32.mrf.mxu0
        %v2344 = vpop.f32.mrf.mxu0
        %v2345 = vadd.f32 %v2184, %v2344
        %v2346 = vpop.f32.mrf.mxu0
        %2347 = vdwg.mxu0
        %2348 = vmatprep.subr.bf16.mxu0 0
        %2349 = vmatpush1.bf16.msra.mxu0 %v1631
        %2350 = vmatprep.subr.bf16.mxu0 0
        %2351 = vmatpush1.bf16.msra.mxu0 %v1630
        %2352 = vmatprep.subr.bf16.mxu0 0
        %2353 = vmatpush1.bf16.msra.mxu0 %v1629
        %2354 = vmatprep.subr.bf16.mxu0 0
        %2355 = vmatpush1.bf16.msra.mxu0 %v1628
        %2356 = vmatprep.subr.bf16.mxu0 0
        %2357 = vmatpush1.bf16.msra.mxu0 %v1627
        %2358 = vmatprep.subr.bf16.mxu0 0
        %2359 = vmatpush1.bf16.msra.mxu0 %v1626
        %2360 = vmatprep.subr.bf16.mxu0 0
        %2361 = vmatpush1.bf16.msra.mxu0 %v1625
        %2362 = vmatprep.subr.bf16.mxu0 0
        %2363 = vmatpush1.bf16.msra.mxu0 %v1624
        %2364 = vmatprep.subr.bf16.mxu0 0
        %2365 = vmatpush2.bf16.msra.mxu0 0
        %2366 = vmatprep.subr.bf16.mxu0 0
        %2367 = vmatpush2.bf16.msra.mxu0 0
        %2368 = vmatprep.subr.bf16.mxu0 0
        %2369 = vmatpush2.bf16.msra.mxu0 0
        %2370 = vmatprep.subr.bf16.mxu0 0
        %2371 = vmatpush2.bf16.msra.mxu0 0
        %2372 = vmatprep.subr.bf16.mxu0 0
        %2373 = vmatpush2.bf16.msra.mxu0 0
        %2374 = vmatprep.subr.bf16.mxu0 0
        %2375 = vmatpush2.bf16.msra.mxu0 0
        %2376 = vmatprep.subr.bf16.mxu0 0
        %2377 = vmatpush2.bf16.msra.mxu0 0
        %2378 = vmatprep.subr.bf16.mxu0 0
        %2379 = vmatpush2.bf16.msra.mxu0 0
        %2380 = vmatprep.mubr.bf16.mxu0 0
        %2381 = vmatmul.mubr.bf16.gmra.mxu0 %v1027
        %v2382 = vpop.f32.mrf.mxu0
        %v2383 = vadd.f32 %v2222, %v2382
        %v2384 = vpop.f32.mrf.mxu0
        %v2385 = vpop.f32.mrf.mxu0
        %v2386 = vadd.f32 %v2225, %v2385
        %v2387 = vpop.f32.mrf.mxu0
        %2388 = vmatprep.mubr.bf16.mxu0 0
        %2389 = vmatmul.mubr.bf16.gmra.mxu0 %v1030
        %v2390 = vpop.f32.mrf.mxu0
        %v2391 = vadd.f32 %v2230, %v2390
        %v2392 = vpop.f32.mrf.mxu0
        %v2393 = vpop.f32.mrf.mxu0
        %v2394 = vadd.f32 %v2233, %v2393
        %v2395 = vpop.f32.mrf.mxu0
        %2396 = vmatprep.mubr.bf16.mxu0 0
        %2397 = vmatmul.mubr.bf16.gmra.mxu0 %v1033
        %v2398 = vpop.f32.mrf.mxu0
        %v2399 = vadd.f32 %v2238, %v2398
        %v2400 = vpop.f32.mrf.mxu0
        %v2401 = vpop.f32.mrf.mxu0
        %v2402 = vadd.f32 %v2241, %v2401
        %v2403 = vpop.f32.mrf.mxu0
        %2404 = vmatprep.mubr.bf16.mxu0 0
        %2405 = vmatmul.mubr.bf16.gmra.mxu0 %v1036
        %v2406 = vpop.f32.mrf.mxu0
        %v2407 = vadd.f32 %v2246, %v2406
        %v2408 = vpop.f32.mrf.mxu0
        %v2409 = vpop.f32.mrf.mxu0
        %v2410 = vadd.f32 %v2249, %v2409
        %v2411 = vpop.f32.mrf.mxu0
        %2412 = vmatprep.mubr.bf16.mxu0 0
        %2413 = vmatmul.mubr.bf16.gmra.mxu0 %v1039
        %v2414 = vpop.f32.mrf.mxu0
        %v2415 = vadd.f32 %v2254, %v2414
        %v2416 = vpop.f32.mrf.mxu0
        %v2417 = vpop.f32.mrf.mxu0
        %v2418 = vadd.f32 %v2257, %v2417
        %v2419 = vpop.f32.mrf.mxu0
        %2420 = vmatprep.mubr.bf16.mxu0 0
        %2421 = vmatmul.mubr.bf16.gmra.mxu0 %v1042
        %v2422 = vpop.f32.mrf.mxu0
        %v2423 = vadd.f32 %v2262, %v2422
        %v2424 = vpop.f32.mrf.mxu0
        %v2425 = vpop.f32.mrf.mxu0
        %v2426 = vadd.f32 %v2265, %v2425
        %v2427 = vpop.f32.mrf.mxu0
        %2428 = vmatprep.mubr.bf16.mxu0 0
        %2429 = vmatmul.mubr.bf16.gmra.mxu0 %v1045
        %v2430 = vpop.f32.mrf.mxu0
        %v2431 = vadd.f32 %v2270, %v2430
        %v2432 = vpop.f32.mrf.mxu0
        %v2433 = vpop.f32.mrf.mxu0
        %v2434 = vadd.f32 %v2273, %v2433
        %v2435 = vpop.f32.mrf.mxu0
        %2436 = vmatprep.mubr.bf16.mxu0 0
        %2437 = vmatmul.mubr.bf16.gmra.mxu0 %v1048
        %v2438 = vpop.f32.mrf.mxu0
        %v2439 = vadd.f32 %v2278, %v2438
        %v2440 = vpop.f32.mrf.mxu0
        %v2441 = vpop.f32.mrf.mxu0
        %v2442 = vadd.f32 %v2281, %v2441
        %v2443 = vpop.f32.mrf.mxu0
        %2444 = vmatprep.mubr.bf16.mxu0 0
        %2445 = vmatmul.mubr.bf16.gmra.mxu0 %v1051
        %v2446 = vpop.f32.mrf.mxu0
        %v2447 = vadd.f32 %v2286, %v2446
        %v2448 = vpop.f32.mrf.mxu0
        %v2449 = vpop.f32.mrf.mxu0
        %v2450 = vadd.f32 %v2289, %v2449
        %v2451 = vpop.f32.mrf.mxu0
        %2452 = vmatprep.mubr.bf16.mxu0 0
        %2453 = vmatmul.mubr.bf16.gmra.mxu0 %v1054
        %v2454 = vpop.f32.mrf.mxu0
        %v2455 = vadd.f32 %v2294, %v2454
        %v2456 = vpop.f32.mrf.mxu0
        %v2457 = vpop.f32.mrf.mxu0
        %v2458 = vadd.f32 %v2297, %v2457
        %v2459 = vpop.f32.mrf.mxu0
        %2460 = vmatprep.mubr.bf16.mxu0 0
        %2461 = vmatmul.mubr.bf16.gmra.mxu0 %v1057
        %v2462 = vpop.f32.mrf.mxu0
        %v2463 = vadd.f32 %v2302, %v2462
        %v2464 = vpop.f32.mrf.mxu0
        %v2465 = vpop.f32.mrf.mxu0
        %v2466 = vadd.f32 %v2305, %v2465
        %v2467 = vpop.f32.mrf.mxu0
        %2468 = vmatprep.mubr.bf16.mxu0 0
        %2469 = vmatmul.mubr.bf16.gmra.mxu0 %v1060
        %v2470 = vpop.f32.mrf.mxu0
        %v2471 = vadd.f32 %v2310, %v2470
        %v2472 = vpop.f32.mrf.mxu0
        %v2473 = vpop.f32.mrf.mxu0
        %v2474 = vadd.f32 %v2313, %v2473
        %v2475 = vpop.f32.mrf.mxu0
        %2476 = vmatprep.mubr.bf16.mxu0 0
        %2477 = vmatmul.mubr.bf16.gmra.mxu0 %v1063
        %v2478 = vpop.f32.mrf.mxu0
        %v2479 = vadd.f32 %v2318, %v2478
        %v2480 = vpop.f32.mrf.mxu0
        %v2481 = vpop.f32.mrf.mxu0
        %v2482 = vadd.f32 %v2321, %v2481
        %v2483 = vpop.f32.mrf.mxu0
        %2484 = vmatprep.mubr.bf16.mxu0 0
        %2485 = vmatmul.mubr.bf16.gmra.mxu0 %v1066
        %v2486 = vpop.f32.mrf.mxu0
        %v2487 = vadd.f32 %v2326, %v2486
        %v2488 = vpop.f32.mrf.mxu0
        %v2489 = vpop.f32.mrf.mxu0
        %v2490 = vadd.f32 %v2329, %v2489
        %v2491 = vpop.f32.mrf.mxu0
        %2492 = vmatprep.mubr.bf16.mxu0 0
        %2493 = vmatmul.mubr.bf16.gmra.mxu0 %v1100
        %v2494 = vpop.f32.mrf.mxu0
        %v2495 = vadd.f32 %v2334, %v2494
        %v2496 = vpop.f32.mrf.mxu0
        %v2497 = vpop.f32.mrf.mxu0
        %v2498 = vadd.f32 %v2337, %v2497
        %v2499 = vpop.f32.mrf.mxu0
        %2500 = vmatprep.mubr.bf16.mxu0 0
        %2501 = vmatmul.mubr.bf16.gmra.mxu0 %v1119
        %v2502 = vpop.f32.mrf.mxu0
        %v2503 = vadd.f32 %v2342, %v2502
        %v2504 = vpop.f32.mrf.mxu0
        %v2505 = vpop.f32.mrf.mxu0
        %v2506 = vadd.f32 %v2345, %v2505
        %v2507 = vpop.f32.mrf.mxu0
        %2508 = vdwg.mxu0
        %v2509 = vmax.f32 %v2383, 0.0
        %v2510 = vmax.f32 %v2386, 0.0
        %v2511 = vmax.f32 %v2391, 0.0
        %v2512 = vmax.f32 %v2394, 0.0
        %v2513 = vmax.f32 %v2399, 0.0
        %v2514 = vmax.f32 %v2402, 0.0
        %v2515 = vmax.f32 %v2407, 0.0
        %v2516 = vmax.f32 %v2410, 0.0
        %v2517 = vmax.f32 %v2415, 0.0
        %v2518 = vmax.f32 %v2418, 0.0
        %v2519 = vmax.f32 %v2423, 0.0
        %v2520 = vmax.f32 %v2426, 0.0
        %v2521 = vmax.f32 %v2431, 0.0
        %v2522 = vmax.f32 %v2434, 0.0
        %v2523 = vmax.f32 %v2439, 0.0
        %v2524 = vmax.f32 %v2442, 0.0
        %v2525 = vmax.f32 %v2447, 0.0
        %v2526 = vmax.f32 %v2450, 0.0
        %v2527 = vmax.f32 %v2455, 0.0
        %v2528 = vmax.f32 %v2458, 0.0
        %v2529 = vmax.f32 %v2463, 0.0
        %v2530 = vmax.f32 %v2466, 0.0
        %v2531 = vmax.f32 %v2471, 0.0
        %v2532 = vmax.f32 %v2474, 0.0
        %v2533 = vmax.f32 %v2479, 0.0
        %v2534 = vmax.f32 %v2482, 0.0
        %v2535 = vmax.f32 %v2487, 0.0
        %v2536 = vmax.f32 %v2490, 0.0
        %v2537 = vmax.f32 %v2495, 0.0
        %v2538 = vmax.f32 %v2498, 0.0
        %v2539 = vmax.f32 %v2503, 0.0
        %v2540 = vmax.f32 %v2506, 0.0
        %2541 = vst [vmem:[#allocation2] sm:$0xff] 0.0
        %2542 = vst [vmem:[#allocation2 + $0x8] sm:$0xff] 0.0
        %2543 = vst [vmem:[#allocation2 + $0x10] sm:$0x3] 0.0
        %2544 = vst [vmem:[#allocation2 + $0x18] sm:$0xff] 0.0
        %2545 = vst [vmem:[#allocation2 + $0x20] sm:$0xff] 0.0
        %2546 = vst [vmem:[#allocation2 + $0x28] sm:$0x3] 0.0
        %2547 = vst [vmem:[#allocation2 + $0x30] sm:$0xff] 0.0
        %2548 = vst [vmem:[#allocation2 + $0x38] sm:$0xff] 0.0
        %2549 = vst [vmem:[#allocation2 + $0x40] sm:$0x3] 0.0
        %2550 = vst [vmem:[#allocation2 + $0x48] sm:$0xff] 0.0
        %2551 = vst [vmem:[#allocation2 + $0x50] sm:$0xff] 0.0
        %2552 = vst [vmem:[#allocation2 + $0x58] sm:$0x3] 0.0
        %2553 = vst [vmem:[#allocation2 + $0x60] sm:$0xff] 0.0
        %2554 = vst [vmem:[#allocation2 + $0x68] sm:$0xff] 0.0
        %2555 = vst [vmem:[#allocation2 + $0x70] sm:$0x3] 0.0
        %2556 = vst [vmem:[#allocation2 + $0x78] sm:$0xff] 0.0
        %2557 = vst [vmem:[#allocation2 + $0x80] sm:$0xff] 0.0
        %2558 = vst [vmem:[#allocation2 + $0x88] sm:$0x3] 0.0
        %2559 = vst [vmem:[#allocation2 + $0x90] sm:$0xff] 0.0
        %2560 = vst [vmem:[#allocation2 + $0x98] sm:$0xff] 0.0
        %2561 = vst [vmem:[#allocation2 + $0xa0] sm:$0x3] 0.0
        %2562 = vst [vmem:[#allocation2 + $0xa8] sm:$0xff] 0.0
        %2563 = vst [vmem:[#allocation2 + $0xb0] sm:$0xff] 0.0
        %2564 = vst [vmem:[#allocation2 + $0xb8] sm:$0x3] 0.0
        %2565 = vst [vmem:[#allocation2 + $0xc0] sm:$0xff] 0.0
        %2566 = vst [vmem:[#allocation2 + $0xc8] sm:$0xff] 0.0
        %2567 = vst [vmem:[#allocation2 + $0xd0] sm:$0x3] 0.0
        %2568 = vst [vmem:[#allocation2 + $0xd8] sm:$0xff] 0.0
        %2569 = vst [vmem:[#allocation2 + $0xe0] sm:$0xff] 0.0
        %2570 = vst [vmem:[#allocation2 + $0xe8] sm:$0x3] 0.0
        %2571 = vst [vmem:[#allocation2 + $0xf0] sm:$0xff] 0.0
        %2572 = vst [vmem:[#allocation2 + $0xf8] sm:$0xff] 0.0
        %2573 = vst [vmem:[#allocation2 + $0x100] sm:$0x3] 0.0
        %2574 = vst [vmem:[#allocation2 + $0x108] sm:$0xff] 0.0
        %2575 = vst [vmem:[#allocation2 + $0x110] sm:$0xff] 0.0
        %2576 = vst [vmem:[#allocation2 + $0x118] sm:$0x3] 0.0
        %2577 = vst [vmem:[#allocation2 + $0x120] sm:$0xff] 0.0
        %2578 = vst [vmem:[#allocation2 + $0x128] sm:$0xff] 0.0
        %2579 = vst [vmem:[#allocation2 + $0x130] sm:$0x3] 0.0
        %2580 = vst [vmem:[#allocation2 + $0x138] sm:$0xff] 0.0
        %2581 = vst [vmem:[#allocation2 + $0x140] sm:$0xff] 0.0
        %2582 = vst [vmem:[#allocation2 + $0x148] sm:$0x3] 0.0
        %2583 = vst [vmem:[#allocation2 + $0x150] sm:$0xff] 0.0
        %2584 = vst [vmem:[#allocation2 + $0x158] sm:$0xff] 0.0
        %2585 = vst [vmem:[#allocation2 + $0x160] sm:$0x3] 0.0
        %2586 = vst [vmem:[#allocation2 + $0x168] sm:$0xff] 0.0
        %2587 = vst [vmem:[#allocation2 + $0x170] sm:$0xff] 0.0
        %2588 = vst [vmem:[#allocation2 + $0x178] sm:$0x3] 0.0
        %2589 = vst [vmem:[#allocation2 + $0x180] sm:$0xff] 0.0
        %2590 = vst [vmem:[#allocation2 + $0x188] sm:$0xff] 0.0
        %2591 = vst [vmem:[#allocation2 + $0x190] sm:$0x3] 0.0
        %2592 = vst [vmem:[#allocation2 + $0x198] sm:$0xff] 0.0
        %2593 = vst [vmem:[#allocation2 + $0x1a0] sm:$0xff] 0.0
        %2594 = vst [vmem:[#allocation2 + $0x1a8] sm:$0x3] 0.0
        %s2595 = scalar_lea.vmem [#allocation2], 24
        %2596 = vst [vmem:[%s2595 + $0x1] sm:$0xff] %v2509
        %2597 = vst [vmem:[%s2595 + $0x9] sm:$0xff] %v2510
        %2598 = vst [vmem:[%s2595 + $0x19] sm:$0xff] %v2511
        %2599 = vst [vmem:[%s2595 + $0x21] sm:$0xff] %v2512
        %2600 = vst [vmem:[%s2595 + $0x31] sm:$0xff] %v2513
        %2601 = vst [vmem:[%s2595 + $0x39] sm:$0xff] %v2514
        %2602 = vst [vmem:[%s2595 + $0x49] sm:$0xff] %v2515
        %2603 = vst [vmem:[%s2595 + $0x51] sm:$0xff] %v2516
        %2604 = vst [vmem:[%s2595 + $0x61] sm:$0xff] %v2517
        %2605 = vst [vmem:[%s2595 + $0x69] sm:$0xff] %v2518
        %2606 = vst [vmem:[%s2595 + $0x79] sm:$0xff] %v2519
        %2607 = vst [vmem:[%s2595 + $0x81] sm:$0xff] %v2520
        %2608 = vst [vmem:[%s2595 + $0x91] sm:$0xff] %v2521
        %2609 = vst [vmem:[%s2595 + $0x99] sm:$0xff] %v2522
        %2610 = vst [vmem:[%s2595 + $0xa9] sm:$0xff] %v2523
        %2611 = vst [vmem:[%s2595 + $0xb1] sm:$0xff] %v2524
        %2612 = vst [vmem:[%s2595 + $0xc1] sm:$0xff] %v2525
        %2613 = vst [vmem:[%s2595 + $0xc9] sm:$0xff] %v2526
        %2614 = vst [vmem:[%s2595 + $0xd9] sm:$0xff] %v2527
        %2615 = vst [vmem:[%s2595 + $0xe1] sm:$0xff] %v2528
        %2616 = vst [vmem:[%s2595 + $0xf1] sm:$0xff] %v2529
        %2617 = vst [vmem:[%s2595 + $0xf9] sm:$0xff] %v2530
        %2618 = vst [vmem:[%s2595 + $0x109] sm:$0xff] %v2531
        %2619 = vst [vmem:[%s2595 + $0x111] sm:$0xff] %v2532
        %2620 = vst [vmem:[%s2595 + $0x121] sm:$0xff] %v2533
        %2621 = vst [vmem:[%s2595 + $0x129] sm:$0xff] %v2534
        %2622 = vst [vmem:[%s2595 + $0x139] sm:$0xff] %v2535
        %2623 = vst [vmem:[%s2595 + $0x141] sm:$0xff] %v2536
        %2624 = vst [vmem:[%s2595 + $0x151] sm:$0xff] %v2537
        %2625 = vst [vmem:[%s2595 + $0x159] sm:$0xff] %v2538
        %2626 = vst [vmem:[%s2595 + $0x169] sm:$0xff] %v2539
        %2627 = vst [vmem:[%s2595 + $0x171] sm:$0xff] %v2540
        %v2628 = vld [vmem:[#allocation2] sm:$0xff]
        %v2629 = vld [vmem:[#allocation2 + $0x8] sm:$0xff]
        %v2630 = vld [vmem:[#allocation2 + $0x18] sm:$0xff]
        %v2631 = vld [vmem:[#allocation2 + $0x20] sm:$0xff]
        %v2632 = vld [vmem:[#allocation2 + $0x30] sm:$0xff]
        %v2633 = vld [vmem:[#allocation2 + $0x38] sm:$0xff]
        %v2634 = vld [vmem:[#allocation2 + $0x48] sm:$0xff]
        %v2635 = vld [vmem:[#allocation2 + $0x50] sm:$0xff]
        %v2636 = vld [vmem:[#allocation2 + $0x60] sm:$0xff]
        %v2637 = vld [vmem:[#allocation2 + $0x68] sm:$0xff]
        %v2638 = vld [vmem:[#allocation2 + $0x78] sm:$0xff]
        %v2639 = vld [vmem:[#allocation2 + $0x80] sm:$0xff]
        %v2640 = vld [vmem:[#allocation2 + $0x90] sm:$0xff]
        %v2641 = vld [vmem:[#allocation2 + $0x98] sm:$0xff]
        %v2642 = vld [vmem:[#allocation2 + $0xa8] sm:$0xff]
        %v2643 = vld [vmem:[#allocation2 + $0xb0] sm:$0xff]
        %v2644 = vld [vmem:[#allocation2 + $0xc0] sm:$0xff]
        %v2645 = vld [vmem:[#allocation2 + $0xc8] sm:$0xff]
        %v2646 = vld [vmem:[#allocation2 + $0xd8] sm:$0xff]
        %v2647 = vld [vmem:[#allocation2 + $0xe0] sm:$0xff]
        %v2648 = vld [vmem:[#allocation2 + $0xf0] sm:$0xff]
        %v2649 = vld [vmem:[#allocation2 + $0xf8] sm:$0xff]
        %v2650 = vld [vmem:[#allocation2 + $0x108] sm:$0xff]
        %v2651 = vld [vmem:[#allocation2 + $0x110] sm:$0xff]
        %v2652 = vld [vmem:[#allocation2 + $0x120] sm:$0xff]
        %v2653 = vld [vmem:[#allocation2 + $0x128] sm:$0xff]
        %v2654 = vld [vmem:[#allocation2 + $0x138] sm:$0xff]
        %v2655 = vld [vmem:[#allocation2 + $0x140] sm:$0xff]
        %v2656 = vld [vmem:[#allocation2 + $0x150] sm:$0xff]
        %v2657 = vld [vmem:[#allocation2 + $0x158] sm:$0xff]
        %v2658 = vld [vmem:[#allocation2 + $0x168] sm:$0xff]
        %v2659 = vld [vmem:[#allocation2 + $0x170] sm:$0xff]
        %v2660 = vpack.c.bf16 %v2629, %v2628
        %v2661 = vpack.c.bf16 %v2631, %v2630
        %v2662 = vpack.c.bf16 %v2633, %v2632
        %v2663 = vpack.c.bf16 %v2635, %v2634
        %v2664 = vpack.c.bf16 %v2637, %v2636
        %v2665 = vpack.c.bf16 %v2639, %v2638
        %v2666 = vpack.c.bf16 %v2641, %v2640
        %v2667 = vpack.c.bf16 %v2643, %v2642
        %v2668 = vpack.c.bf16 %v2645, %v2644
        %v2669 = vpack.c.bf16 %v2647, %v2646
        %v2670 = vpack.c.bf16 %v2649, %v2648
        %v2671 = vpack.c.bf16 %v2651, %v2650
        %v2672 = vpack.c.bf16 %v2653, %v2652
        %v2673 = vpack.c.bf16 %v2655, %v2654
        %v2674 = vpack.c.bf16 %v2657, %v2656
        %v2675 = vpack.c.bf16 %v2659, %v2658
        %v2676 = vld [vmem:[#allocation2 + $0x1] sm:$0xff]
        %v2677 = vld [vmem:[#allocation2 + $0x9] sm:$0xff]
        %v2678 = vld [vmem:[#allocation2 + $0x19] sm:$0xff]
        %v2679 = vld [vmem:[#allocation2 + $0x21] sm:$0xff]
        %v2680 = vld [vmem:[#allocation2 + $0x31] sm:$0xff]
        %v2681 = vld [vmem:[#allocation2 + $0x39] sm:$0xff]
        %v2682 = vld [vmem:[#allocation2 + $0x49] sm:$0xff]
        %v2683 = vld [vmem:[#allocation2 + $0x51] sm:$0xff]
        %v2684 = vld [vmem:[#allocation2 + $0x61] sm:$0xff]
        %v2685 = vld [vmem:[#allocation2 + $0x69] sm:$0xff]
        %v2686 = vld [vmem:[#allocation2 + $0x79] sm:$0xff]
        %v2687 = vld [vmem:[#allocation2 + $0x81] sm:$0xff]
        %v2688 = vld [vmem:[#allocation2 + $0x91] sm:$0xff]
        %v2689 = vld [vmem:[#allocation2 + $0x99] sm:$0xff]
        %v2690 = vld [vmem:[#allocation2 + $0xa9] sm:$0xff]
        %v2691 = vld [vmem:[#allocation2 + $0xb1] sm:$0xff]
        %v2692 = vld [vmem:[#allocation2 + $0xc1] sm:$0xff]
        %v2693 = vld [vmem:[#allocation2 + $0xc9] sm:$0xff]
        %v2694 = vld [vmem:[#allocation2 + $0xd9] sm:$0xff]
        %v2695 = vld [vmem:[#allocation2 + $0xe1] sm:$0xff]
        %v2696 = vld [vmem:[#allocation2 + $0xf1] sm:$0xff]
        %v2697 = vld [vmem:[#allocation2 + $0xf9] sm:$0xff]
        %v2698 = vld [vmem:[#allocation2 + $0x109] sm:$0xff]
        %v2699 = vld [vmem:[#allocation2 + $0x111] sm:$0xff]
        %v2700 = vld [vmem:[#allocation2 + $0x121] sm:$0xff]
        %v2701 = vld [vmem:[#allocation2 + $0x129] sm:$0xff]
        %v2702 = vld [vmem:[#allocation2 + $0x139] sm:$0xff]
        %v2703 = vld [vmem:[#allocation2 + $0x141] sm:$0xff]
        %v2704 = vld [vmem:[#allocation2 + $0x151] sm:$0xff]
        %v2705 = vld [vmem:[#allocation2 + $0x159] sm:$0xff]
        %v2706 = vld [vmem:[#allocation2 + $0x169] sm:$0xff]
        %v2707 = vld [vmem:[#allocation2 + $0x171] sm:$0xff]
        %v2708 = vpack.c.bf16 %v2677, %v2676
        %v2709 = vpack.c.bf16 %v2679, %v2678
        %v2710 = vpack.c.bf16 %v2681, %v2680
        %v2711 = vpack.c.bf16 %v2683, %v2682
        %v2712 = vpack.c.bf16 %v2685, %v2684
        %v2713 = vpack.c.bf16 %v2687, %v2686
        %v2714 = vpack.c.bf16 %v2689, %v2688
        %v2715 = vpack.c.bf16 %v2691, %v2690
        %v2716 = vpack.c.bf16 %v2693, %v2692
        %v2717 = vpack.c.bf16 %v2695, %v2694
        %v2718 = vpack.c.bf16 %v2697, %v2696
        %v2719 = vpack.c.bf16 %v2699, %v2698
        %v2720 = vpack.c.bf16 %v2701, %v2700
        %v2721 = vpack.c.bf16 %v2703, %v2702
        %v2722 = vpack.c.bf16 %v2705, %v2704
        %v2723 = vpack.c.bf16 %v2707, %v2706
        %v2724 = vld [vmem:[#allocation2 + $0x2] sm:$0xff]
        %v2725 = vld [vmem:[#allocation2 + $0xa] sm:$0xff]
        %v2726 = vld [vmem:[#allocation2 + $0x1a] sm:$0xff]
        %v2727 = vld [vmem:[#allocation2 + $0x22] sm:$0xff]
        %v2728 = vld [vmem:[#allocation2 + $0x32] sm:$0xff]
        %v2729 = vld [vmem:[#allocation2 + $0x3a] sm:$0xff]
        %v2730 = vld [vmem:[#allocation2 + $0x4a] sm:$0xff]
        %v2731 = vld [vmem:[#allocation2 + $0x52] sm:$0xff]
        %v2732 = vld [vmem:[#allocation2 + $0x62] sm:$0xff]
        %v2733 = vld [vmem:[#allocation2 + $0x6a] sm:$0xff]
        %v2734 = vld [vmem:[#allocation2 + $0x7a] sm:$0xff]
        %v2735 = vld [vmem:[#allocation2 + $0x82] sm:$0xff]
        %v2736 = vld [vmem:[#allocation2 + $0x92] sm:$0xff]
        %v2737 = vld [vmem:[#allocation2 + $0x9a] sm:$0xff]
        %v2738 = vld [vmem:[#allocation2 + $0xaa] sm:$0xff]
        %v2739 = vld [vmem:[#allocation2 + $0xb2] sm:$0xff]
        %v2740 = vld [vmem:[#allocation2 + $0xc2] sm:$0xff]
        %v2741 = vld [vmem:[#allocation2 + $0xca] sm:$0xff]
        %v2742 = vld [vmem:[#allocation2 + $0xda] sm:$0xff]
        %v2743 = vld [vmem:[#allocation2 + $0xe2] sm:$0xff]
        %v2744 = vld [vmem:[#allocation2 + $0xf2] sm:$0xff]
        %v2745 = vld [vmem:[#allocation2 + $0xfa] sm:$0xff]
        %v2746 = vld [vmem:[#allocation2 + $0x10a] sm:$0xff]
        %v2747 = vld [vmem:[#allocation2 + $0x112] sm:$0xff]
        %v2748 = vld [vmem:[#allocation2 + $0x122] sm:$0xff]
        %v2749 = vld [vmem:[#allocation2 + $0x12a] sm:$0xff]
        %v2750 = vld [vmem:[#allocation2 + $0x13a] sm:$0xff]
        %v2751 = vld [vmem:[#allocation2 + $0x142] sm:$0xff]
        %v2752 = vld [vmem:[#allocation2 + $0x152] sm:$0xff]
        %v2753 = vld [vmem:[#allocation2 + $0x15a] sm:$0xff]
        %v2754 = vld [vmem:[#allocation2 + $0x16a] sm:$0xff]
        %v2755 = vld [vmem:[#allocation2 + $0x172] sm:$0xff]
        %v2756 = vpack.c.bf16 %v2725, %v2724
        %v2757 = vpack.c.bf16 %v2727, %v2726
        %v2758 = vpack.c.bf16 %v2729, %v2728
        %v2759 = vpack.c.bf16 %v2731, %v2730
        %v2760 = vpack.c.bf16 %v2733, %v2732
        %v2761 = vpack.c.bf16 %v2735, %v2734
        %v2762 = vpack.c.bf16 %v2737, %v2736
        %v2763 = vpack.c.bf16 %v2739, %v2738
        %v2764 = vpack.c.bf16 %v2741, %v2740
        %v2765 = vpack.c.bf16 %v2743, %v2742
        %v2766 = vpack.c.bf16 %v2745, %v2744
        %v2767 = vpack.c.bf16 %v2747, %v2746
        %v2768 = vpack.c.bf16 %v2749, %v2748
        %v2769 = vpack.c.bf16 %v2751, %v2750
        %v2770 = vpack.c.bf16 %v2753, %v2752
        %v2771 = vpack.c.bf16 %v2755, %v2754
        %v2772 = vld [vmem:[%s2595] sm:$0xff]
        %v2773 = vld [vmem:[%s2595 + $0x8] sm:$0xff]
        %v2774 = vld [vmem:[%s2595 + $0x18] sm:$0xff]
        %v2775 = vld [vmem:[%s2595 + $0x20] sm:$0xff]
        %v2776 = vld [vmem:[%s2595 + $0x30] sm:$0xff]
        %v2777 = vld [vmem:[%s2595 + $0x38] sm:$0xff]
        %v2778 = vld [vmem:[%s2595 + $0x48] sm:$0xff]
        %v2779 = vld [vmem:[%s2595 + $0x50] sm:$0xff]
        %v2780 = vld [vmem:[%s2595 + $0x60] sm:$0xff]
        %v2781 = vld [vmem:[%s2595 + $0x68] sm:$0xff]
        %v2782 = vld [vmem:[%s2595 + $0x78] sm:$0xff]
        %v2783 = vld [vmem:[%s2595 + $0x80] sm:$0xff]
        %v2784 = vld [vmem:[%s2595 + $0x90] sm:$0xff]
        %v2785 = vld [vmem:[%s2595 + $0x98] sm:$0xff]
        %v2786 = vld [vmem:[%s2595 + $0xa8] sm:$0xff]
        %v2787 = vld [vmem:[%s2595 + $0xb0] sm:$0xff]
        %v2788 = vld [vmem:[%s2595 + $0xc0] sm:$0xff]
        %v2789 = vld [vmem:[%s2595 + $0xc8] sm:$0xff]
        %v2790 = vld [vmem:[%s2595 + $0xd8] sm:$0xff]
        %v2791 = vld [vmem:[%s2595 + $0xe0] sm:$0xff]
        %v2792 = vld [vmem:[%s2595 + $0xf0] sm:$0xff]
        %v2793 = vld [vmem:[%s2595 + $0xf8] sm:$0xff]
        %v2794 = vld [vmem:[%s2595 + $0x108] sm:$0xff]
        %v2795 = vld [vmem:[%s2595 + $0x110] sm:$0xff]
        %v2796 = vld [vmem:[%s2595 + $0x120] sm:$0xff]
        %v2797 = vld [vmem:[%s2595 + $0x128] sm:$0xff]
        %v2798 = vld [vmem:[%s2595 + $0x138] sm:$0xff]
        %v2799 = vld [vmem:[%s2595 + $0x140] sm:$0xff]
        %v2800 = vld [vmem:[%s2595 + $0x150] sm:$0xff]
        %v2801 = vld [vmem:[%s2595 + $0x158] sm:$0xff]
        %v2802 = vld [vmem:[%s2595 + $0x168] sm:$0xff]
        %v2803 = vld [vmem:[%s2595 + $0x170] sm:$0xff]
        %v2804 = vpack.c.bf16 %v2773, %v2772
        %v2805 = vpack.c.bf16 %v2775, %v2774
        %v2806 = vpack.c.bf16 %v2777, %v2776
        %v2807 = vpack.c.bf16 %v2779, %v2778
        %v2808 = vpack.c.bf16 %v2781, %v2780
        %v2809 = vpack.c.bf16 %v2783, %v2782
        %v2810 = vpack.c.bf16 %v2785, %v2784
        %v2811 = vpack.c.bf16 %v2787, %v2786
        %v2812 = vpack.c.bf16 %v2789, %v2788
        %v2813 = vpack.c.bf16 %v2791, %v2790
        %v2814 = vpack.c.bf16 %v2793, %v2792
        %v2815 = vpack.c.bf16 %v2795, %v2794
        %v2816 = vpack.c.bf16 %v2797, %v2796
        %v2817 = vpack.c.bf16 %v2799, %v2798
        %v2818 = vpack.c.bf16 %v2801, %v2800
        %v2819 = vpack.c.bf16 %v2803, %v2802
        %v2820 = vld [vmem:[%s2595 + $0x1] sm:$0xff]
        %v2821 = vld [vmem:[%s2595 + $0x9] sm:$0xff]
        %v2822 = vld [vmem:[%s2595 + $0x19] sm:$0xff]
        %v2823 = vld [vmem:[%s2595 + $0x21] sm:$0xff]
        %v2824 = vld [vmem:[%s2595 + $0x31] sm:$0xff]
        %v2825 = vld [vmem:[%s2595 + $0x39] sm:$0xff]
        %v2826 = vld [vmem:[%s2595 + $0x49] sm:$0xff]
        %v2827 = vld [vmem:[%s2595 + $0x51] sm:$0xff]
        %v2828 = vld [vmem:[%s2595 + $0x61] sm:$0xff]
        %v2829 = vld [vmem:[%s2595 + $0x69] sm:$0xff]
        %v2830 = vld [vmem:[%s2595 + $0x79] sm:$0xff]
        %v2831 = vld [vmem:[%s2595 + $0x81] sm:$0xff]
        %v2832 = vld [vmem:[%s2595 + $0x91] sm:$0xff]
        %v2833 = vld [vmem:[%s2595 + $0x99] sm:$0xff]
        %v2834 = vld [vmem:[%s2595 + $0xa9] sm:$0xff]
        %v2835 = vld [vmem:[%s2595 + $0xb1] sm:$0xff]
        %v2836 = vld [vmem:[%s2595 + $0xc1] sm:$0xff]
        %v2837 = vld [vmem:[%s2595 + $0xc9] sm:$0xff]
        %v2838 = vld [vmem:[%s2595 + $0xd9] sm:$0xff]
        %v2839 = vld [vmem:[%s2595 + $0xe1] sm:$0xff]
        %v2840 = vld [vmem:[%s2595 + $0xf1] sm:$0xff]
        %v2841 = vld [vmem:[%s2595 + $0xf9] sm:$0xff]
        %v2842 = vld [vmem:[%s2595 + $0x109] sm:$0xff]
        %v2843 = vld [vmem:[%s2595 + $0x111] sm:$0xff]
        %v2844 = vld [vmem:[%s2595 + $0x121] sm:$0xff]
        %v2845 = vld [vmem:[%s2595 + $0x129] sm:$0xff]
        %v2846 = vld [vmem:[%s2595 + $0x139] sm:$0xff]
        %v2847 = vld [vmem:[%s2595 + $0x141] sm:$0xff]
        %v2848 = vld [vmem:[%s2595 + $0x151] sm:$0xff]
        %v2849 = vld [vmem:[%s2595 + $0x159] sm:$0xff]
        %v2850 = vld [vmem:[%s2595 + $0x169] sm:$0xff]
        %v2851 = vld [vmem:[%s2595 + $0x171] sm:$0xff]
        %v2852 = vpack.c.bf16 %v2821, %v2820
        %v2853 = vpack.c.bf16 %v2823, %v2822
        %v2854 = vpack.c.bf16 %v2825, %v2824
        %v2855 = vpack.c.bf16 %v2827, %v2826
        %v2856 = vpack.c.bf16 %v2829, %v2828
        %v2857 = vpack.c.bf16 %v2831, %v2830
        %v2858 = vpack.c.bf16 %v2833, %v2832
        %v2859 = vpack.c.bf16 %v2835, %v2834
        %v2860 = vpack.c.bf16 %v2837, %v2836
        %v2861 = vpack.c.bf16 %v2839, %v2838
        %v2862 = vpack.c.bf16 %v2841, %v2840
        %v2863 = vpack.c.bf16 %v2843, %v2842
        %v2864 = vpack.c.bf16 %v2845, %v2844
        %v2865 = vpack.c.bf16 %v2847, %v2846
        %v2866 = vpack.c.bf16 %v2849, %v2848
        %v2867 = vpack.c.bf16 %v2851, %v2850
        %v2868 = vld [vmem:[%s2595 + $0x2] sm:$0xff]
        %v2869 = vld [vmem:[%s2595 + $0xa] sm:$0xff]
        %v2870 = vld [vmem:[%s2595 + $0x1a] sm:$0xff]
        %v2871 = vld [vmem:[%s2595 + $0x22] sm:$0xff]
        %v2872 = vld [vmem:[%s2595 + $0x32] sm:$0xff]
        %v2873 = vld [vmem:[%s2595 + $0x3a] sm:$0xff]
        %v2874 = vld [vmem:[%s2595 + $0x4a] sm:$0xff]
        %v2875 = vld [vmem:[%s2595 + $0x52] sm:$0xff]
        %v2876 = vld [vmem:[%s2595 + $0x62] sm:$0xff]
        %v2877 = vld [vmem:[%s2595 + $0x6a] sm:$0xff]
        %v2878 = vld [vmem:[%s2595 + $0x7a] sm:$0xff]
        %v2879 = vld [vmem:[%s2595 + $0x82] sm:$0xff]
        %v2880 = vld [vmem:[%s2595 + $0x92] sm:$0xff]
        %v2881 = vld [vmem:[%s2595 + $0x9a] sm:$0xff]
        %v2882 = vld [vmem:[%s2595 + $0xaa] sm:$0xff]
        %v2883 = vld [vmem:[%s2595 + $0xb2] sm:$0xff]
        %v2884 = vld [vmem:[%s2595 + $0xc2] sm:$0xff]
        %v2885 = vld [vmem:[%s2595 + $0xca] sm:$0xff]
        %v2886 = vld [vmem:[%s2595 + $0xda] sm:$0xff]
        %v2887 = vld [vmem:[%s2595 + $0xe2] sm:$0xff]
        %v2888 = vld [vmem:[%s2595 + $0xf2] sm:$0xff]
        %v2889 = vld [vmem:[%s2595 + $0xfa] sm:$0xff]
        %v2890 = vld [vmem:[%s2595 + $0x10a] sm:$0xff]
        %v2891 = vld [vmem:[%s2595 + $0x112] sm:$0xff]
        %v2892 = vld [vmem:[%s2595 + $0x122] sm:$0xff]
        %v2893 = vld [vmem:[%s2595 + $0x12a] sm:$0xff]
        %v2894 = vld [vmem:[%s2595 + $0x13a] sm:$0xff]
        %v2895 = vld [vmem:[%s2595 + $0x142] sm:$0xff]
        %v2896 = vld [vmem:[%s2595 + $0x152] sm:$0xff]
        %v2897 = vld [vmem:[%s2595 + $0x15a] sm:$0xff]
        %v2898 = vld [vmem:[%s2595 + $0x16a] sm:$0xff]
        %v2899 = vld [vmem:[%s2595 + $0x172] sm:$0xff]
        %v2900 = vpack.c.bf16 %v2869, %v2868
        %v2901 = vpack.c.bf16 %v2871, %v2870
        %v2902 = vpack.c.bf16 %v2873, %v2872
        %v2903 = vpack.c.bf16 %v2875, %v2874
        %v2904 = vpack.c.bf16 %v2877, %v2876
        %v2905 = vpack.c.bf16 %v2879, %v2878
        %v2906 = vpack.c.bf16 %v2881, %v2880
        %v2907 = vpack.c.bf16 %v2883, %v2882
        %v2908 = vpack.c.bf16 %v2885, %v2884
        %v2909 = vpack.c.bf16 %v2887, %v2886
        %v2910 = vpack.c.bf16 %v2889, %v2888
        %v2911 = vpack.c.bf16 %v2891, %v2890
        %v2912 = vpack.c.bf16 %v2893, %v2892
        %v2913 = vpack.c.bf16 %v2895, %v2894
        %v2914 = vpack.c.bf16 %v2897, %v2896
        %v2915 = vpack.c.bf16 %v2899, %v2898
        %s2916 = scalar_lea.vmem [#allocation2], 48
        %v2917 = vld [vmem:[%s2916] sm:$0xff]
        %v2918 = vld [vmem:[%s2916 + $0x8] sm:$0xff]
        %v2919 = vld [vmem:[%s2916 + $0x18] sm:$0xff]
        %v2920 = vld [vmem:[%s2916 + $0x20] sm:$0xff]
        %v2921 = vld [vmem:[%s2916 + $0x30] sm:$0xff]
        %v2922 = vld [vmem:[%s2916 + $0x38] sm:$0xff]
        %v2923 = vld [vmem:[%s2916 + $0x48] sm:$0xff]
        %v2924 = vld [vmem:[%s2916 + $0x50] sm:$0xff]
        %v2925 = vld [vmem:[%s2916 + $0x60] sm:$0xff]
        %v2926 = vld [vmem:[%s2916 + $0x68] sm:$0xff]
        %v2927 = vld [vmem:[%s2916 + $0x78] sm:$0xff]
        %v2928 = vld [vmem:[%s2916 + $0x80] sm:$0xff]
        %v2929 = vld [vmem:[%s2916 + $0x90] sm:$0xff]
        %v2930 = vld [vmem:[%s2916 + $0x98] sm:$0xff]
        %v2931 = vld [vmem:[%s2916 + $0xa8] sm:$0xff]
        %v2932 = vld [vmem:[%s2916 + $0xb0] sm:$0xff]
        %v2933 = vld [vmem:[%s2916 + $0xc0] sm:$0xff]
        %v2934 = vld [vmem:[%s2916 + $0xc8] sm:$0xff]
        %v2935 = vld [vmem:[%s2916 + $0xd8] sm:$0xff]
        %v2936 = vld [vmem:[%s2916 + $0xe0] sm:$0xff]
        %v2937 = vld [vmem:[%s2916 + $0xf0] sm:$0xff]
        %v2938 = vld [vmem:[%s2916 + $0xf8] sm:$0xff]
        %v2939 = vld [vmem:[%s2916 + $0x108] sm:$0xff]
        %v2940 = vld [vmem:[%s2916 + $0x110] sm:$0xff]
        %v2941 = vld [vmem:[%s2916 + $0x120] sm:$0xff]
        %v2942 = vld [vmem:[%s2916 + $0x128] sm:$0xff]
        %v2943 = vld [vmem:[%s2916 + $0x138] sm:$0xff]
        %v2944 = vld [vmem:[%s2916 + $0x140] sm:$0xff]
        %v2945 = vld [vmem:[%s2916 + $0x150] sm:$0xff]
        %v2946 = vld [vmem:[%s2916 + $0x158] sm:$0xff]
        %v2947 = vld [vmem:[%s2916 + $0x168] sm:$0xff]
        %v2948 = vld [vmem:[%s2916 + $0x170] sm:$0xff]
        %v2949 = vpack.c.bf16 %v2918, %v2917
        %v2950 = vpack.c.bf16 %v2920, %v2919
        %v2951 = vpack.c.bf16 %v2922, %v2921
        %v2952 = vpack.c.bf16 %v2924, %v2923
        %v2953 = vpack.c.bf16 %v2926, %v2925
        %v2954 = vpack.c.bf16 %v2928, %v2927
        %v2955 = vpack.c.bf16 %v2930, %v2929
        %v2956 = vpack.c.bf16 %v2932, %v2931
        %v2957 = vpack.c.bf16 %v2934, %v2933
        %v2958 = vpack.c.bf16 %v2936, %v2935
        %v2959 = vpack.c.bf16 %v2938, %v2937
        %v2960 = vpack.c.bf16 %v2940, %v2939
        %v2961 = vpack.c.bf16 %v2942, %v2941
        %v2962 = vpack.c.bf16 %v2944, %v2943
        %v2963 = vpack.c.bf16 %v2946, %v2945
        %v2964 = vpack.c.bf16 %v2948, %v2947
        %v2965 = vld [vmem:[%s2916 + $0x1] sm:$0xff]
        %v2966 = vld [vmem:[%s2916 + $0x9] sm:$0xff]
        %v2967 = vld [vmem:[%s2916 + $0x19] sm:$0xff]
        %v2968 = vld [vmem:[%s2916 + $0x21] sm:$0xff]
        %v2969 = vld [vmem:[%s2916 + $0x31] sm:$0xff]
        %v2970 = vld [vmem:[%s2916 + $0x39] sm:$0xff]
        %v2971 = vld [vmem:[%s2916 + $0x49] sm:$0xff]
        %v2972 = vld [vmem:[%s2916 + $0x51] sm:$0xff]
        %v2973 = vld [vmem:[%s2916 + $0x61] sm:$0xff]
        %v2974 = vld [vmem:[%s2916 + $0x69] sm:$0xff]
        %v2975 = vld [vmem:[%s2916 + $0x79] sm:$0xff]
        %v2976 = vld [vmem:[%s2916 + $0x81] sm:$0xff]
        %v2977 = vld [vmem:[%s2916 + $0x91] sm:$0xff]
        %v2978 = vld [vmem:[%s2916 + $0x99] sm:$0xff]
        %v2979 = vld [vmem:[%s2916 + $0xa9] sm:$0xff]
        %v2980 = vld [vmem:[%s2916 + $0xb1] sm:$0xff]
        %v2981 = vld [vmem:[%s2916 + $0xc1] sm:$0xff]
        %v2982 = vld [vmem:[%s2916 + $0xc9] sm:$0xff]
        %v2983 = vld [vmem:[%s2916 + $0xd9] sm:$0xff]
        %v2984 = vld [vmem:[%s2916 + $0xe1] sm:$0xff]
        %v2985 = vld [vmem:[%s2916 + $0xf1] sm:$0xff]
        %v2986 = vld [vmem:[%s2916 + $0xf9] sm:$0xff]
        %v2987 = vld [vmem:[%s2916 + $0x109] sm:$0xff]
        %v2988 = vld [vmem:[%s2916 + $0x111] sm:$0xff]
        %v2989 = vld [vmem:[%s2916 + $0x121] sm:$0xff]
        %v2990 = vld [vmem:[%s2916 + $0x129] sm:$0xff]
        %v2991 = vld [vmem:[%s2916 + $0x139] sm:$0xff]
        %v2992 = vld [vmem:[%s2916 + $0x141] sm:$0xff]
        %v2993 = vld [vmem:[%s2916 + $0x151] sm:$0xff]
        %v2994 = vld [vmem:[%s2916 + $0x159] sm:$0xff]
        %v2995 = vld [vmem:[%s2916 + $0x169] sm:$0xff]
        %v2996 = vld [vmem:[%s2916 + $0x171] sm:$0xff]
        %v2997 = vpack.c.bf16 %v2966, %v2965
        %v2998 = vpack.c.bf16 %v2968, %v2967
        %v2999 = vpack.c.bf16 %v2970, %v2969
        %v3000 = vpack.c.bf16 %v2972, %v2971
        %v3001 = vpack.c.bf16 %v2974, %v2973
        %v3002 = vpack.c.bf16 %v2976, %v2975
        %v3003 = vpack.c.bf16 %v2978, %v2977
        %v3004 = vpack.c.bf16 %v2980, %v2979
        %v3005 = vpack.c.bf16 %v2982, %v2981
        %v3006 = vpack.c.bf16 %v2984, %v2983
        %v3007 = vpack.c.bf16 %v2986, %v2985
        %v3008 = vpack.c.bf16 %v2988, %v2987
        %v3009 = vpack.c.bf16 %v2990, %v2989
        %v3010 = vpack.c.bf16 %v2992, %v2991
        %v3011 = vpack.c.bf16 %v2994, %v2993
        %v3012 = vpack.c.bf16 %v2996, %v2995
        %v3013 = vld [vmem:[%s2916 + $0x2] sm:$0xff]
        %v3014 = vld [vmem:[%s2916 + $0xa] sm:$0xff]
        %v3015 = vld [vmem:[%s2916 + $0x1a] sm:$0xff]
        %v3016 = vld [vmem:[%s2916 + $0x22] sm:$0xff]
        %v3017 = vld [vmem:[%s2916 + $0x32] sm:$0xff]
        %v3018 = vld [vmem:[%s2916 + $0x3a] sm:$0xff]
        %v3019 = vld [vmem:[%s2916 + $0x4a] sm:$0xff]
        %v3020 = vld [vmem:[%s2916 + $0x52] sm:$0xff]
        %v3021 = vld [vmem:[%s2916 + $0x62] sm:$0xff]
        %v3022 = vld [vmem:[%s2916 + $0x6a] sm:$0xff]
        %v3023 = vld [vmem:[%s2916 + $0x7a] sm:$0xff]
        %v3024 = vld [vmem:[%s2916 + $0x82] sm:$0xff]
        %v3025 = vld [vmem:[%s2916 + $0x92] sm:$0xff]
        %v3026 = vld [vmem:[%s2916 + $0x9a] sm:$0xff]
        %v3027 = vld [vmem:[%s2916 + $0xaa] sm:$0xff]
        %v3028 = vld [vmem:[%s2916 + $0xb2] sm:$0xff]
        %v3029 = vld [vmem:[%s2916 + $0xc2] sm:$0xff]
        %v3030 = vld [vmem:[%s2916 + $0xca] sm:$0xff]
        %v3031 = vld [vmem:[%s2916 + $0xda] sm:$0xff]
        %v3032 = vld [vmem:[%s2916 + $0xe2] sm:$0xff]
        %v3033 = vld [vmem:[%s2916 + $0xf2] sm:$0xff]
        %v3034 = vld [vmem:[%s2916 + $0xfa] sm:$0xff]
        %v3035 = vld [vmem:[%s2916 + $0x10a] sm:$0xff]
        %v3036 = vld [vmem:[%s2916 + $0x112] sm:$0xff]
        %v3037 = vld [vmem:[%s2916 + $0x122] sm:$0xff]
        %v3038 = vld [vmem:[%s2916 + $0x12a] sm:$0xff]
        %v3039 = vld [vmem:[%s2916 + $0x13a] sm:$0xff]
        %v3040 = vld [vmem:[%s2916 + $0x142] sm:$0xff]
        %v3041 = vld [vmem:[%s2916 + $0x152] sm:$0xff]
        %v3042 = vld [vmem:[%s2916 + $0x15a] sm:$0xff]
        %v3043 = vld [vmem:[%s2916 + $0x16a] sm:$0xff]
        %v3044 = vld [vmem:[%s2916 + $0x172] sm:$0xff]
        %v3045 = vpack.c.bf16 %v3014, %v3013
        %v3046 = vpack.c.bf16 %v3016, %v3015
        %v3047 = vpack.c.bf16 %v3018, %v3017
        %v3048 = vpack.c.bf16 %v3020, %v3019
        %v3049 = vpack.c.bf16 %v3022, %v3021
        %v3050 = vpack.c.bf16 %v3024, %v3023
        %v3051 = vpack.c.bf16 %v3026, %v3025
        %v3052 = vpack.c.bf16 %v3028, %v3027
        %v3053 = vpack.c.bf16 %v3030, %v3029
        %v3054 = vpack.c.bf16 %v3032, %v3031
        %v3055 = vpack.c.bf16 %v3034, %v3033
        %v3056 = vpack.c.bf16 %v3036, %v3035
        %v3057 = vpack.c.bf16 %v3038, %v3037
        %v3058 = vpack.c.bf16 %v3040, %v3039
        %v3059 = vpack.c.bf16 %v3042, %v3041
        %v3060 = vpack.c.bf16 %v3044, %v3043
        %v3061 = vld [vmem:[%s5] sm:$0xf]
        %v3062 = vld [vmem:[%s5 + $0x4] sm:$0xf]
        %v3063 = vld [vmem:[%s5 + $0x8] sm:$0xf]
        %v3064 = vld [vmem:[%s5 + $0xc] sm:$0xf]
        %v3065 = vld [vmem:[%s5 + $0x10] sm:$0xf]
        %v3066 = vld [vmem:[%s5 + $0x14] sm:$0xf]
        %v3067 = vld [vmem:[%s5 + $0x18] sm:$0xf]
        %v3068 = vld [vmem:[%s5 + $0x1c] sm:$0xf]
        %v3069 = vld [vmem:[%s5 + $0x20] sm:$0xf]
        %v3070 = vld [vmem:[%s5 + $0x24] sm:$0xf]
        %v3071 = vld [vmem:[%s5 + $0x28] sm:$0xf]
        %v3072 = vld [vmem:[%s5 + $0x2c] sm:$0xf]
        %v3073 = vld [vmem:[%s5 + $0x30] sm:$0xf]
        %v3074 = vld [vmem:[%s5 + $0x34] sm:$0xf]
        %v3075 = vld [vmem:[%s5 + $0x38] sm:$0xf]
        %v3076 = vld [vmem:[%s5 + $0x3c] sm:$0xf]
        %v3077 = vld [vmem:[%s5 + $0x40] sm:$0xf]
        %v3078 = vld [vmem:[%s5 + $0x44] sm:$0xf]
        %v3079 = vld [vmem:[%s5 + $0x48] sm:$0xf]
        %v3080 = vld [vmem:[%s5 + $0x4c] sm:$0xf]
        %v3081 = vld [vmem:[%s5 + $0x50] sm:$0xf]
        %v3082 = vld [vmem:[%s5 + $0x54] sm:$0xf]
        %v3083 = vld [vmem:[%s5 + $0x58] sm:$0xf]
        %v3084 = vld [vmem:[%s5 + $0x5c] sm:$0xf]
        %v3085 = vld [vmem:[%s5 + $0x60] sm:$0xf]
        %v3086 = vld [vmem:[%s5 + $0x64] sm:$0xf]
        %v3087 = vld [vmem:[%s5 + $0x68] sm:$0xf]
        %v3088 = vld [vmem:[%s5 + $0x6c] sm:$0xf]
        %v3089 = vld [vmem:[%s5 + $0x70] sm:$0xf]
        %v3090 = vld [vmem:[%s5 + $0x74] sm:$0xf]
        %v3091 = vld [vmem:[%s5 + $0x78] sm:$0xf]
        %v3092 = vld [vmem:[%s5 + $0x7c] sm:$0xf]
        %v3093 = vld [vmem:[%s5 + $0x80] sm:$0xf]
        %v3094 = vld [vmem:[%s5 + $0x84] sm:$0xf]
        %v3095 = vld [vmem:[%s5 + $0x88] sm:$0xf]
        %v3096 = vld [vmem:[%s5 + $0x8c] sm:$0xf]
        %v3097 = vld [vmem:[%s5 + $0x90] sm:$0xf]
        %v3098 = vld [vmem:[%s5 + $0x94] sm:$0xf]
        %v3099 = vld [vmem:[%s5 + $0x98] sm:$0xf]
        %v3100 = vld [vmem:[%s5 + $0x9c] sm:$0xf]
        %v3101 = vld [vmem:[%s5 + $0xa0] sm:$0xf]
        %v3102 = vld [vmem:[%s5 + $0xa4] sm:$0xf]
        %v3103 = vld [vmem:[%s5 + $0xa8] sm:$0xf]
        %v3104 = vld [vmem:[%s5 + $0xac] sm:$0xf]
        %v3105 = vld [vmem:[%s5 + $0xb0] sm:$0xf]
        %v3106 = vld [vmem:[%s5 + $0xb4] sm:$0xf]
        %v3107 = vld [vmem:[%s5 + $0xb8] sm:$0xf]
        %v3108 = vld [vmem:[%s5 + $0xbc] sm:$0xf]
        %v3109 = vld [vmem:[%s5 + $0xc0] sm:$0xf]
        %v3110 = vld [vmem:[%s5 + $0xc4] sm:$0xf]
        %v3111 = vld [vmem:[%s5 + $0xc8] sm:$0xf]
        %v3112 = vld [vmem:[%s5 + $0xcc] sm:$0xf]
        %v3113 = vld [vmem:[%s5 + $0xd0] sm:$0xf]
        %v3114 = vld [vmem:[%s5 + $0xd4] sm:$0xf]
        %v3115 = vld [vmem:[%s5 + $0xd8] sm:$0xf]
        %v3116 = vld [vmem:[%s5 + $0xdc] sm:$0xf]
        %v3117 = vld [vmem:[%s5 + $0xe0] sm:$0xf]
        %v3118 = vld [vmem:[%s5 + $0xe4] sm:$0xf]
        %v3119 = vld [vmem:[%s5 + $0xe8] sm:$0xf]
        %v3120 = vld [vmem:[%s5 + $0xec] sm:$0xf]
        %v3121 = vld [vmem:[%s5 + $0xf0] sm:$0xf]
        %v3122 = vld [vmem:[%s5 + $0xf4] sm:$0xf]
        %v3123 = vld [vmem:[%s5 + $0xf8] sm:$0xf]
        %v3124 = vld [vmem:[%s5 + $0xfc] sm:$0xf]
        %v3125 = vld [vmem:[%s5 + $0x100] sm:$0xf]
        %v3126 = vld [vmem:[%s5 + $0x104] sm:$0xf]
        %v3127 = vld [vmem:[%s5 + $0x108] sm:$0xf]
        %v3128 = vld [vmem:[%s5 + $0x10c] sm:$0xf]
        %v3129 = vld [vmem:[%s5 + $0x110] sm:$0xf]
        %v3130 = vld [vmem:[%s5 + $0x114] sm:$0xf]
        %v3131 = vld [vmem:[%s5 + $0x118] sm:$0xf]
        %v3132 = vld [vmem:[%s5 + $0x11c] sm:$0xf]
        %v3133 = vld [vmem:[%s5 + $0x120] sm:$0xf]
        %v3134 = vld [vmem:[%s5 + $0x124] sm:$0xf]
        %v3135 = vld [vmem:[%s5 + $0x128] sm:$0xf]
        %v3136 = vld [vmem:[%s5 + $0x12c] sm:$0xf]
        %v3137 = vld [vmem:[%s5 + $0x130] sm:$0xf]
        %v3138 = vld [vmem:[%s5 + $0x134] sm:$0xf]
        %v3139 = vld [vmem:[%s5 + $0x138] sm:$0xf]
        %v3140 = vld [vmem:[%s5 + $0x13c] sm:$0xf]
        %v3141 = vld [vmem:[%s5 + $0x140] sm:$0xf]
        %v3142 = vld [vmem:[%s5 + $0x144] sm:$0xf]
        %v3143 = vld [vmem:[%s5 + $0x148] sm:$0xf]
        %v3144 = vld [vmem:[%s5 + $0x14c] sm:$0xf]
        %v3145 = vld [vmem:[%s5 + $0x150] sm:$0xf]
        %v3146 = vld [vmem:[%s5 + $0x154] sm:$0xf]
        %v3147 = vld [vmem:[%s5 + $0x158] sm:$0xf]
        %v3148 = vld [vmem:[%s5 + $0x15c] sm:$0xf]
        %v3149 = vld [vmem:[%s5 + $0x160] sm:$0xf]
        %v3150 = vld [vmem:[%s5 + $0x164] sm:$0xf]
        %v3151 = vld [vmem:[%s5 + $0x168] sm:$0xf]
        %v3152 = vld [vmem:[%s5 + $0x16c] sm:$0xf]
        %v3153 = vld [vmem:[%s5 + $0x170] sm:$0xf]
        %v3154 = vld [vmem:[%s5 + $0x174] sm:$0xf]
        %v3155 = vld [vmem:[%s5 + $0x178] sm:$0xf]
        %v3156 = vld [vmem:[%s5 + $0x17c] sm:$0xf]
        %v3157 = vld [vmem:[%s5 + $0x180] sm:$0xf]
        %v3158 = vld [vmem:[%s5 + $0x184] sm:$0xf]
        %v3159 = vld [vmem:[%s5 + $0x188] sm:$0xf]
        %v3160 = vld [vmem:[%s5 + $0x18c] sm:$0xf]
        %v3161 = vld [vmem:[%s5 + $0x190] sm:$0xf]
        %v3162 = vld [vmem:[%s5 + $0x194] sm:$0xf]
        %v3163 = vld [vmem:[%s5 + $0x198] sm:$0xf]
        %v3164 = vld [vmem:[%s5 + $0x19c] sm:$0xf]
        %v3165 = vld [vmem:[%s5 + $0x1a0] sm:$0xf]
        %v3166 = vld [vmem:[%s5 + $0x1a4] sm:$0xf]
        %v3167 = vld [vmem:[%s5 + $0x1a8] sm:$0xf]
        %v3168 = vld [vmem:[%s5 + $0x1ac] sm:$0xf]
        %v3169 = vld [vmem:[%s5 + $0x1b0] sm:$0xf]
        %v3170 = vld [vmem:[%s5 + $0x1b4] sm:$0xf]
        %v3171 = vld [vmem:[%s5 + $0x1b8] sm:$0xf]
        %v3172 = vld [vmem:[%s5 + $0x1bc] sm:$0xf]
        %v3173 = vld [vmem:[%s5 + $0x1c0] sm:$0xf]
        %v3174 = vld [vmem:[%s5 + $0x1c4] sm:$0xf]
        %v3175 = vld [vmem:[%s5 + $0x1c8] sm:$0xf]
        %v3176 = vld [vmem:[%s5 + $0x1cc] sm:$0xf]
        %v3177 = vld [vmem:[%s5 + $0x1d0] sm:$0xf]
        %v3178 = vld [vmem:[%s5 + $0x1d4] sm:$0xf]
        %v3179 = vld [vmem:[%s5 + $0x1d8] sm:$0xf]
        %v3180 = vld [vmem:[%s5 + $0x1dc] sm:$0xf]
        %v3181 = vld [vmem:[%s5 + $0x1e0] sm:$0xf]
        %v3182 = vld [vmem:[%s5 + $0x1e4] sm:$0xf]
        %v3183 = vld [vmem:[%s5 + $0x1e8] sm:$0xf]
        %v3184 = vld [vmem:[%s5 + $0x1ec] sm:$0xf]
        %v3185 = vld [vmem:[%s5 + $0x1f0] sm:$0xf]
        %v3186 = vld [vmem:[%s5 + $0x1f4] sm:$0xf]
        %v3187 = vld [vmem:[%s5 + $0x1f8] sm:$0xf]
        %v3188 = vld [vmem:[%s5 + $0x1fc] sm:$0xf]
        %v3189 = vld [vmem:[%s5 + $0x200] sm:$0xf]
        %v3190 = vld [vmem:[%s5 + $0x204] sm:$0xf]
        %v3191 = vld [vmem:[%s5 + $0x208] sm:$0xf]
        %v3192 = vld [vmem:[%s5 + $0x20c] sm:$0xf]
        %v3193 = vld [vmem:[%s5 + $0x210] sm:$0xf]
        %v3194 = vld [vmem:[%s5 + $0x214] sm:$0xf]
        %v3195 = vld [vmem:[%s5 + $0x218] sm:$0xf]
        %v3196 = vld [vmem:[%s5 + $0x21c] sm:$0xf]
        %v3197 = vld [vmem:[%s5 + $0x220] sm:$0xf]
        %v3198 = vld [vmem:[%s5 + $0x224] sm:$0xf]
        %v3199 = vld [vmem:[%s5 + $0x228] sm:$0xf]
        %v3200 = vld [vmem:[%s5 + $0x22c] sm:$0xf]
        %v3201 = vld [vmem:[%s5 + $0x230] sm:$0xf]
        %v3202 = vld [vmem:[%s5 + $0x234] sm:$0xf]
        %v3203 = vld [vmem:[%s5 + $0x238] sm:$0xf]
        %v3204 = vld [vmem:[%s5 + $0x23c] sm:$0xf]
        %v3205 = vld [vmem:[%s6] sm:$0x1]
        %v3207 = vlaneseq
        %v3208 = vshrl.u32 %v3207, 7
        %v3209 = vsub.s32 0, %v3208
        %v3210 = vrot.slane %v3205, %v3209
        %v3356 = vunpack.c.l.b16 %v3061
        %v3357 = vunpack.c.l.b16 %v3062
        %v3358 = vunpack.c.l.b16 %v3063
        %v3359 = vunpack.c.l.b16 %v3064
        %v3360 = vunpack.c.l.b16 %v3065
        %v3361 = vunpack.c.l.b16 %v3066
        %v3362 = vunpack.c.l.b16 %v3067
        %v3363 = vunpack.c.l.b16 %v3068
        %v3364 = vunpack.c.l.b16 %v3069
        %v3365 = vunpack.c.l.b16 %v3070
        %v3366 = vunpack.c.l.b16 %v3071
        %v3367 = vunpack.c.l.b16 %v3072
        %v3368 = vunpack.c.l.b16 %v3073
        %v3369 = vunpack.c.l.b16 %v3074
        %v3370 = vunpack.c.l.b16 %v3075
        %v3371 = vunpack.c.l.b16 %v3076
        %v3372 = vunpack.c.l.b16 %v3077
        %v3373 = vunpack.c.l.b16 %v3078
        %v3374 = vunpack.c.l.b16 %v3079
        %v3375 = vunpack.c.l.b16 %v3080
        %v3376 = vunpack.c.l.b16 %v3081
        %v3377 = vunpack.c.l.b16 %v3082
        %v3378 = vunpack.c.l.b16 %v3083
        %v3379 = vunpack.c.l.b16 %v3084
        %v3380 = vunpack.c.l.b16 %v3085
        %v3381 = vunpack.c.l.b16 %v3086
        %v3382 = vunpack.c.l.b16 %v3087
        %v3383 = vunpack.c.l.b16 %v3088
        %v3384 = vunpack.c.l.b16 %v3089
        %v3385 = vunpack.c.l.b16 %v3090
        %v3386 = vunpack.c.l.b16 %v3091
        %v3387 = vunpack.c.l.b16 %v3092
        %v3388 = vunpack.c.l.b16 %v3093
        %v3389 = vunpack.c.l.b16 %v3094
        %v3390 = vunpack.c.l.b16 %v3095
        %v3391 = vunpack.c.l.b16 %v3096
        %v3392 = vunpack.c.l.b16 %v3097
        %v3393 = vunpack.c.l.b16 %v3098
        %v3394 = vunpack.c.l.b16 %v3099
        %v3395 = vunpack.c.l.b16 %v3100
        %v3396 = vunpack.c.l.b16 %v3101
        %v3397 = vunpack.c.l.b16 %v3102
        %v3398 = vunpack.c.l.b16 %v3103
        %v3399 = vunpack.c.l.b16 %v3104
        %v3400 = vunpack.c.l.b16 %v3105
        %v3401 = vunpack.c.l.b16 %v3106
        %v3402 = vunpack.c.l.b16 %v3107
        %v3403 = vunpack.c.l.b16 %v3108
        %v3404 = vunpack.c.l.b16 %v3109
        %v3405 = vunpack.c.l.b16 %v3110
        %v3406 = vunpack.c.l.b16 %v3111
        %v3407 = vunpack.c.l.b16 %v3112
        %v3408 = vunpack.c.l.b16 %v3113
        %v3409 = vunpack.c.l.b16 %v3114
        %v3410 = vunpack.c.l.b16 %v3115
        %v3411 = vunpack.c.l.b16 %v3116
        %v3412 = vunpack.c.l.b16 %v3117
        %v3413 = vunpack.c.l.b16 %v3118
        %v3414 = vunpack.c.l.b16 %v3119
        %v3415 = vunpack.c.l.b16 %v3120
        %v3416 = vunpack.c.l.b16 %v3121
        %v3417 = vunpack.c.l.b16 %v3122
        %v3418 = vunpack.c.l.b16 %v3123
        %v3419 = vunpack.c.l.b16 %v3124
        %v3420 = vunpack.c.l.b16 %v3125
        %v3421 = vunpack.c.l.b16 %v3126
        %v3422 = vunpack.c.l.b16 %v3127
        %v3423 = vunpack.c.l.b16 %v3128
        %v3424 = vunpack.c.l.b16 %v3129
        %v3425 = vunpack.c.l.b16 %v3130
        %v3426 = vunpack.c.l.b16 %v3131
        %v3427 = vunpack.c.l.b16 %v3132
        %v3428 = vunpack.c.l.b16 %v3133
        %v3429 = vunpack.c.l.b16 %v3134
        %v3430 = vunpack.c.l.b16 %v3135
        %v3431 = vunpack.c.l.b16 %v3136
        %v3432 = vunpack.c.l.b16 %v3137
        %v3433 = vunpack.c.l.b16 %v3138
        %v3434 = vunpack.c.l.b16 %v3139
        %v3435 = vunpack.c.l.b16 %v3140
        %v3436 = vunpack.c.l.b16 %v3141
        %v3437 = vunpack.c.l.b16 %v3142
        %v3438 = vunpack.c.l.b16 %v3143
        %v3439 = vunpack.c.l.b16 %v3144
        %v3440 = vunpack.c.l.b16 %v3145
        %v3441 = vunpack.c.l.b16 %v3146
        %v3442 = vunpack.c.l.b16 %v3147
        %v3443 = vunpack.c.l.b16 %v3148
        %v3444 = vunpack.c.l.b16 %v3149
        %v3445 = vunpack.c.l.b16 %v3150
        %v3446 = vunpack.c.l.b16 %v3151
        %v3447 = vunpack.c.l.b16 %v3152
        %v3448 = vunpack.c.l.b16 %v3153
        %v3449 = vunpack.c.l.b16 %v3154
        %v3450 = vunpack.c.l.b16 %v3155
        %v3451 = vunpack.c.l.b16 %v3156
        %v3452 = vunpack.c.l.b16 %v3157
        %v3453 = vunpack.c.l.b16 %v3158
        %v3454 = vunpack.c.l.b16 %v3159
        %v3455 = vunpack.c.l.b16 %v3160
        %v3456 = vunpack.c.l.b16 %v3161
        %v3457 = vunpack.c.l.b16 %v3162
        %v3458 = vunpack.c.l.b16 %v3163
        %v3459 = vunpack.c.l.b16 %v3164
        %v3460 = vunpack.c.l.b16 %v3165
        %v3461 = vunpack.c.l.b16 %v3166
        %v3462 = vunpack.c.l.b16 %v3167
        %v3463 = vunpack.c.l.b16 %v3168
        %v3464 = vunpack.c.l.b16 %v3169
        %v3465 = vunpack.c.l.b16 %v3170
        %v3466 = vunpack.c.l.b16 %v3171
        %v3467 = vunpack.c.l.b16 %v3172
        %v3468 = vunpack.c.l.b16 %v3173
        %v3469 = vunpack.c.l.b16 %v3174
        %v3470 = vunpack.c.l.b16 %v3175
        %v3471 = vunpack.c.l.b16 %v3176
        %v3472 = vunpack.c.l.b16 %v3177
        %v3473 = vunpack.c.l.b16 %v3178
        %v3474 = vunpack.c.l.b16 %v3179
        %v3475 = vunpack.c.l.b16 %v3180
        %v3476 = vunpack.c.l.b16 %v3181
        %v3477 = vunpack.c.l.b16 %v3182
        %v3478 = vunpack.c.l.b16 %v3183
        %v3479 = vunpack.c.l.b16 %v3184
        %v3480 = vunpack.c.l.b16 %v3185
        %v3481 = vunpack.c.l.b16 %v3186
        %v3482 = vunpack.c.l.b16 %v3187
        %v3483 = vunpack.c.l.b16 %v3188
        %v3484 = vunpack.c.l.b16 %v3189
        %v3485 = vunpack.c.l.b16 %v3190
        %v3486 = vunpack.c.l.b16 %v3191
        %v3487 = vunpack.c.l.b16 %v3192
        %v3488 = vunpack.c.l.b16 %v3193
        %v3489 = vunpack.c.l.b16 %v3194
        %v3490 = vunpack.c.l.b16 %v3195
        %v3491 = vunpack.c.l.b16 %v3196
        %v3492 = vunpack.c.l.b16 %v3197
        %v3493 = vunpack.c.l.b16 %v3198
        %v3494 = vunpack.c.l.b16 %v3199
        %v3495 = vunpack.c.l.b16 %v3200
        %v3496 = vunpack.c.l.b16 %v3201
        %v3497 = vunpack.c.l.b16 %v3202
        %v3498 = vunpack.c.l.b16 %v3203
        %v3499 = vunpack.c.l.b16 %v3204
        %v3500 = vpack.c.b16 %v3357, %v3356
        %v3501 = vpack.c.b16 %v3359, %v3358
        %v3502 = vpack.c.b16 %v3361, %v3360
        %v3503 = vpack.c.b16 %v3363, %v3362
        %v3504 = vpack.c.b16 %v3365, %v3364
        %v3505 = vpack.c.b16 %v3367, %v3366
        %v3506 = vpack.c.b16 %v3369, %v3368
        %v3507 = vpack.c.b16 %v3371, %v3370
        %v3508 = vpack.c.b16 %v3373, %v3372
        %v3509 = vpack.c.b16 %v3375, %v3374
        %v3510 = vpack.c.b16 %v3377, %v3376
        %v3511 = vpack.c.b16 %v3379, %v3378
        %v3512 = vpack.c.b16 %v3381, %v3380
        %v3513 = vpack.c.b16 %v3383, %v3382
        %v3514 = vpack.c.b16 %v3385, %v3384
        %v3515 = vpack.c.b16 %v3387, %v3386
        %v3516 = vpack.c.b16 %v3389, %v3388
        %v3517 = vpack.c.b16 %v3391, %v3390
        %v3518 = vpack.c.b16 %v3393, %v3392
        %v3519 = vpack.c.b16 %v3395, %v3394
        %v3520 = vpack.c.b16 %v3397, %v3396
        %v3521 = vpack.c.b16 %v3399, %v3398
        %v3522 = vpack.c.b16 %v3401, %v3400
        %v3523 = vpack.c.b16 %v3403, %v3402
        %v3524 = vpack.c.b16 %v3405, %v3404
        %v3525 = vpack.c.b16 %v3407, %v3406
        %v3526 = vpack.c.b16 %v3409, %v3408
        %v3527 = vpack.c.b16 %v3411, %v3410
        %v3528 = vpack.c.b16 %v3413, %v3412
        %v3529 = vpack.c.b16 %v3415, %v3414
        %v3530 = vpack.c.b16 %v3417, %v3416
        %v3531 = vpack.c.b16 %v3419, %v3418
        %v3532 = vpack.c.b16 %v3421, %v3420
        %v3533 = vpack.c.b16 %v3423, %v3422
        %v3534 = vpack.c.b16 %v3425, %v3424
        %v3535 = vpack.c.b16 %v3427, %v3426
        %v3536 = vpack.c.b16 %v3429, %v3428
        %v3537 = vpack.c.b16 %v3431, %v3430
        %v3538 = vpack.c.b16 %v3433, %v3432
        %v3539 = vpack.c.b16 %v3435, %v3434
        %v3540 = vpack.c.b16 %v3437, %v3436
        %v3541 = vpack.c.b16 %v3439, %v3438
        %v3542 = vpack.c.b16 %v3441, %v3440
        %v3543 = vpack.c.b16 %v3443, %v3442
        %v3544 = vpack.c.b16 %v3445, %v3444
        %v3545 = vpack.c.b16 %v3447, %v3446
        %v3546 = vpack.c.b16 %v3449, %v3448
        %v3547 = vpack.c.b16 %v3451, %v3450
        %v3548 = vpack.c.b16 %v3453, %v3452
        %v3549 = vpack.c.b16 %v3455, %v3454
        %v3550 = vpack.c.b16 %v3457, %v3456
        %v3551 = vpack.c.b16 %v3459, %v3458
        %v3552 = vpack.c.b16 %v3461, %v3460
        %v3553 = vpack.c.b16 %v3463, %v3462
        %v3554 = vpack.c.b16 %v3465, %v3464
        %v3555 = vpack.c.b16 %v3467, %v3466
        %v3556 = vpack.c.b16 %v3469, %v3468
        %v3557 = vpack.c.b16 %v3471, %v3470
        %v3558 = vpack.c.b16 %v3473, %v3472
        %v3559 = vpack.c.b16 %v3475, %v3474
        %v3560 = vpack.c.b16 %v3477, %v3476
        %v3561 = vpack.c.b16 %v3479, %v3478
        %v3562 = vpack.c.b16 %v3481, %v3480
        %v3563 = vpack.c.b16 %v3483, %v3482
        %v3564 = vpack.c.b16 %v3485, %v3484
        %v3565 = vpack.c.b16 %v3487, %v3486
        %v3566 = vpack.c.b16 %v3489, %v3488
        %v3567 = vpack.c.b16 %v3491, %v3490
        %v3568 = vpack.c.b16 %v3493, %v3492
        %v3569 = vpack.c.b16 %v3495, %v3494
        %v3570 = vpack.c.b16 %v3497, %v3496
        %v3571 = vpack.c.b16 %v3499, %v3498
        %3644 = vmatprep.subr.bf16.mxu0 0
        %3645 = vmatpush1.bf16.msra.mxu0 %v3507
        %3646 = vmatprep.subr.bf16.mxu0 0
        %3647 = vmatpush1.bf16.msra.mxu0 %v3506
        %3648 = vmatprep.subr.bf16.mxu0 0
        %3649 = vmatpush1.bf16.msra.mxu0 %v3505
        %3650 = vmatprep.subr.bf16.mxu0 0
        %3651 = vmatpush1.bf16.msra.mxu0 %v3504
        %3652 = vmatprep.subr.bf16.mxu0 0
        %3653 = vmatpush1.bf16.msra.mxu0 %v3503
        %3654 = vmatprep.subr.bf16.mxu0 0
        %3655 = vmatpush1.bf16.msra.mxu0 %v3502
        %3656 = vmatprep.subr.bf16.mxu0 0
        %3657 = vmatpush1.bf16.msra.mxu0 %v3501
        %3658 = vmatprep.subr.bf16.mxu0 0
        %3659 = vmatpush1.bf16.msra.mxu0 %v3500
        %3660 = vmatprep.subr.bf16.mxu0 0
        %3661 = vmatpush2.bf16.msra.mxu0 %v3515
        %3662 = vmatprep.subr.bf16.mxu0 0
        %3663 = vmatpush2.bf16.msra.mxu0 %v3514
        %3664 = vmatprep.subr.bf16.mxu0 0
        %3665 = vmatpush2.bf16.msra.mxu0 %v3513
        %3666 = vmatprep.subr.bf16.mxu0 0
        %3667 = vmatpush2.bf16.msra.mxu0 %v3512
        %3668 = vmatprep.subr.bf16.mxu0 0
        %3669 = vmatpush2.bf16.msra.mxu0 %v3511
        %3670 = vmatprep.subr.bf16.mxu0 0
        %3671 = vmatpush2.bf16.msra.mxu0 %v3510
        %3672 = vmatprep.subr.bf16.mxu0 0
        %3673 = vmatpush2.bf16.msra.mxu0 %v3509
        %3674 = vmatprep.subr.bf16.mxu0 0
        %3675 = vmatpush2.bf16.msra.mxu0 %v3508
        %3676 = vmatprep.mubr.bf16.mxu0 %v2708
        %3677 = vmatmul.mubr.bf16.gmra.mxu0 %v2660
        %v3678 = vpop.f32.mrf.mxu0
        %v3679 = vadd.f32 %v3210, %v3678
        %v3680 = vpop.f32.mrf.mxu0
        %v3681 = vpop.f32.mrf.mxu0
        %v3682 = vadd.f32 %v3210, %v3681
        %v3683 = vpop.f32.mrf.mxu0
        %3684 = vmatprep.mubr.bf16.mxu0 %v2709
        %3685 = vmatmul.mubr.bf16.gmra.mxu0 %v2661
        %v3686 = vpop.f32.mrf.mxu0
        %v3687 = vadd.f32 %v3210, %v3686
        %v3688 = vpop.f32.mrf.mxu0
        %v3689 = vpop.f32.mrf.mxu0
        %v3690 = vadd.f32 %v3210, %v3689
        %v3691 = vpop.f32.mrf.mxu0
        %3692 = vmatprep.mubr.bf16.mxu0 %v2710
        %3693 = vmatmul.mubr.bf16.gmra.mxu0 %v2662
        %v3694 = vpop.f32.mrf.mxu0
        %v3695 = vadd.f32 %v3210, %v3694
        %v3696 = vpop.f32.mrf.mxu0
        %v3697 = vpop.f32.mrf.mxu0
        %v3698 = vadd.f32 %v3210, %v3697
        %v3699 = vpop.f32.mrf.mxu0
        %3700 = vmatprep.mubr.bf16.mxu0 %v2711
        %3701 = vmatmul.mubr.bf16.gmra.mxu0 %v2663
        %v3702 = vpop.f32.mrf.mxu0
        %v3703 = vadd.f32 %v3210, %v3702
        %v3704 = vpop.f32.mrf.mxu0
        %v3705 = vpop.f32.mrf.mxu0
        %v3706 = vadd.f32 %v3210, %v3705
        %v3707 = vpop.f32.mrf.mxu0
        %3708 = vmatprep.mubr.bf16.mxu0 %v2712
        %3709 = vmatmul.mubr.bf16.gmra.mxu0 %v2664
        %v3710 = vpop.f32.mrf.mxu0
        %v3711 = vadd.f32 %v3210, %v3710
        %v3712 = vpop.f32.mrf.mxu0
        %v3713 = vpop.f32.mrf.mxu0
        %v3714 = vadd.f32 %v3210, %v3713
        %v3715 = vpop.f32.mrf.mxu0
        %3716 = vmatprep.mubr.bf16.mxu0 %v2713
        %3717 = vmatmul.mubr.bf16.gmra.mxu0 %v2665
        %v3718 = vpop.f32.mrf.mxu0
        %v3719 = vadd.f32 %v3210, %v3718
        %v3720 = vpop.f32.mrf.mxu0
        %v3721 = vpop.f32.mrf.mxu0
        %v3722 = vadd.f32 %v3210, %v3721
        %v3723 = vpop.f32.mrf.mxu0
        %3724 = vmatprep.mubr.bf16.mxu0 %v2714
        %3725 = vmatmul.mubr.bf16.gmra.mxu0 %v2666
        %v3726 = vpop.f32.mrf.mxu0
        %v3727 = vadd.f32 %v3210, %v3726
        %v3728 = vpop.f32.mrf.mxu0
        %v3729 = vpop.f32.mrf.mxu0
        %v3730 = vadd.f32 %v3210, %v3729
        %v3731 = vpop.f32.mrf.mxu0
        %3732 = vmatprep.mubr.bf16.mxu0 %v2715
        %3733 = vmatmul.mubr.bf16.gmra.mxu0 %v2667
        %v3734 = vpop.f32.mrf.mxu0
        %v3735 = vadd.f32 %v3210, %v3734
        %v3736 = vpop.f32.mrf.mxu0
        %v3737 = vpop.f32.mrf.mxu0
        %v3738 = vadd.f32 %v3210, %v3737
        %v3739 = vpop.f32.mrf.mxu0
        %3740 = vmatprep.mubr.bf16.mxu0 %v2716
        %3741 = vmatmul.mubr.bf16.gmra.mxu0 %v2668
        %v3742 = vpop.f32.mrf.mxu0
        %v3743 = vadd.f32 %v3210, %v3742
        %v3744 = vpop.f32.mrf.mxu0
        %v3745 = vpop.f32.mrf.mxu0
        %v3746 = vadd.f32 %v3210, %v3745
        %v3747 = vpop.f32.mrf.mxu0
        %3748 = vmatprep.mubr.bf16.mxu0 %v2717
        %3749 = vmatmul.mubr.bf16.gmra.mxu0 %v2669
        %v3750 = vpop.f32.mrf.mxu0
        %v3751 = vadd.f32 %v3210, %v3750
        %v3752 = vpop.f32.mrf.mxu0
        %v3753 = vpop.f32.mrf.mxu0
        %v3754 = vadd.f32 %v3210, %v3753
        %v3755 = vpop.f32.mrf.mxu0
        %3756 = vmatprep.mubr.bf16.mxu0 %v2718
        %3757 = vmatmul.mubr.bf16.gmra.mxu0 %v2670
        %v3758 = vpop.f32.mrf.mxu0
        %v3759 = vadd.f32 %v3210, %v3758
        %v3760 = vpop.f32.mrf.mxu0
        %v3761 = vpop.f32.mrf.mxu0
        %v3762 = vadd.f32 %v3210, %v3761
        %v3763 = vpop.f32.mrf.mxu0
        %3764 = vmatprep.mubr.bf16.mxu0 %v2719
        %3765 = vmatmul.mubr.bf16.gmra.mxu0 %v2671
        %v3766 = vpop.f32.mrf.mxu0
        %v3767 = vadd.f32 %v3210, %v3766
        %v3768 = vpop.f32.mrf.mxu0
        %v3769 = vpop.f32.mrf.mxu0
        %v3770 = vadd.f32 %v3210, %v3769
        %v3771 = vpop.f32.mrf.mxu0
        %3772 = vmatprep.mubr.bf16.mxu0 %v2720
        %3773 = vmatmul.mubr.bf16.gmra.mxu0 %v2672
        %v3774 = vpop.f32.mrf.mxu0
        %v3775 = vadd.f32 %v3210, %v3774
        %v3776 = vpop.f32.mrf.mxu0
        %v3777 = vpop.f32.mrf.mxu0
        %v3778 = vadd.f32 %v3210, %v3777
        %v3779 = vpop.f32.mrf.mxu0
        %3780 = vmatprep.mubr.bf16.mxu0 %v2721
        %3781 = vmatmul.mubr.bf16.gmra.mxu0 %v2673
        %v3782 = vpop.f32.mrf.mxu0
        %v3783 = vadd.f32 %v3210, %v3782
        %v3784 = vpop.f32.mrf.mxu0
        %v3785 = vpop.f32.mrf.mxu0
        %v3786 = vadd.f32 %v3210, %v3785
        %v3787 = vpop.f32.mrf.mxu0
        %3788 = vmatprep.mubr.bf16.mxu0 %v2722
        %3789 = vmatmul.mubr.bf16.gmra.mxu0 %v2674
        %v3790 = vpop.f32.mrf.mxu0
        %v3791 = vadd.f32 %v3210, %v3790
        %v3792 = vpop.f32.mrf.mxu0
        %v3793 = vpop.f32.mrf.mxu0
        %v3794 = vadd.f32 %v3210, %v3793
        %v3795 = vpop.f32.mrf.mxu0
        %3796 = vmatprep.mubr.bf16.mxu0 %v2723
        %3797 = vmatmul.mubr.bf16.gmra.mxu0 %v2675
        %v3798 = vpop.f32.mrf.mxu0
        %v3799 = vadd.f32 %v3210, %v3798
        %v3800 = vpop.f32.mrf.mxu0
        %v3801 = vpop.f32.mrf.mxu0
        %v3802 = vadd.f32 %v3210, %v3801
        %v3803 = vpop.f32.mrf.mxu0
        %3804 = vdwg.mxu0
        %3805 = vmatprep.subr.bf16.mxu0 0
        %3806 = vmatpush1.bf16.msra.mxu0 %v3523
        %3807 = vmatprep.subr.bf16.mxu0 0
        %3808 = vmatpush1.bf16.msra.mxu0 %v3522
        %3809 = vmatprep.subr.bf16.mxu0 0
        %3810 = vmatpush1.bf16.msra.mxu0 %v3521
        %3811 = vmatprep.subr.bf16.mxu0 0
        %3812 = vmatpush1.bf16.msra.mxu0 %v3520
        %3813 = vmatprep.subr.bf16.mxu0 0
        %3814 = vmatpush1.bf16.msra.mxu0 %v3519
        %3815 = vmatprep.subr.bf16.mxu0 0
        %3816 = vmatpush1.bf16.msra.mxu0 %v3518
        %3817 = vmatprep.subr.bf16.mxu0 0
        %3818 = vmatpush1.bf16.msra.mxu0 %v3517
        %3819 = vmatprep.subr.bf16.mxu0 0
        %3820 = vmatpush1.bf16.msra.mxu0 %v3516
        %3821 = vmatprep.subr.bf16.mxu0 0
        %3822 = vmatpush2.bf16.msra.mxu0 %v3531
        %3823 = vmatprep.subr.bf16.mxu0 0
        %3824 = vmatpush2.bf16.msra.mxu0 %v3530
        %3825 = vmatprep.subr.bf16.mxu0 0
        %3826 = vmatpush2.bf16.msra.mxu0 %v3529
        %3827 = vmatprep.subr.bf16.mxu0 0
        %3828 = vmatpush2.bf16.msra.mxu0 %v3528
        %3829 = vmatprep.subr.bf16.mxu0 0
        %3830 = vmatpush2.bf16.msra.mxu0 %v3527
        %3831 = vmatprep.subr.bf16.mxu0 0
        %3832 = vmatpush2.bf16.msra.mxu0 %v3526
        %3833 = vmatprep.subr.bf16.mxu0 0
        %3834 = vmatpush2.bf16.msra.mxu0 %v3525
        %3835 = vmatprep.subr.bf16.mxu0 0
        %3836 = vmatpush2.bf16.msra.mxu0 %v3524
        %3837 = vmatprep.mubr.bf16.mxu0 %v2804
        %3838 = vmatmul.mubr.bf16.gmra.mxu0 %v2756
        %v3839 = vpop.f32.mrf.mxu0
        %v3840 = vadd.f32 %v3679, %v3839
        %v3841 = vpop.f32.mrf.mxu0
        %v3842 = vpop.f32.mrf.mxu0
        %v3843 = vadd.f32 %v3682, %v3842
        %v3844 = vpop.f32.mrf.mxu0
        %3845 = vmatprep.mubr.bf16.mxu0 %v2805
        %3846 = vmatmul.mubr.bf16.gmra.mxu0 %v2757
        %v3847 = vpop.f32.mrf.mxu0
        %v3848 = vadd.f32 %v3687, %v3847
        %v3849 = vpop.f32.mrf.mxu0
        %v3850 = vpop.f32.mrf.mxu0
        %v3851 = vadd.f32 %v3690, %v3850
        %v3852 = vpop.f32.mrf.mxu0
        %3853 = vmatprep.mubr.bf16.mxu0 %v2806
        %3854 = vmatmul.mubr.bf16.gmra.mxu0 %v2758
        %v3855 = vpop.f32.mrf.mxu0
        %v3856 = vadd.f32 %v3695, %v3855
        %v3857 = vpop.f32.mrf.mxu0
        %v3858 = vpop.f32.mrf.mxu0
        %v3859 = vadd.f32 %v3698, %v3858
        %v3860 = vpop.f32.mrf.mxu0
        %3861 = vmatprep.mubr.bf16.mxu0 %v2807
        %3862 = vmatmul.mubr.bf16.gmra.mxu0 %v2759
        %v3863 = vpop.f32.mrf.mxu0
        %v3864 = vadd.f32 %v3703, %v3863
        %v3865 = vpop.f32.mrf.mxu0
        %v3866 = vpop.f32.mrf.mxu0
        %v3867 = vadd.f32 %v3706, %v3866
        %v3868 = vpop.f32.mrf.mxu0
        %3869 = vmatprep.mubr.bf16.mxu0 %v2808
        %3870 = vmatmul.mubr.bf16.gmra.mxu0 %v2760
        %v3871 = vpop.f32.mrf.mxu0
        %v3872 = vadd.f32 %v3711, %v3871
        %v3873 = vpop.f32.mrf.mxu0
        %v3874 = vpop.f32.mrf.mxu0
        %v3875 = vadd.f32 %v3714, %v3874
        %v3876 = vpop.f32.mrf.mxu0
        %3877 = vmatprep.mubr.bf16.mxu0 %v2809
        %3878 = vmatmul.mubr.bf16.gmra.mxu0 %v2761
        %v3879 = vpop.f32.mrf.mxu0
        %v3880 = vadd.f32 %v3719, %v3879
        %v3881 = vpop.f32.mrf.mxu0
        %v3882 = vpop.f32.mrf.mxu0
        %v3883 = vadd.f32 %v3722, %v3882
        %v3884 = vpop.f32.mrf.mxu0
        %3885 = vmatprep.mubr.bf16.mxu0 %v2810
        %3886 = vmatmul.mubr.bf16.gmra.mxu0 %v2762
        %v3887 = vpop.f32.mrf.mxu0
        %v3888 = vadd.f32 %v3727, %v3887
        %v3889 = vpop.f32.mrf.mxu0
        %v3890 = vpop.f32.mrf.mxu0
        %v3891 = vadd.f32 %v3730, %v3890
        %v3892 = vpop.f32.mrf.mxu0
        %3893 = vmatprep.mubr.bf16.mxu0 %v2811
        %3894 = vmatmul.mubr.bf16.gmra.mxu0 %v2763
        %v3895 = vpop.f32.mrf.mxu0
        %v3896 = vadd.f32 %v3735, %v3895
        %v3897 = vpop.f32.mrf.mxu0
        %v3898 = vpop.f32.mrf.mxu0
        %v3899 = vadd.f32 %v3738, %v3898
        %v3900 = vpop.f32.mrf.mxu0
        %3901 = vmatprep.mubr.bf16.mxu0 %v2812
        %3902 = vmatmul.mubr.bf16.gmra.mxu0 %v2764
        %v3903 = vpop.f32.mrf.mxu0
        %v3904 = vadd.f32 %v3743, %v3903
        %v3905 = vpop.f32.mrf.mxu0
        %v3906 = vpop.f32.mrf.mxu0
        %v3907 = vadd.f32 %v3746, %v3906
        %v3908 = vpop.f32.mrf.mxu0
        %3909 = vmatprep.mubr.bf16.mxu0 %v2813
        %3910 = vmatmul.mubr.bf16.gmra.mxu0 %v2765
        %v3911 = vpop.f32.mrf.mxu0
        %v3912 = vadd.f32 %v3751, %v3911
        %v3913 = vpop.f32.mrf.mxu0
        %v3914 = vpop.f32.mrf.mxu0
        %v3915 = vadd.f32 %v3754, %v3914
        %v3916 = vpop.f32.mrf.mxu0
        %3917 = vmatprep.mubr.bf16.mxu0 %v2814
        %3918 = vmatmul.mubr.bf16.gmra.mxu0 %v2766
        %v3919 = vpop.f32.mrf.mxu0
        %v3920 = vadd.f32 %v3759, %v3919
        %v3921 = vpop.f32.mrf.mxu0
        %v3922 = vpop.f32.mrf.mxu0
        %v3923 = vadd.f32 %v3762, %v3922
        %v3924 = vpop.f32.mrf.mxu0
        %3925 = vmatprep.mubr.bf16.mxu0 %v2815
        %3926 = vmatmul.mubr.bf16.gmra.mxu0 %v2767
        %v3927 = vpop.f32.mrf.mxu0
        %v3928 = vadd.f32 %v3767, %v3927
        %v3929 = vpop.f32.mrf.mxu0
        %v3930 = vpop.f32.mrf.mxu0
        %v3931 = vadd.f32 %v3770, %v3930
        %v3932 = vpop.f32.mrf.mxu0
        %3933 = vmatprep.mubr.bf16.mxu0 %v2816
        %3934 = vmatmul.mubr.bf16.gmra.mxu0 %v2768
        %v3935 = vpop.f32.mrf.mxu0
        %v3936 = vadd.f32 %v3775, %v3935
        %v3937 = vpop.f32.mrf.mxu0
        %v3938 = vpop.f32.mrf.mxu0
        %v3939 = vadd.f32 %v3778, %v3938
        %v3940 = vpop.f32.mrf.mxu0
        %3941 = vmatprep.mubr.bf16.mxu0 %v2817
        %3942 = vmatmul.mubr.bf16.gmra.mxu0 %v2769
        %v3943 = vpop.f32.mrf.mxu0
        %v3944 = vadd.f32 %v3783, %v3943
        %v3945 = vpop.f32.mrf.mxu0
        %v3946 = vpop.f32.mrf.mxu0
        %v3947 = vadd.f32 %v3786, %v3946
        %v3948 = vpop.f32.mrf.mxu0
        %3949 = vmatprep.mubr.bf16.mxu0 %v2818
        %3950 = vmatmul.mubr.bf16.gmra.mxu0 %v2770
        %v3951 = vpop.f32.mrf.mxu0
        %v3952 = vadd.f32 %v3791, %v3951
        %v3953 = vpop.f32.mrf.mxu0
        %v3954 = vpop.f32.mrf.mxu0
        %v3955 = vadd.f32 %v3794, %v3954
        %v3956 = vpop.f32.mrf.mxu0
        %3957 = vmatprep.mubr.bf16.mxu0 %v2819
        %3958 = vmatmul.mubr.bf16.gmra.mxu0 %v2771
        %v3959 = vpop.f32.mrf.mxu0
        %v3960 = vadd.f32 %v3799, %v3959
        %v3961 = vpop.f32.mrf.mxu0
        %v3962 = vpop.f32.mrf.mxu0
        %v3963 = vadd.f32 %v3802, %v3962
        %v3964 = vpop.f32.mrf.mxu0
        %3965 = vdwg.mxu0
        %3966 = vmatprep.subr.bf16.mxu0 0
        %3967 = vmatpush1.bf16.msra.mxu0 %v3539
        %3968 = vmatprep.subr.bf16.mxu0 0
        %3969 = vmatpush1.bf16.msra.mxu0 %v3538
        %3970 = vmatprep.subr.bf16.mxu0 0
        %3971 = vmatpush1.bf16.msra.mxu0 %v3537
        %3972 = vmatprep.subr.bf16.mxu0 0
        %3973 = vmatpush1.bf16.msra.mxu0 %v3536
        %3974 = vmatprep.subr.bf16.mxu0 0
        %3975 = vmatpush1.bf16.msra.mxu0 %v3535
        %3976 = vmatprep.subr.bf16.mxu0 0
        %3977 = vmatpush1.bf16.msra.mxu0 %v3534
        %3978 = vmatprep.subr.bf16.mxu0 0
        %3979 = vmatpush1.bf16.msra.mxu0 %v3533
        %3980 = vmatprep.subr.bf16.mxu0 0
        %3981 = vmatpush1.bf16.msra.mxu0 %v3532
        %3982 = vmatprep.subr.bf16.mxu0 0
        %3983 = vmatpush2.bf16.msra.mxu0 %v3547
        %3984 = vmatprep.subr.bf16.mxu0 0
        %3985 = vmatpush2.bf16.msra.mxu0 %v3546
        %3986 = vmatprep.subr.bf16.mxu0 0
        %3987 = vmatpush2.bf16.msra.mxu0 %v3545
        %3988 = vmatprep.subr.bf16.mxu0 0
        %3989 = vmatpush2.bf16.msra.mxu0 %v3544
        %3990 = vmatprep.subr.bf16.mxu0 0
        %3991 = vmatpush2.bf16.msra.mxu0 %v3543
        %3992 = vmatprep.subr.bf16.mxu0 0
        %3993 = vmatpush2.bf16.msra.mxu0 %v3542
        %3994 = vmatprep.subr.bf16.mxu0 0
        %3995 = vmatpush2.bf16.msra.mxu0 %v3541
        %3996 = vmatprep.subr.bf16.mxu0 0
        %3997 = vmatpush2.bf16.msra.mxu0 %v3540
        %3998 = vmatprep.mubr.bf16.mxu0 %v2900
        %3999 = vmatmul.mubr.bf16.gmra.mxu0 %v2852
        %v4000 = vpop.f32.mrf.mxu0
        %v4001 = vadd.f32 %v3840, %v4000
        %v4002 = vpop.f32.mrf.mxu0
        %v4003 = vpop.f32.mrf.mxu0
        %v4004 = vadd.f32 %v3843, %v4003
        %v4005 = vpop.f32.mrf.mxu0
        %4006 = vmatprep.mubr.bf16.mxu0 %v2901
        %4007 = vmatmul.mubr.bf16.gmra.mxu0 %v2853
        %v4008 = vpop.f32.mrf.mxu0
        %v4009 = vadd.f32 %v3848, %v4008
        %v4010 = vpop.f32.mrf.mxu0
        %v4011 = vpop.f32.mrf.mxu0
        %v4012 = vadd.f32 %v3851, %v4011
        %v4013 = vpop.f32.mrf.mxu0
        %4014 = vmatprep.mubr.bf16.mxu0 %v2902
        %4015 = vmatmul.mubr.bf16.gmra.mxu0 %v2854
        %v4016 = vpop.f32.mrf.mxu0
        %v4017 = vadd.f32 %v3856, %v4016
        %v4018 = vpop.f32.mrf.mxu0
        %v4019 = vpop.f32.mrf.mxu0
        %v4020 = vadd.f32 %v3859, %v4019
        %v4021 = vpop.f32.mrf.mxu0
        %4022 = vmatprep.mubr.bf16.mxu0 %v2903
        %4023 = vmatmul.mubr.bf16.gmra.mxu0 %v2855
        %v4024 = vpop.f32.mrf.mxu0
        %v4025 = vadd.f32 %v3864, %v4024
        %v4026 = vpop.f32.mrf.mxu0
        %v4027 = vpop.f32.mrf.mxu0
        %v4028 = vadd.f32 %v3867, %v4027
        %v4029 = vpop.f32.mrf.mxu0
        %4030 = vmatprep.mubr.bf16.mxu0 %v2904
        %4031 = vmatmul.mubr.bf16.gmra.mxu0 %v2856
        %v4032 = vpop.f32.mrf.mxu0
        %v4033 = vadd.f32 %v3872, %v4032
        %v4034 = vpop.f32.mrf.mxu0
        %v4035 = vpop.f32.mrf.mxu0
        %v4036 = vadd.f32 %v3875, %v4035
        %v4037 = vpop.f32.mrf.mxu0
        %4038 = vmatprep.mubr.bf16.mxu0 %v2905
        %4039 = vmatmul.mubr.bf16.gmra.mxu0 %v2857
        %v4040 = vpop.f32.mrf.mxu0
        %v4041 = vadd.f32 %v3880, %v4040
        %v4042 = vpop.f32.mrf.mxu0
        %v4043 = vpop.f32.mrf.mxu0
        %v4044 = vadd.f32 %v3883, %v4043
        %v4045 = vpop.f32.mrf.mxu0
        %4046 = vmatprep.mubr.bf16.mxu0 %v2906
        %4047 = vmatmul.mubr.bf16.gmra.mxu0 %v2858
        %v4048 = vpop.f32.mrf.mxu0
        %v4049 = vadd.f32 %v3888, %v4048
        %v4050 = vpop.f32.mrf.mxu0
        %v4051 = vpop.f32.mrf.mxu0
        %v4052 = vadd.f32 %v3891, %v4051
        %v4053 = vpop.f32.mrf.mxu0
        %4054 = vmatprep.mubr.bf16.mxu0 %v2907
        %4055 = vmatmul.mubr.bf16.gmra.mxu0 %v2859
        %v4056 = vpop.f32.mrf.mxu0
        %v4057 = vadd.f32 %v3896, %v4056
        %v4058 = vpop.f32.mrf.mxu0
        %v4059 = vpop.f32.mrf.mxu0
        %v4060 = vadd.f32 %v3899, %v4059
        %v4061 = vpop.f32.mrf.mxu0
        %4062 = vmatprep.mubr.bf16.mxu0 %v2908
        %4063 = vmatmul.mubr.bf16.gmra.mxu0 %v2860
        %v4064 = vpop.f32.mrf.mxu0
        %v4065 = vadd.f32 %v3904, %v4064
        %v4066 = vpop.f32.mrf.mxu0
        %v4067 = vpop.f32.mrf.mxu0
        %v4068 = vadd.f32 %v3907, %v4067
        %v4069 = vpop.f32.mrf.mxu0
        %4070 = vmatprep.mubr.bf16.mxu0 %v2909
        %4071 = vmatmul.mubr.bf16.gmra.mxu0 %v2861
        %v4072 = vpop.f32.mrf.mxu0
        %v4073 = vadd.f32 %v3912, %v4072
        %v4074 = vpop.f32.mrf.mxu0
        %v4075 = vpop.f32.mrf.mxu0
        %v4076 = vadd.f32 %v3915, %v4075
        %v4077 = vpop.f32.mrf.mxu0
        %4078 = vmatprep.mubr.bf16.mxu0 %v2910
        %4079 = vmatmul.mubr.bf16.gmra.mxu0 %v2862
        %v4080 = vpop.f32.mrf.mxu0
        %v4081 = vadd.f32 %v3920, %v4080
        %v4082 = vpop.f32.mrf.mxu0
        %v4083 = vpop.f32.mrf.mxu0
        %v4084 = vadd.f32 %v3923, %v4083
        %v4085 = vpop.f32.mrf.mxu0
        %4086 = vmatprep.mubr.bf16.mxu0 %v2911
        %4087 = vmatmul.mubr.bf16.gmra.mxu0 %v2863
        %v4088 = vpop.f32.mrf.mxu0
        %v4089 = vadd.f32 %v3928, %v4088
        %v4090 = vpop.f32.mrf.mxu0
        %v4091 = vpop.f32.mrf.mxu0
        %v4092 = vadd.f32 %v3931, %v4091
        %v4093 = vpop.f32.mrf.mxu0
        %4094 = vmatprep.mubr.bf16.mxu0 %v2912
        %4095 = vmatmul.mubr.bf16.gmra.mxu0 %v2864
        %v4096 = vpop.f32.mrf.mxu0
        %v4097 = vadd.f32 %v3936, %v4096
        %v4098 = vpop.f32.mrf.mxu0
        %v4099 = vpop.f32.mrf.mxu0
        %v4100 = vadd.f32 %v3939, %v4099
        %v4101 = vpop.f32.mrf.mxu0
        %4102 = vmatprep.mubr.bf16.mxu0 %v2913
        %4103 = vmatmul.mubr.bf16.gmra.mxu0 %v2865
        %v4104 = vpop.f32.mrf.mxu0
        %v4105 = vadd.f32 %v3944, %v4104
        %v4106 = vpop.f32.mrf.mxu0
        %v4107 = vpop.f32.mrf.mxu0
        %v4108 = vadd.f32 %v3947, %v4107
        %v4109 = vpop.f32.mrf.mxu0
        %4110 = vmatprep.mubr.bf16.mxu0 %v2914
        %4111 = vmatmul.mubr.bf16.gmra.mxu0 %v2866
        %v4112 = vpop.f32.mrf.mxu0
        %v4113 = vadd.f32 %v3952, %v4112
        %v4114 = vpop.f32.mrf.mxu0
        %v4115 = vpop.f32.mrf.mxu0
        %v4116 = vadd.f32 %v3955, %v4115
        %v4117 = vpop.f32.mrf.mxu0
        %4118 = vmatprep.mubr.bf16.mxu0 %v2915
        %4119 = vmatmul.mubr.bf16.gmra.mxu0 %v2867
        %v4120 = vpop.f32.mrf.mxu0
        %v4121 = vadd.f32 %v3960, %v4120
        %v4122 = vpop.f32.mrf.mxu0
        %v4123 = vpop.f32.mrf.mxu0
        %v4124 = vadd.f32 %v3963, %v4123
        %v4125 = vpop.f32.mrf.mxu0
        %4126 = vdwg.mxu0
        %4127 = vmatprep.subr.bf16.mxu0 0
        %4128 = vmatpush1.bf16.msra.mxu0 %v3555
        %4129 = vmatprep.subr.bf16.mxu0 0
        %4130 = vmatpush1.bf16.msra.mxu0 %v3554
        %4131 = vmatprep.subr.bf16.mxu0 0
        %4132 = vmatpush1.bf16.msra.mxu0 %v3553
        %4133 = vmatprep.subr.bf16.mxu0 0
        %4134 = vmatpush1.bf16.msra.mxu0 %v3552
        %4135 = vmatprep.subr.bf16.mxu0 0
        %4136 = vmatpush1.bf16.msra.mxu0 %v3551
        %4137 = vmatprep.subr.bf16.mxu0 0
        %4138 = vmatpush1.bf16.msra.mxu0 %v3550
        %4139 = vmatprep.subr.bf16.mxu0 0
        %4140 = vmatpush1.bf16.msra.mxu0 %v3549
        %4141 = vmatprep.subr.bf16.mxu0 0
        %4142 = vmatpush1.bf16.msra.mxu0 %v3548
        %4143 = vmatprep.subr.bf16.mxu0 0
        %4144 = vmatpush2.bf16.msra.mxu0 %v3563
        %4145 = vmatprep.subr.bf16.mxu0 0
        %4146 = vmatpush2.bf16.msra.mxu0 %v3562
        %4147 = vmatprep.subr.bf16.mxu0 0
        %4148 = vmatpush2.bf16.msra.mxu0 %v3561
        %4149 = vmatprep.subr.bf16.mxu0 0
        %4150 = vmatpush2.bf16.msra.mxu0 %v3560
        %4151 = vmatprep.subr.bf16.mxu0 0
        %4152 = vmatpush2.bf16.msra.mxu0 %v3559
        %4153 = vmatprep.subr.bf16.mxu0 0
        %4154 = vmatpush2.bf16.msra.mxu0 %v3558
        %4155 = vmatprep.subr.bf16.mxu0 0
        %4156 = vmatpush2.bf16.msra.mxu0 %v3557
        %4157 = vmatprep.subr.bf16.mxu0 0
        %4158 = vmatpush2.bf16.msra.mxu0 %v3556
        %4159 = vmatprep.mubr.bf16.mxu0 %v2997
        %4160 = vmatmul.mubr.bf16.gmra.mxu0 %v2949
        %v4161 = vpop.f32.mrf.mxu0
        %v4162 = vadd.f32 %v4001, %v4161
        %v4163 = vpop.f32.mrf.mxu0
        %v4164 = vpop.f32.mrf.mxu0
        %v4165 = vadd.f32 %v4004, %v4164
        %v4166 = vpop.f32.mrf.mxu0
        %4167 = vmatprep.mubr.bf16.mxu0 %v2998
        %4168 = vmatmul.mubr.bf16.gmra.mxu0 %v2950
        %v4169 = vpop.f32.mrf.mxu0
        %v4170 = vadd.f32 %v4009, %v4169
        %v4171 = vpop.f32.mrf.mxu0
        %v4172 = vpop.f32.mrf.mxu0
        %v4173 = vadd.f32 %v4012, %v4172
        %v4174 = vpop.f32.mrf.mxu0
        %4175 = vmatprep.mubr.bf16.mxu0 %v2999
        %4176 = vmatmul.mubr.bf16.gmra.mxu0 %v2951
        %v4177 = vpop.f32.mrf.mxu0
        %v4178 = vadd.f32 %v4017, %v4177
        %v4179 = vpop.f32.mrf.mxu0
        %v4180 = vpop.f32.mrf.mxu0
        %v4181 = vadd.f32 %v4020, %v4180
        %v4182 = vpop.f32.mrf.mxu0
        %4183 = vmatprep.mubr.bf16.mxu0 %v3000
        %4184 = vmatmul.mubr.bf16.gmra.mxu0 %v2952
        %v4185 = vpop.f32.mrf.mxu0
        %v4186 = vadd.f32 %v4025, %v4185
        %v4187 = vpop.f32.mrf.mxu0
        %v4188 = vpop.f32.mrf.mxu0
        %v4189 = vadd.f32 %v4028, %v4188
        %v4190 = vpop.f32.mrf.mxu0
        %4191 = vmatprep.mubr.bf16.mxu0 %v3001
        %4192 = vmatmul.mubr.bf16.gmra.mxu0 %v2953
        %v4193 = vpop.f32.mrf.mxu0
        %v4194 = vadd.f32 %v4033, %v4193
        %v4195 = vpop.f32.mrf.mxu0
        %v4196 = vpop.f32.mrf.mxu0
        %v4197 = vadd.f32 %v4036, %v4196
        %v4198 = vpop.f32.mrf.mxu0
        %4199 = vmatprep.mubr.bf16.mxu0 %v3002
        %4200 = vmatmul.mubr.bf16.gmra.mxu0 %v2954
        %v4201 = vpop.f32.mrf.mxu0
        %v4202 = vadd.f32 %v4041, %v4201
        %v4203 = vpop.f32.mrf.mxu0
        %v4204 = vpop.f32.mrf.mxu0
        %v4205 = vadd.f32 %v4044, %v4204
        %v4206 = vpop.f32.mrf.mxu0
        %4207 = vmatprep.mubr.bf16.mxu0 %v3003
        %4208 = vmatmul.mubr.bf16.gmra.mxu0 %v2955
        %v4209 = vpop.f32.mrf.mxu0
        %v4210 = vadd.f32 %v4049, %v4209
        %v4211 = vpop.f32.mrf.mxu0
        %v4212 = vpop.f32.mrf.mxu0
        %v4213 = vadd.f32 %v4052, %v4212
        %v4214 = vpop.f32.mrf.mxu0
        %4215 = vmatprep.mubr.bf16.mxu0 %v3004
        %4216 = vmatmul.mubr.bf16.gmra.mxu0 %v2956
        %v4217 = vpop.f32.mrf.mxu0
        %v4218 = vadd.f32 %v4057, %v4217
        %v4219 = vpop.f32.mrf.mxu0
        %v4220 = vpop.f32.mrf.mxu0
        %v4221 = vadd.f32 %v4060, %v4220
        %v4222 = vpop.f32.mrf.mxu0
        %4223 = vmatprep.mubr.bf16.mxu0 %v3005
        %4224 = vmatmul.mubr.bf16.gmra.mxu0 %v2957
        %v4225 = vpop.f32.mrf.mxu0
        %v4226 = vadd.f32 %v4065, %v4225
        %v4227 = vpop.f32.mrf.mxu0
        %v4228 = vpop.f32.mrf.mxu0
        %v4229 = vadd.f32 %v4068, %v4228
        %v4230 = vpop.f32.mrf.mxu0
        %4231 = vmatprep.mubr.bf16.mxu0 %v3006
        %4232 = vmatmul.mubr.bf16.gmra.mxu0 %v2958
        %v4233 = vpop.f32.mrf.mxu0
        %v4234 = vadd.f32 %v4073, %v4233
        %v4235 = vpop.f32.mrf.mxu0
        %v4236 = vpop.f32.mrf.mxu0
        %v4237 = vadd.f32 %v4076, %v4236
        %v4238 = vpop.f32.mrf.mxu0
        %4239 = vmatprep.mubr.bf16.mxu0 %v3007
        %4240 = vmatmul.mubr.bf16.gmra.mxu0 %v2959
        %v4241 = vpop.f32.mrf.mxu0
        %v4242 = vadd.f32 %v4081, %v4241
        %v4243 = vpop.f32.mrf.mxu0
        %v4244 = vpop.f32.mrf.mxu0
        %v4245 = vadd.f32 %v4084, %v4244
        %v4246 = vpop.f32.mrf.mxu0
        %4247 = vmatprep.mubr.bf16.mxu0 %v3008
        %4248 = vmatmul.mubr.bf16.gmra.mxu0 %v2960
        %v4249 = vpop.f32.mrf.mxu0
        %v4250 = vadd.f32 %v4089, %v4249
        %v4251 = vpop.f32.mrf.mxu0
        %v4252 = vpop.f32.mrf.mxu0
        %v4253 = vadd.f32 %v4092, %v4252
        %v4254 = vpop.f32.mrf.mxu0
        %4255 = vmatprep.mubr.bf16.mxu0 %v3009
        %4256 = vmatmul.mubr.bf16.gmra.mxu0 %v2961
        %v4257 = vpop.f32.mrf.mxu0
        %v4258 = vadd.f32 %v4097, %v4257
        %v4259 = vpop.f32.mrf.mxu0
        %v4260 = vpop.f32.mrf.mxu0
        %v4261 = vadd.f32 %v4100, %v4260
        %v4262 = vpop.f32.mrf.mxu0
        %4263 = vmatprep.mubr.bf16.mxu0 %v3010
        %4264 = vmatmul.mubr.bf16.gmra.mxu0 %v2962
        %v4265 = vpop.f32.mrf.mxu0
        %v4266 = vadd.f32 %v4105, %v4265
        %v4267 = vpop.f32.mrf.mxu0
        %v4268 = vpop.f32.mrf.mxu0
        %v4269 = vadd.f32 %v4108, %v4268
        %v4270 = vpop.f32.mrf.mxu0
        %4271 = vmatprep.mubr.bf16.mxu0 %v3011
        %4272 = vmatmul.mubr.bf16.gmra.mxu0 %v2963
        %v4273 = vpop.f32.mrf.mxu0
        %v4274 = vadd.f32 %v4113, %v4273
        %v4275 = vpop.f32.mrf.mxu0
        %v4276 = vpop.f32.mrf.mxu0
        %v4277 = vadd.f32 %v4116, %v4276
        %v4278 = vpop.f32.mrf.mxu0
        %4279 = vmatprep.mubr.bf16.mxu0 %v3012
        %4280 = vmatmul.mubr.bf16.gmra.mxu0 %v2964
        %v4281 = vpop.f32.mrf.mxu0
        %v4282 = vadd.f32 %v4121, %v4281
        %v4283 = vpop.f32.mrf.mxu0
        %v4284 = vpop.f32.mrf.mxu0
        %v4285 = vadd.f32 %v4124, %v4284
        %v4286 = vpop.f32.mrf.mxu0
        %4287 = vdwg.mxu0
        %4288 = vmatprep.subr.bf16.mxu0 0
        %4289 = vmatpush1.bf16.msra.mxu0 %v3571
        %4290 = vmatprep.subr.bf16.mxu0 0
        %4291 = vmatpush1.bf16.msra.mxu0 %v3570
        %4292 = vmatprep.subr.bf16.mxu0 0
        %4293 = vmatpush1.bf16.msra.mxu0 %v3569
        %4294 = vmatprep.subr.bf16.mxu0 0
        %4295 = vmatpush1.bf16.msra.mxu0 %v3568
        %4296 = vmatprep.subr.bf16.mxu0 0
        %4297 = vmatpush1.bf16.msra.mxu0 %v3567
        %4298 = vmatprep.subr.bf16.mxu0 0
        %4299 = vmatpush1.bf16.msra.mxu0 %v3566
        %4300 = vmatprep.subr.bf16.mxu0 0
        %4301 = vmatpush1.bf16.msra.mxu0 %v3565
        %4302 = vmatprep.subr.bf16.mxu0 0
        %4303 = vmatpush1.bf16.msra.mxu0 %v3564
        %4304 = vmatprep.subr.bf16.mxu0 0
        %4305 = vmatpush2.bf16.msra.mxu0 0
        %4306 = vmatprep.subr.bf16.mxu0 0
        %4307 = vmatpush2.bf16.msra.mxu0 0
        %4308 = vmatprep.subr.bf16.mxu0 0
        %4309 = vmatpush2.bf16.msra.mxu0 0
        %4310 = vmatprep.subr.bf16.mxu0 0
        %4311 = vmatpush2.bf16.msra.mxu0 0
        %4312 = vmatprep.subr.bf16.mxu0 0
        %4313 = vmatpush2.bf16.msra.mxu0 0
        %4314 = vmatprep.subr.bf16.mxu0 0
        %4315 = vmatpush2.bf16.msra.mxu0 0
        %4316 = vmatprep.subr.bf16.mxu0 0
        %4317 = vmatpush2.bf16.msra.mxu0 0
        %4318 = vmatprep.subr.bf16.mxu0 0
        %4319 = vmatpush2.bf16.msra.mxu0 0
        %4320 = vmatprep.mubr.bf16.mxu0 0
        %4321 = vmatmul.mubr.bf16.gmra.mxu0 %v3045
        %v4322 = vpop.f32.mrf.mxu0
        %v4323 = vadd.f32 %v4162, %v4322
        %v4324 = vpop.f32.mrf.mxu0
        %v4325 = vpop.f32.mrf.mxu0
        %v4326 = vadd.f32 %v4165, %v4325
        %v4327 = vpop.f32.mrf.mxu0
        %4328 = vmatprep.mubr.bf16.mxu0 0
        %4329 = vmatmul.mubr.bf16.gmra.mxu0 %v3046
        %v4330 = vpop.f32.mrf.mxu0
        %v4331 = vadd.f32 %v4170, %v4330
        %v4332 = vpop.f32.mrf.mxu0
        %v4333 = vpop.f32.mrf.mxu0
        %v4334 = vadd.f32 %v4173, %v4333
        %v4335 = vpop.f32.mrf.mxu0
        %4336 = vmatprep.mubr.bf16.mxu0 0
        %4337 = vmatmul.mubr.bf16.gmra.mxu0 %v3047
        %v4338 = vpop.f32.mrf.mxu0
        %v4339 = vadd.f32 %v4178, %v4338
        %v4340 = vpop.f32.mrf.mxu0
        %v4341 = vpop.f32.mrf.mxu0
        %v4342 = vadd.f32 %v4181, %v4341
        %v4343 = vpop.f32.mrf.mxu0
        %4344 = vmatprep.mubr.bf16.mxu0 0
        %4345 = vmatmul.mubr.bf16.gmra.mxu0 %v3048
        %v4346 = vpop.f32.mrf.mxu0
        %v4347 = vadd.f32 %v4186, %v4346
        %v4348 = vpop.f32.mrf.mxu0
        %v4349 = vpop.f32.mrf.mxu0
        %v4350 = vadd.f32 %v4189, %v4349
        %v4351 = vpop.f32.mrf.mxu0
        %4352 = vmatprep.mubr.bf16.mxu0 0
        %4353 = vmatmul.mubr.bf16.gmra.mxu0 %v3049
        %v4354 = vpop.f32.mrf.mxu0
        %v4355 = vadd.f32 %v4194, %v4354
        %v4356 = vpop.f32.mrf.mxu0
        %v4357 = vpop.f32.mrf.mxu0
        %v4358 = vadd.f32 %v4197, %v4357
        %v4359 = vpop.f32.mrf.mxu0
        %4360 = vmatprep.mubr.bf16.mxu0 0
        %4361 = vmatmul.mubr.bf16.gmra.mxu0 %v3050
        %v4362 = vpop.f32.mrf.mxu0
        %v4363 = vadd.f32 %v4202, %v4362
        %v4364 = vpop.f32.mrf.mxu0
        %v4365 = vpop.f32.mrf.mxu0
        %v4366 = vadd.f32 %v4205, %v4365
        %v4367 = vpop.f32.mrf.mxu0
        %4368 = vmatprep.mubr.bf16.mxu0 0
        %4369 = vmatmul.mubr.bf16.gmra.mxu0 %v3051
        %v4370 = vpop.f32.mrf.mxu0
        %v4371 = vadd.f32 %v4210, %v4370
        %v4372 = vpop.f32.mrf.mxu0
        %v4373 = vpop.f32.mrf.mxu0
        %v4374 = vadd.f32 %v4213, %v4373
        %v4375 = vpop.f32.mrf.mxu0
        %4376 = vmatprep.mubr.bf16.mxu0 0
        %4377 = vmatmul.mubr.bf16.gmra.mxu0 %v3052
        %v4378 = vpop.f32.mrf.mxu0
        %v4379 = vadd.f32 %v4218, %v4378
        %v4380 = vpop.f32.mrf.mxu0
        %v4381 = vpop.f32.mrf.mxu0
        %v4382 = vadd.f32 %v4221, %v4381
        %v4383 = vpop.f32.mrf.mxu0
        %4384 = vmatprep.mubr.bf16.mxu0 0
        %4385 = vmatmul.mubr.bf16.gmra.mxu0 %v3053
        %v4386 = vpop.f32.mrf.mxu0
        %v4387 = vadd.f32 %v4226, %v4386
        %v4388 = vpop.f32.mrf.mxu0
        %v4389 = vpop.f32.mrf.mxu0
        %v4390 = vadd.f32 %v4229, %v4389
        %v4391 = vpop.f32.mrf.mxu0
        %4392 = vmatprep.mubr.bf16.mxu0 0
        %4393 = vmatmul.mubr.bf16.gmra.mxu0 %v3054
        %v4394 = vpop.f32.mrf.mxu0
        %v4395 = vadd.f32 %v4234, %v4394
        %v4396 = vpop.f32.mrf.mxu0
        %v4397 = vpop.f32.mrf.mxu0
        %v4398 = vadd.f32 %v4237, %v4397
        %v4399 = vpop.f32.mrf.mxu0
        %4400 = vmatprep.mubr.bf16.mxu0 0
        %4401 = vmatmul.mubr.bf16.gmra.mxu0 %v3055
        %v4402 = vpop.f32.mrf.mxu0
        %v4403 = vadd.f32 %v4242, %v4402
        %v4404 = vpop.f32.mrf.mxu0
        %v4405 = vpop.f32.mrf.mxu0
        %v4406 = vadd.f32 %v4245, %v4405
        %v4407 = vpop.f32.mrf.mxu0
        %4408 = vmatprep.mubr.bf16.mxu0 0
        %4409 = vmatmul.mubr.bf16.gmra.mxu0 %v3056
        %v4410 = vpop.f32.mrf.mxu0
        %v4411 = vadd.f32 %v4250, %v4410
        %v4412 = vpop.f32.mrf.mxu0
        %v4413 = vpop.f32.mrf.mxu0
        %v4414 = vadd.f32 %v4253, %v4413
        %v4415 = vpop.f32.mrf.mxu0
        %4416 = vmatprep.mubr.bf16.mxu0 0
        %4417 = vmatmul.mubr.bf16.gmra.mxu0 %v3057
        %v4418 = vpop.f32.mrf.mxu0
        %v4419 = vadd.f32 %v4258, %v4418
        %v4420 = vpop.f32.mrf.mxu0
        %v4421 = vpop.f32.mrf.mxu0
        %v4422 = vadd.f32 %v4261, %v4421
        %v4423 = vpop.f32.mrf.mxu0
        %4424 = vmatprep.mubr.bf16.mxu0 0
        %4425 = vmatmul.mubr.bf16.gmra.mxu0 %v3058
        %v4426 = vpop.f32.mrf.mxu0
        %v4427 = vadd.f32 %v4266, %v4426
        %v4428 = vpop.f32.mrf.mxu0
        %v4429 = vpop.f32.mrf.mxu0
        %v4430 = vadd.f32 %v4269, %v4429
        %v4431 = vpop.f32.mrf.mxu0
        %4432 = vmatprep.mubr.bf16.mxu0 0
        %4433 = vmatmul.mubr.bf16.gmra.mxu0 %v3059
        %v4434 = vpop.f32.mrf.mxu0
        %v4435 = vadd.f32 %v4274, %v4434
        %v4436 = vpop.f32.mrf.mxu0
        %v4437 = vpop.f32.mrf.mxu0
        %v4438 = vadd.f32 %v4277, %v4437
        %v4439 = vpop.f32.mrf.mxu0
        %4440 = vmatprep.mubr.bf16.mxu0 0
        %4441 = vmatmul.mubr.bf16.gmra.mxu0 %v3060
        %v4442 = vpop.f32.mrf.mxu0
        %v4443 = vadd.f32 %v4282, %v4442
        %v4444 = vpop.f32.mrf.mxu0
        %v4445 = vpop.f32.mrf.mxu0
        %v4446 = vadd.f32 %v4285, %v4445
        %v4447 = vpop.f32.mrf.mxu0
        %4448 = vdwg.mxu0
        %4449 = vst [vmem:[#allocation3] sm:$0xff] -inf
        %4450 = vst [vmem:[#allocation3 + $0x8] sm:$0xff] -inf
        %4451 = vst [vmem:[#allocation3 + $0x10] sm:$0x3] -inf
        %4452 = vst [vmem:[#allocation3 + $0x18] sm:$0xff] -inf
        %4453 = vst [vmem:[#allocation3 + $0x20] sm:$0xff] -inf
        %4454 = vst [vmem:[#allocation3 + $0x28] sm:$0x3] -inf
        %4455 = vst [vmem:[#allocation3 + $0x30] sm:$0xff] -inf
        %4456 = vst [vmem:[#allocation3 + $0x38] sm:$0xff] -inf
        %4457 = vst [vmem:[#allocation3 + $0x40] sm:$0x3] -inf
        %4458 = vst [vmem:[#allocation3 + $0x48] sm:$0xff] -inf
        %4459 = vst [vmem:[#allocation3 + $0x50] sm:$0xff] -inf
        %4460 = vst [vmem:[#allocation3 + $0x58] sm:$0x3] -inf
        %4461 = vst [vmem:[#allocation3 + $0x60] sm:$0xff] -inf
        %4462 = vst [vmem:[#allocation3 + $0x68] sm:$0xff] -inf
        %4463 = vst [vmem:[#allocation3 + $0x70] sm:$0x3] -inf
        %4464 = vst [vmem:[#allocation3 + $0x78] sm:$0xff] -inf
        %4465 = vst [vmem:[#allocation3 + $0x80] sm:$0xff] -inf
        %4466 = vst [vmem:[#allocation3 + $0x88] sm:$0x3] -inf
        %4467 = vst [vmem:[#allocation3 + $0x90] sm:$0xff] -inf
        %4468 = vst [vmem:[#allocation3 + $0x98] sm:$0xff] -inf
        %4469 = vst [vmem:[#allocation3 + $0xa0] sm:$0x3] -inf
        %4470 = vst [vmem:[#allocation3 + $0xa8] sm:$0xff] -inf
        %4471 = vst [vmem:[#allocation3 + $0xb0] sm:$0xff] -inf
        %4472 = vst [vmem:[#allocation3 + $0xb8] sm:$0x3] -inf
        %4473 = vst [vmem:[#allocation3 + $0xc0] sm:$0xff] -inf
        %4474 = vst [vmem:[#allocation3 + $0xc8] sm:$0xff] -inf
        %4475 = vst [vmem:[#allocation3 + $0xd0] sm:$0x3] -inf
        %4476 = vst [vmem:[#allocation3 + $0xd8] sm:$0xff] -inf
        %4477 = vst [vmem:[#allocation3 + $0xe0] sm:$0xff] -inf
        %4478 = vst [vmem:[#allocation3 + $0xe8] sm:$0x3] -inf
        %4479 = vst [vmem:[#allocation3 + $0xf0] sm:$0xff] -inf
        %4480 = vst [vmem:[#allocation3 + $0xf8] sm:$0xff] -inf
        %4481 = vst [vmem:[#allocation3 + $0x100] sm:$0x3] -inf
        %4482 = vst [vmem:[#allocation3 + $0x108] sm:$0xff] -inf
        %4483 = vst [vmem:[#allocation3 + $0x110] sm:$0xff] -inf
        %4484 = vst [vmem:[#allocation3 + $0x118] sm:$0x3] -inf
        %4485 = vst [vmem:[#allocation3 + $0x120] sm:$0xff] -inf
        %4486 = vst [vmem:[#allocation3 + $0x128] sm:$0xff] -inf
        %4487 = vst [vmem:[#allocation3 + $0x130] sm:$0x3] -inf
        %4488 = vst [vmem:[#allocation3 + $0x138] sm:$0xff] -inf
        %4489 = vst [vmem:[#allocation3 + $0x140] sm:$0xff] -inf
        %4490 = vst [vmem:[#allocation3 + $0x148] sm:$0x3] -inf
        %4491 = vst [vmem:[#allocation3 + $0x150] sm:$0xff] -inf
        %4492 = vst [vmem:[#allocation3 + $0x158] sm:$0xff] -inf
        %4493 = vst [vmem:[#allocation3 + $0x160] sm:$0x3] -inf
        %4494 = vst [vmem:[#allocation3 + $0x168] sm:$0xff] -inf
        %4495 = vst [vmem:[#allocation3 + $0x170] sm:$0xff] -inf
        %4496 = vst [vmem:[#allocation3 + $0x178] sm:$0x3] -inf
        %4497 = vst [vmem:[#allocation3 + $0x180] sm:$0xff] -inf
        %4498 = vst [vmem:[#allocation3 + $0x188] sm:$0xff] -inf
        %4499 = vst [vmem:[#allocation3 + $0x190] sm:$0x3] -inf
        %4500 = vst [vmem:[#allocation3 + $0x198] sm:$0xff] -inf
        %4501 = vst [vmem:[#allocation3 + $0x1a0] sm:$0xff] -inf
        %4502 = vst [vmem:[#allocation3 + $0x1a8] sm:$0x3] -inf
        %s4503 = scalar_lea.vmem [#allocation3], 24
        %4504 = vst [vmem:[%s4503 + $0x1] sm:$0xff] %v4323
        %4505 = vst [vmem:[%s4503 + $0x9] sm:$0xff] %v4326
        %4506 = vst [vmem:[%s4503 + $0x19] sm:$0xff] %v4331
        %4507 = vst [vmem:[%s4503 + $0x21] sm:$0xff] %v4334
        %4508 = vst [vmem:[%s4503 + $0x31] sm:$0xff] %v4339
        %4509 = vst [vmem:[%s4503 + $0x39] sm:$0xff] %v4342
        %4510 = vst [vmem:[%s4503 + $0x49] sm:$0xff] %v4347
        %4511 = vst [vmem:[%s4503 + $0x51] sm:$0xff] %v4350
        %4512 = vst [vmem:[%s4503 + $0x61] sm:$0xff] %v4355
        %4513 = vst [vmem:[%s4503 + $0x69] sm:$0xff] %v4358
        %4514 = vst [vmem:[%s4503 + $0x79] sm:$0xff] %v4363
        %4515 = vst [vmem:[%s4503 + $0x81] sm:$0xff] %v4366
        %4516 = vst [vmem:[%s4503 + $0x91] sm:$0xff] %v4371
        %4517 = vst [vmem:[%s4503 + $0x99] sm:$0xff] %v4374
        %4518 = vst [vmem:[%s4503 + $0xa9] sm:$0xff] %v4379
        %4519 = vst [vmem:[%s4503 + $0xb1] sm:$0xff] %v4382
        %4520 = vst [vmem:[%s4503 + $0xc1] sm:$0xff] %v4387
        %4521 = vst [vmem:[%s4503 + $0xc9] sm:$0xff] %v4390
        %4522 = vst [vmem:[%s4503 + $0xd9] sm:$0xff] %v4395
        %4523 = vst [vmem:[%s4503 + $0xe1] sm:$0xff] %v4398
        %4524 = vst [vmem:[%s4503 + $0xf1] sm:$0xff] %v4403
        %4525 = vst [vmem:[%s4503 + $0xf9] sm:$0xff] %v4406
        %4526 = vst [vmem:[%s4503 + $0x109] sm:$0xff] %v4411
        %4527 = vst [vmem:[%s4503 + $0x111] sm:$0xff] %v4414
        %4528 = vst [vmem:[%s4503 + $0x121] sm:$0xff] %v4419
        %4529 = vst [vmem:[%s4503 + $0x129] sm:$0xff] %v4422
        %4530 = vst [vmem:[%s4503 + $0x139] sm:$0xff] %v4427
        %4531 = vst [vmem:[%s4503 + $0x141] sm:$0xff] %v4430
        %4532 = vst [vmem:[%s4503 + $0x151] sm:$0xff] %v4435
        %4533 = vst [vmem:[%s4503 + $0x159] sm:$0xff] %v4438
        %4534 = vst [vmem:[%s4503 + $0x169] sm:$0xff] %v4443
        %4535 = vst [vmem:[%s4503 + $0x171] sm:$0xff] %v4446
        %v4536 = vld [vmem:[#allocation3] sm:$0xff]
        %v4537 = vld [vmem:[#allocation3 + $0x8] sm:$0xff]
        %v4538 = vld [vmem:[#allocation3 + $0x18] sm:$0xff]
        %v4539 = vld [vmem:[#allocation3 + $0x20] sm:$0xff]
        %v4540 = vld [vmem:[#allocation3 + $0x30] sm:$0xff]
        %v4541 = vld [vmem:[#allocation3 + $0x38] sm:$0xff]
        %v4542 = vld [vmem:[#allocation3 + $0x48] sm:$0xff]
        %v4543 = vld [vmem:[#allocation3 + $0x50] sm:$0xff]
        %v4544 = vld [vmem:[#allocation3 + $0x60] sm:$0xff]
        %v4545 = vld [vmem:[#allocation3 + $0x68] sm:$0xff]
        %v4546 = vld [vmem:[#allocation3 + $0x78] sm:$0xff]
        %v4547 = vld [vmem:[#allocation3 + $0x80] sm:$0xff]
        %v4548 = vld [vmem:[#allocation3 + $0x90] sm:$0xff]
        %v4549 = vld [vmem:[#allocation3 + $0x98] sm:$0xff]
        %v4550 = vld [vmem:[#allocation3 + $0xa8] sm:$0xff]
        %v4551 = vld [vmem:[#allocation3 + $0xb0] sm:$0xff]
        %v4552 = vld [vmem:[#allocation3 + $0xc0] sm:$0xff]
        %v4553 = vld [vmem:[#allocation3 + $0xc8] sm:$0xff]
        %v4554 = vld [vmem:[#allocation3 + $0xd8] sm:$0xff]
        %v4555 = vld [vmem:[#allocation3 + $0xe0] sm:$0xff]
        %v4556 = vld [vmem:[#allocation3 + $0xf0] sm:$0xff]
        %v4557 = vld [vmem:[#allocation3 + $0xf8] sm:$0xff]
        %v4558 = vld [vmem:[#allocation3 + $0x108] sm:$0xff]
        %v4559 = vld [vmem:[#allocation3 + $0x110] sm:$0xff]
        %v4560 = vld [vmem:[#allocation3 + $0x120] sm:$0xff]
        %v4561 = vld [vmem:[#allocation3 + $0x128] sm:$0xff]
        %v4562 = vld [vmem:[#allocation3 + $0x138] sm:$0xff]
        %v4563 = vld [vmem:[#allocation3 + $0x140] sm:$0xff]
        %v4564 = vld [vmem:[#allocation3 + $0x150] sm:$0xff]
        %v4565 = vld [vmem:[#allocation3 + $0x158] sm:$0xff]
        %v4566 = vld [vmem:[#allocation3 + $0x168] sm:$0xff]
        %v4567 = vld [vmem:[#allocation3 + $0x170] sm:$0xff]
        %v4568 = vld [vmem:[#allocation3 + $0x1] sm:$0xff]
        %v4569 = vld [vmem:[#allocation3 + $0x9] sm:$0xff]
        %v4570 = vld [vmem:[#allocation3 + $0x19] sm:$0xff]
        %v4571 = vld [vmem:[#allocation3 + $0x21] sm:$0xff]
        %v4572 = vld [vmem:[#allocation3 + $0x31] sm:$0xff]
        %v4573 = vld [vmem:[#allocation3 + $0x39] sm:$0xff]
        %v4574 = vld [vmem:[#allocation3 + $0x49] sm:$0xff]
        %v4575 = vld [vmem:[#allocation3 + $0x51] sm:$0xff]
        %v4576 = vld [vmem:[#allocation3 + $0x61] sm:$0xff]
        %v4577 = vld [vmem:[#allocation3 + $0x69] sm:$0xff]
        %v4578 = vld [vmem:[#allocation3 + $0x79] sm:$0xff]
        %v4579 = vld [vmem:[#allocation3 + $0x81] sm:$0xff]
        %v4580 = vld [vmem:[#allocation3 + $0x91] sm:$0xff]
        %v4581 = vld [vmem:[#allocation3 + $0x99] sm:$0xff]
        %v4582 = vld [vmem:[#allocation3 + $0xa9] sm:$0xff]
        %v4583 = vld [vmem:[#allocation3 + $0xb1] sm:$0xff]
        %v4584 = vld [vmem:[#allocation3 + $0xc1] sm:$0xff]
        %v4585 = vld [vmem:[#allocation3 + $0xc9] sm:$0xff]
        %v4586 = vld [vmem:[#allocation3 + $0xd9] sm:$0xff]
        %v4587 = vld [vmem:[#allocation3 + $0xe1] sm:$0xff]
        %v4588 = vld [vmem:[#allocation3 + $0xf1] sm:$0xff]
        %v4589 = vld [vmem:[#allocation3 + $0xf9] sm:$0xff]
        %v4590 = vld [vmem:[#allocation3 + $0x109] sm:$0xff]
        %v4591 = vld [vmem:[#allocation3 + $0x111] sm:$0xff]
        %v4592 = vld [vmem:[#allocation3 + $0x121] sm:$0xff]
        %v4593 = vld [vmem:[#allocation3 + $0x129] sm:$0xff]
        %v4594 = vld [vmem:[#allocation3 + $0x139] sm:$0xff]
        %v4595 = vld [vmem:[#allocation3 + $0x141] sm:$0xff]
        %v4596 = vld [vmem:[#allocation3 + $0x151] sm:$0xff]
        %v4597 = vld [vmem:[#allocation3 + $0x159] sm:$0xff]
        %v4598 = vld [vmem:[#allocation3 + $0x169] sm:$0xff]
        %v4599 = vld [vmem:[#allocation3 + $0x171] sm:$0xff]
        %v4600 = vmax.f32 %v4536, %v4568
        %v4601 = vmax.f32 %v4537, %v4569
        %v4602 = vmax.f32 %v4538, %v4570
        %v4603 = vmax.f32 %v4539, %v4571
        %v4604 = vmax.f32 %v4540, %v4572
        %v4605 = vmax.f32 %v4541, %v4573
        %v4606 = vmax.f32 %v4542, %v4574
        %v4607 = vmax.f32 %v4543, %v4575
        %v4608 = vmax.f32 %v4544, %v4576
        %v4609 = vmax.f32 %v4545, %v4577
        %v4610 = vmax.f32 %v4546, %v4578
        %v4611 = vmax.f32 %v4547, %v4579
        %v4612 = vmax.f32 %v4548, %v4580
        %v4613 = vmax.f32 %v4549, %v4581
        %v4614 = vmax.f32 %v4550, %v4582
        %v4615 = vmax.f32 %v4551, %v4583
        %v4616 = vmax.f32 %v4552, %v4584
        %v4617 = vmax.f32 %v4553, %v4585
        %v4618 = vmax.f32 %v4554, %v4586
        %v4619 = vmax.f32 %v4555, %v4587
        %v4620 = vmax.f32 %v4556, %v4588
        %v4621 = vmax.f32 %v4557, %v4589
        %v4622 = vmax.f32 %v4558, %v4590
        %v4623 = vmax.f32 %v4559, %v4591
        %v4624 = vmax.f32 %v4560, %v4592
        %v4625 = vmax.f32 %v4561, %v4593
        %v4626 = vmax.f32 %v4562, %v4594
        %v4627 = vmax.f32 %v4563, %v4595
        %v4628 = vmax.f32 %v4564, %v4596
        %v4629 = vmax.f32 %v4565, %v4597
        %v4630 = vmax.f32 %v4566, %v4598
        %v4631 = vmax.f32 %v4567, %v4599
        %v4632 = vld [vmem:[#allocation3 + $0x2] sm:$0xff]
        %v4633 = vld [vmem:[#allocation3 + $0xa] sm:$0xff]
        %v4634 = vld [vmem:[#allocation3 + $0x1a] sm:$0xff]
        %v4635 = vld [vmem:[#allocation3 + $0x22] sm:$0xff]
        %v4636 = vld [vmem:[#allocation3 + $0x32] sm:$0xff]
        %v4637 = vld [vmem:[#allocation3 + $0x3a] sm:$0xff]
        %v4638 = vld [vmem:[#allocation3 + $0x4a] sm:$0xff]
        %v4639 = vld [vmem:[#allocation3 + $0x52] sm:$0xff]
        %v4640 = vld [vmem:[#allocation3 + $0x62] sm:$0xff]
        %v4641 = vld [vmem:[#allocation3 + $0x6a] sm:$0xff]
        %v4642 = vld [vmem:[#allocation3 + $0x7a] sm:$0xff]
        %v4643 = vld [vmem:[#allocation3 + $0x82] sm:$0xff]
        %v4644 = vld [vmem:[#allocation3 + $0x92] sm:$0xff]
        %v4645 = vld [vmem:[#allocation3 + $0x9a] sm:$0xff]
        %v4646 = vld [vmem:[#allocation3 + $0xaa] sm:$0xff]
        %v4647 = vld [vmem:[#allocation3 + $0xb2] sm:$0xff]
        %v4648 = vld [vmem:[#allocation3 + $0xc2] sm:$0xff]
        %v4649 = vld [vmem:[#allocation3 + $0xca] sm:$0xff]
        %v4650 = vld [vmem:[#allocation3 + $0xda] sm:$0xff]
        %v4651 = vld [vmem:[#allocation3 + $0xe2] sm:$0xff]
        %v4652 = vld [vmem:[#allocation3 + $0xf2] sm:$0xff]
        %v4653 = vld [vmem:[#allocation3 + $0xfa] sm:$0xff]
        %v4654 = vld [vmem:[#allocation3 + $0x10a] sm:$0xff]
        %v4655 = vld [vmem:[#allocation3 + $0x112] sm:$0xff]
        %v4656 = vld [vmem:[#allocation3 + $0x122] sm:$0xff]
        %v4657 = vld [vmem:[#allocation3 + $0x12a] sm:$0xff]
        %v4658 = vld [vmem:[#allocation3 + $0x13a] sm:$0xff]
        %v4659 = vld [vmem:[#allocation3 + $0x142] sm:$0xff]
        %v4660 = vld [vmem:[#allocation3 + $0x152] sm:$0xff]
        %v4661 = vld [vmem:[#allocation3 + $0x15a] sm:$0xff]
        %v4662 = vld [vmem:[#allocation3 + $0x16a] sm:$0xff]
        %v4663 = vld [vmem:[#allocation3 + $0x172] sm:$0xff]
        %v4664 = vmax.f32 %v4600, %v4632
        %v4665 = vmax.f32 %v4601, %v4633
        %v4666 = vmax.f32 %v4602, %v4634
        %v4667 = vmax.f32 %v4603, %v4635
        %v4668 = vmax.f32 %v4604, %v4636
        %v4669 = vmax.f32 %v4605, %v4637
        %v4670 = vmax.f32 %v4606, %v4638
        %v4671 = vmax.f32 %v4607, %v4639
        %v4672 = vmax.f32 %v4608, %v4640
        %v4673 = vmax.f32 %v4609, %v4641
        %v4674 = vmax.f32 %v4610, %v4642
        %v4675 = vmax.f32 %v4611, %v4643
        %v4676 = vmax.f32 %v4612, %v4644
        %v4677 = vmax.f32 %v4613, %v4645
        %v4678 = vmax.f32 %v4614, %v4646
        %v4679 = vmax.f32 %v4615, %v4647
        %v4680 = vmax.f32 %v4616, %v4648
        %v4681 = vmax.f32 %v4617, %v4649
        %v4682 = vmax.f32 %v4618, %v4650
        %v4683 = vmax.f32 %v4619, %v4651
        %v4684 = vmax.f32 %v4620, %v4652
        %v4685 = vmax.f32 %v4621, %v4653
        %v4686 = vmax.f32 %v4622, %v4654
        %v4687 = vmax.f32 %v4623, %v4655
        %v4688 = vmax.f32 %v4624, %v4656
        %v4689 = vmax.f32 %v4625, %v4657
        %v4690 = vmax.f32 %v4626, %v4658
        %v4691 = vmax.f32 %v4627, %v4659
        %v4692 = vmax.f32 %v4628, %v4660
        %v4693 = vmax.f32 %v4629, %v4661
        %v4694 = vmax.f32 %v4630, %v4662
        %v4695 = vmax.f32 %v4631, %v4663
        %v4696 = vld [vmem:[%s4503] sm:$0xff]
        %v4697 = vld [vmem:[%s4503 + $0x8] sm:$0xff]
        %v4698 = vld [vmem:[%s4503 + $0x18] sm:$0xff]
        %v4699 = vld [vmem:[%s4503 + $0x20] sm:$0xff]
        %v4700 = vld [vmem:[%s4503 + $0x30] sm:$0xff]
        %v4701 = vld [vmem:[%s4503 + $0x38] sm:$0xff]
        %v4702 = vld [vmem:[%s4503 + $0x48] sm:$0xff]
        %v4703 = vld [vmem:[%s4503 + $0x50] sm:$0xff]
        %v4704 = vld [vmem:[%s4503 + $0x60] sm:$0xff]
        %v4705 = vld [vmem:[%s4503 + $0x68] sm:$0xff]
        %v4706 = vld [vmem:[%s4503 + $0x78] sm:$0xff]
        %v4707 = vld [vmem:[%s4503 + $0x80] sm:$0xff]
        %v4708 = vld [vmem:[%s4503 + $0x90] sm:$0xff]
        %v4709 = vld [vmem:[%s4503 + $0x98] sm:$0xff]
        %v4710 = vld [vmem:[%s4503 + $0xa8] sm:$0xff]
        %v4711 = vld [vmem:[%s4503 + $0xb0] sm:$0xff]
        %v4712 = vld [vmem:[%s4503 + $0xc0] sm:$0xff]
        %v4713 = vld [vmem:[%s4503 + $0xc8] sm:$0xff]
        %v4714 = vld [vmem:[%s4503 + $0xd8] sm:$0xff]
        %v4715 = vld [vmem:[%s4503 + $0xe0] sm:$0xff]
        %v4716 = vld [vmem:[%s4503 + $0xf0] sm:$0xff]
        %v4717 = vld [vmem:[%s4503 + $0xf8] sm:$0xff]
        %v4718 = vld [vmem:[%s4503 + $0x108] sm:$0xff]
        %v4719 = vld [vmem:[%s4503 + $0x110] sm:$0xff]
        %v4720 = vld [vmem:[%s4503 + $0x120] sm:$0xff]
        %v4721 = vld [vmem:[%s4503 + $0x128] sm:$0xff]
        %v4722 = vld [vmem:[%s4503 + $0x138] sm:$0xff]
        %v4723 = vld [vmem:[%s4503 + $0x140] sm:$0xff]
        %v4724 = vld [vmem:[%s4503 + $0x150] sm:$0xff]
        %v4725 = vld [vmem:[%s4503 + $0x158] sm:$0xff]
        %v4726 = vld [vmem:[%s4503 + $0x168] sm:$0xff]
        %v4727 = vld [vmem:[%s4503 + $0x170] sm:$0xff]
        %v4728 = vmax.f32 %v4664, %v4696
        %v4729 = vmax.f32 %v4665, %v4697
        %v4730 = vmax.f32 %v4666, %v4698
        %v4731 = vmax.f32 %v4667, %v4699
        %v4732 = vmax.f32 %v4668, %v4700
        %v4733 = vmax.f32 %v4669, %v4701
        %v4734 = vmax.f32 %v4670, %v4702
        %v4735 = vmax.f32 %v4671, %v4703
        %v4736 = vmax.f32 %v4672, %v4704
        %v4737 = vmax.f32 %v4673, %v4705
        %v4738 = vmax.f32 %v4674, %v4706
        %v4739 = vmax.f32 %v4675, %v4707
        %v4740 = vmax.f32 %v4676, %v4708
        %v4741 = vmax.f32 %v4677, %v4709
        %v4742 = vmax.f32 %v4678, %v4710
        %v4743 = vmax.f32 %v4679, %v4711
        %v4744 = vmax.f32 %v4680, %v4712
        %v4745 = vmax.f32 %v4681, %v4713
        %v4746 = vmax.f32 %v4682, %v4714
        %v4747 = vmax.f32 %v4683, %v4715
        %v4748 = vmax.f32 %v4684, %v4716
        %v4749 = vmax.f32 %v4685, %v4717
        %v4750 = vmax.f32 %v4686, %v4718
        %v4751 = vmax.f32 %v4687, %v4719
        %v4752 = vmax.f32 %v4688, %v4720
        %v4753 = vmax.f32 %v4689, %v4721
        %v4754 = vmax.f32 %v4690, %v4722
        %v4755 = vmax.f32 %v4691, %v4723
        %v4756 = vmax.f32 %v4692, %v4724
        %v4757 = vmax.f32 %v4693, %v4725
        %v4758 = vmax.f32 %v4694, %v4726
        %v4759 = vmax.f32 %v4695, %v4727
        %v4760 = vld [vmem:[%s4503 + $0x1] sm:$0xff]
        %v4761 = vld [vmem:[%s4503 + $0x9] sm:$0xff]
        %v4762 = vld [vmem:[%s4503 + $0x19] sm:$0xff]
        %v4763 = vld [vmem:[%s4503 + $0x21] sm:$0xff]
        %v4764 = vld [vmem:[%s4503 + $0x31] sm:$0xff]
        %v4765 = vld [vmem:[%s4503 + $0x39] sm:$0xff]
        %v4766 = vld [vmem:[%s4503 + $0x49] sm:$0xff]
        %v4767 = vld [vmem:[%s4503 + $0x51] sm:$0xff]
        %v4768 = vld [vmem:[%s4503 + $0x61] sm:$0xff]
        %v4769 = vld [vmem:[%s4503 + $0x69] sm:$0xff]
        %v4770 = vld [vmem:[%s4503 + $0x79] sm:$0xff]
        %v4771 = vld [vmem:[%s4503 + $0x81] sm:$0xff]
        %v4772 = vld [vmem:[%s4503 + $0x91] sm:$0xff]
        %v4773 = vld [vmem:[%s4503 + $0x99] sm:$0xff]
        %v4774 = vld [vmem:[%s4503 + $0xa9] sm:$0xff]
        %v4775 = vld [vmem:[%s4503 + $0xb1] sm:$0xff]
        %v4776 = vld [vmem:[%s4503 + $0xc1] sm:$0xff]
        %v4777 = vld [vmem:[%s4503 + $0xc9] sm:$0xff]
        %v4778 = vld [vmem:[%s4503 + $0xd9] sm:$0xff]
        %v4779 = vld [vmem:[%s4503 + $0xe1] sm:$0xff]
        %v4780 = vld [vmem:[%s4503 + $0xf1] sm:$0xff]
        %v4781 = vld [vmem:[%s4503 + $0xf9] sm:$0xff]
        %v4782 = vld [vmem:[%s4503 + $0x109] sm:$0xff]
        %v4783 = vld [vmem:[%s4503 + $0x111] sm:$0xff]
        %v4784 = vld [vmem:[%s4503 + $0x121] sm:$0xff]
        %v4785 = vld [vmem:[%s4503 + $0x129] sm:$0xff]
        %v4786 = vld [vmem:[%s4503 + $0x139] sm:$0xff]
        %v4787 = vld [vmem:[%s4503 + $0x141] sm:$0xff]
        %v4788 = vld [vmem:[%s4503 + $0x151] sm:$0xff]
        %v4789 = vld [vmem:[%s4503 + $0x159] sm:$0xff]
        %v4790 = vld [vmem:[%s4503 + $0x169] sm:$0xff]
        %v4791 = vld [vmem:[%s4503 + $0x171] sm:$0xff]
        %v4792 = vmax.f32 %v4728, %v4760
        %v4793 = vmax.f32 %v4729, %v4761
        %v4794 = vmax.f32 %v4730, %v4762
        %v4795 = vmax.f32 %v4731, %v4763
        %v4796 = vmax.f32 %v4732, %v4764
        %v4797 = vmax.f32 %v4733, %v4765
        %v4798 = vmax.f32 %v4734, %v4766
        %v4799 = vmax.f32 %v4735, %v4767
        %v4800 = vmax.f32 %v4736, %v4768
        %v4801 = vmax.f32 %v4737, %v4769
        %v4802 = vmax.f32 %v4738, %v4770
        %v4803 = vmax.f32 %v4739, %v4771
        %v4804 = vmax.f32 %v4740, %v4772
        %v4805 = vmax.f32 %v4741, %v4773
        %v4806 = vmax.f32 %v4742, %v4774
        %v4807 = vmax.f32 %v4743, %v4775
        %v4808 = vmax.f32 %v4744, %v4776
        %v4809 = vmax.f32 %v4745, %v4777
        %v4810 = vmax.f32 %v4746, %v4778
        %v4811 = vmax.f32 %v4747, %v4779
        %v4812 = vmax.f32 %v4748, %v4780
        %v4813 = vmax.f32 %v4749, %v4781
        %v4814 = vmax.f32 %v4750, %v4782
        %v4815 = vmax.f32 %v4751, %v4783
        %v4816 = vmax.f32 %v4752, %v4784
        %v4817 = vmax.f32 %v4753, %v4785
        %v4818 = vmax.f32 %v4754, %v4786
        %v4819 = vmax.f32 %v4755, %v4787
        %v4820 = vmax.f32 %v4756, %v4788
        %v4821 = vmax.f32 %v4757, %v4789
        %v4822 = vmax.f32 %v4758, %v4790
        %v4823 = vmax.f32 %v4759, %v4791
        %v4824 = vld [vmem:[%s4503 + $0x2] sm:$0xff]
        %v4825 = vld [vmem:[%s4503 + $0xa] sm:$0xff]
        %v4826 = vld [vmem:[%s4503 + $0x1a] sm:$0xff]
        %v4827 = vld [vmem:[%s4503 + $0x22] sm:$0xff]
        %v4828 = vld [vmem:[%s4503 + $0x32] sm:$0xff]
        %v4829 = vld [vmem:[%s4503 + $0x3a] sm:$0xff]
        %v4830 = vld [vmem:[%s4503 + $0x4a] sm:$0xff]
        %v4831 = vld [vmem:[%s4503 + $0x52] sm:$0xff]
        %v4832 = vld [vmem:[%s4503 + $0x62] sm:$0xff]
        %v4833 = vld [vmem:[%s4503 + $0x6a] sm:$0xff]
        %v4834 = vld [vmem:[%s4503 + $0x7a] sm:$0xff]
        %v4835 = vld [vmem:[%s4503 + $0x82] sm:$0xff]
        %v4836 = vld [vmem:[%s4503 + $0x92] sm:$0xff]
        %v4837 = vld [vmem:[%s4503 + $0x9a] sm:$0xff]
        %v4838 = vld [vmem:[%s4503 + $0xaa] sm:$0xff]
        %v4839 = vld [vmem:[%s4503 + $0xb2] sm:$0xff]
        %v4840 = vld [vmem:[%s4503 + $0xc2] sm:$0xff]
        %v4841 = vld [vmem:[%s4503 + $0xca] sm:$0xff]
        %v4842 = vld [vmem:[%s4503 + $0xda] sm:$0xff]
        %v4843 = vld [vmem:[%s4503 + $0xe2] sm:$0xff]
        %v4844 = vld [vmem:[%s4503 + $0xf2] sm:$0xff]
        %v4845 = vld [vmem:[%s4503 + $0xfa] sm:$0xff]
        %v4846 = vld [vmem:[%s4503 + $0x10a] sm:$0xff]
        %v4847 = vld [vmem:[%s4503 + $0x112] sm:$0xff]
        %v4848 = vld [vmem:[%s4503 + $0x122] sm:$0xff]
        %v4849 = vld [vmem:[%s4503 + $0x12a] sm:$0xff]
        %v4850 = vld [vmem:[%s4503 + $0x13a] sm:$0xff]
        %v4851 = vld [vmem:[%s4503 + $0x142] sm:$0xff]
        %v4852 = vld [vmem:[%s4503 + $0x152] sm:$0xff]
        %v4853 = vld [vmem:[%s4503 + $0x15a] sm:$0xff]
        %v4854 = vld [vmem:[%s4503 + $0x16a] sm:$0xff]
        %v4855 = vld [vmem:[%s4503 + $0x172] sm:$0xff]
        %v4856 = vmax.f32 %v4792, %v4824
        %v4857 = vmax.f32 %v4793, %v4825
        %v4858 = vmax.f32 %v4794, %v4826
        %v4859 = vmax.f32 %v4795, %v4827
        %v4860 = vmax.f32 %v4796, %v4828
        %v4861 = vmax.f32 %v4797, %v4829
        %v4862 = vmax.f32 %v4798, %v4830
        %v4863 = vmax.f32 %v4799, %v4831
        %v4864 = vmax.f32 %v4800, %v4832
        %v4865 = vmax.f32 %v4801, %v4833
        %v4866 = vmax.f32 %v4802, %v4834
        %v4867 = vmax.f32 %v4803, %v4835
        %v4868 = vmax.f32 %v4804, %v4836
        %v4869 = vmax.f32 %v4805, %v4837
        %v4870 = vmax.f32 %v4806, %v4838
        %v4871 = vmax.f32 %v4807, %v4839
        %v4872 = vmax.f32 %v4808, %v4840
        %v4873 = vmax.f32 %v4809, %v4841
        %v4874 = vmax.f32 %v4810, %v4842
        %v4875 = vmax.f32 %v4811, %v4843
        %v4876 = vmax.f32 %v4812, %v4844
        %v4877 = vmax.f32 %v4813, %v4845
        %v4878 = vmax.f32 %v4814, %v4846
        %v4879 = vmax.f32 %v4815, %v4847
        %v4880 = vmax.f32 %v4816, %v4848
        %v4881 = vmax.f32 %v4817, %v4849
        %v4882 = vmax.f32 %v4818, %v4850
        %v4883 = vmax.f32 %v4819, %v4851
        %v4884 = vmax.f32 %v4820, %v4852
        %v4885 = vmax.f32 %v4821, %v4853
        %v4886 = vmax.f32 %v4822, %v4854
        %v4887 = vmax.f32 %v4823, %v4855
        %s4888 = scalar_lea.vmem [#allocation3], 48
        %v4889 = vld [vmem:[%s4888] sm:$0xff]
        %v4890 = vld [vmem:[%s4888 + $0x8] sm:$0xff]
        %v4891 = vld [vmem:[%s4888 + $0x18] sm:$0xff]
        %v4892 = vld [vmem:[%s4888 + $0x20] sm:$0xff]
        %v4893 = vld [vmem:[%s4888 + $0x30] sm:$0xff]
        %v4894 = vld [vmem:[%s4888 + $0x38] sm:$0xff]
        %v4895 = vld [vmem:[%s4888 + $0x48] sm:$0xff]
        %v4896 = vld [vmem:[%s4888 + $0x50] sm:$0xff]
        %v4897 = vld [vmem:[%s4888 + $0x60] sm:$0xff]
        %v4898 = vld [vmem:[%s4888 + $0x68] sm:$0xff]
        %v4899 = vld [vmem:[%s4888 + $0x78] sm:$0xff]
        %v4900 = vld [vmem:[%s4888 + $0x80] sm:$0xff]
        %v4901 = vld [vmem:[%s4888 + $0x90] sm:$0xff]
        %v4902 = vld [vmem:[%s4888 + $0x98] sm:$0xff]
        %v4903 = vld [vmem:[%s4888 + $0xa8] sm:$0xff]
        %v4904 = vld [vmem:[%s4888 + $0xb0] sm:$0xff]
        %v4905 = vld [vmem:[%s4888 + $0xc0] sm:$0xff]
        %v4906 = vld [vmem:[%s4888 + $0xc8] sm:$0xff]
        %v4907 = vld [vmem:[%s4888 + $0xd8] sm:$0xff]
        %v4908 = vld [vmem:[%s4888 + $0xe0] sm:$0xff]
        %v4909 = vld [vmem:[%s4888 + $0xf0] sm:$0xff]
        %v4910 = vld [vmem:[%s4888 + $0xf8] sm:$0xff]
        %v4911 = vld [vmem:[%s4888 + $0x108] sm:$0xff]
        %v4912 = vld [vmem:[%s4888 + $0x110] sm:$0xff]
        %v4913 = vld [vmem:[%s4888 + $0x120] sm:$0xff]
        %v4914 = vld [vmem:[%s4888 + $0x128] sm:$0xff]
        %v4915 = vld [vmem:[%s4888 + $0x138] sm:$0xff]
        %v4916 = vld [vmem:[%s4888 + $0x140] sm:$0xff]
        %v4917 = vld [vmem:[%s4888 + $0x150] sm:$0xff]
        %v4918 = vld [vmem:[%s4888 + $0x158] sm:$0xff]
        %v4919 = vld [vmem:[%s4888 + $0x168] sm:$0xff]
        %v4920 = vld [vmem:[%s4888 + $0x170] sm:$0xff]
        %v4921 = vmax.f32 %v4856, %v4889
        %v4922 = vmax.f32 %v4857, %v4890
        %v4923 = vmax.f32 %v4858, %v4891
        %v4924 = vmax.f32 %v4859, %v4892
        %v4925 = vmax.f32 %v4860, %v4893
        %v4926 = vmax.f32 %v4861, %v4894
        %v4927 = vmax.f32 %v4862, %v4895
        %v4928 = vmax.f32 %v4863, %v4896
        %v4929 = vmax.f32 %v4864, %v4897
        %v4930 = vmax.f32 %v4865, %v4898
        %v4931 = vmax.f32 %v4866, %v4899
        %v4932 = vmax.f32 %v4867, %v4900
        %v4933 = vmax.f32 %v4868, %v4901
        %v4934 = vmax.f32 %v4869, %v4902
        %v4935 = vmax.f32 %v4870, %v4903
        %v4936 = vmax.f32 %v4871, %v4904
        %v4937 = vmax.f32 %v4872, %v4905
        %v4938 = vmax.f32 %v4873, %v4906
        %v4939 = vmax.f32 %v4874, %v4907
        %v4940 = vmax.f32 %v4875, %v4908
        %v4941 = vmax.f32 %v4876, %v4909
        %v4942 = vmax.f32 %v4877, %v4910
        %v4943 = vmax.f32 %v4878, %v4911
        %v4944 = vmax.f32 %v4879, %v4912
        %v4945 = vmax.f32 %v4880, %v4913
        %v4946 = vmax.f32 %v4881, %v4914
        %v4947 = vmax.f32 %v4882, %v4915
        %v4948 = vmax.f32 %v4883, %v4916
        %v4949 = vmax.f32 %v4884, %v4917
        %v4950 = vmax.f32 %v4885, %v4918
        %v4951 = vmax.f32 %v4886, %v4919
        %v4952 = vmax.f32 %v4887, %v4920
        %v4953 = vld [vmem:[%s4888 + $0x1] sm:$0xff]
        %v4954 = vld [vmem:[%s4888 + $0x9] sm:$0xff]
        %v4955 = vld [vmem:[%s4888 + $0x19] sm:$0xff]
        %v4956 = vld [vmem:[%s4888 + $0x21] sm:$0xff]
        %v4957 = vld [vmem:[%s4888 + $0x31] sm:$0xff]
        %v4958 = vld [vmem:[%s4888 + $0x39] sm:$0xff]
        %v4959 = vld [vmem:[%s4888 + $0x49] sm:$0xff]
        %v4960 = vld [vmem:[%s4888 + $0x51] sm:$0xff]
        %v4961 = vld [vmem:[%s4888 + $0x61] sm:$0xff]
        %v4962 = vld [vmem:[%s4888 + $0x69] sm:$0xff]
        %v4963 = vld [vmem:[%s4888 + $0x79] sm:$0xff]
        %v4964 = vld [vmem:[%s4888 + $0x81] sm:$0xff]
        %v4965 = vld [vmem:[%s4888 + $0x91] sm:$0xff]
        %v4966 = vld [vmem:[%s4888 + $0x99] sm:$0xff]
        %v4967 = vld [vmem:[%s4888 + $0xa9] sm:$0xff]
        %v4968 = vld [vmem:[%s4888 + $0xb1] sm:$0xff]
        %v4969 = vld [vmem:[%s4888 + $0xc1] sm:$0xff]
        %v4970 = vld [vmem:[%s4888 + $0xc9] sm:$0xff]
        %v4971 = vld [vmem:[%s4888 + $0xd9] sm:$0xff]
        %v4972 = vld [vmem:[%s4888 + $0xe1] sm:$0xff]
        %v4973 = vld [vmem:[%s4888 + $0xf1] sm:$0xff]
        %v4974 = vld [vmem:[%s4888 + $0xf9] sm:$0xff]
        %v4975 = vld [vmem:[%s4888 + $0x109] sm:$0xff]
        %v4976 = vld [vmem:[%s4888 + $0x111] sm:$0xff]
        %v4977 = vld [vmem:[%s4888 + $0x121] sm:$0xff]
        %v4978 = vld [vmem:[%s4888 + $0x129] sm:$0xff]
        %v4979 = vld [vmem:[%s4888 + $0x139] sm:$0xff]
        %v4980 = vld [vmem:[%s4888 + $0x141] sm:$0xff]
        %v4981 = vld [vmem:[%s4888 + $0x151] sm:$0xff]
        %v4982 = vld [vmem:[%s4888 + $0x159] sm:$0xff]
        %v4983 = vld [vmem:[%s4888 + $0x169] sm:$0xff]
        %v4984 = vld [vmem:[%s4888 + $0x171] sm:$0xff]
        %v4985 = vmax.f32 %v4921, %v4953
        %v4986 = vmax.f32 %v4922, %v4954
        %v4987 = vmax.f32 %v4923, %v4955
        %v4988 = vmax.f32 %v4924, %v4956
        %v4989 = vmax.f32 %v4925, %v4957
        %v4990 = vmax.f32 %v4926, %v4958
        %v4991 = vmax.f32 %v4927, %v4959
        %v4992 = vmax.f32 %v4928, %v4960
        %v4993 = vmax.f32 %v4929, %v4961
        %v4994 = vmax.f32 %v4930, %v4962
        %v4995 = vmax.f32 %v4931, %v4963
        %v4996 = vmax.f32 %v4932, %v4964
        %v4997 = vmax.f32 %v4933, %v4965
        %v4998 = vmax.f32 %v4934, %v4966
        %v4999 = vmax.f32 %v4935, %v4967
        %v5000 = vmax.f32 %v4936, %v4968
        %v5001 = vmax.f32 %v4937, %v4969
        %v5002 = vmax.f32 %v4938, %v4970
        %v5003 = vmax.f32 %v4939, %v4971
        %v5004 = vmax.f32 %v4940, %v4972
        %v5005 = vmax.f32 %v4941, %v4973
        %v5006 = vmax.f32 %v4942, %v4974
        %v5007 = vmax.f32 %v4943, %v4975
        %v5008 = vmax.f32 %v4944, %v4976
        %v5009 = vmax.f32 %v4945, %v4977
        %v5010 = vmax.f32 %v4946, %v4978
        %v5011 = vmax.f32 %v4947, %v4979
        %v5012 = vmax.f32 %v4948, %v4980
        %v5013 = vmax.f32 %v4949, %v4981
        %v5014 = vmax.f32 %v4950, %v4982
        %v5015 = vmax.f32 %v4951, %v4983
        %v5016 = vmax.f32 %v4952, %v4984
        %v5017 = vld [vmem:[%s4888 + $0x2] sm:$0xff]
        %v5018 = vld [vmem:[%s4888 + $0xa] sm:$0xff]
        %v5019 = vld [vmem:[%s4888 + $0x1a] sm:$0xff]
        %v5020 = vld [vmem:[%s4888 + $0x22] sm:$0xff]
        %v5021 = vld [vmem:[%s4888 + $0x32] sm:$0xff]
        %v5022 = vld [vmem:[%s4888 + $0x3a] sm:$0xff]
        %v5023 = vld [vmem:[%s4888 + $0x4a] sm:$0xff]
        %v5024 = vld [vmem:[%s4888 + $0x52] sm:$0xff]
        %v5025 = vld [vmem:[%s4888 + $0x62] sm:$0xff]
        %v5026 = vld [vmem:[%s4888 + $0x6a] sm:$0xff]
        %v5027 = vld [vmem:[%s4888 + $0x7a] sm:$0xff]
        %v5028 = vld [vmem:[%s4888 + $0x82] sm:$0xff]
        %v5029 = vld [vmem:[%s4888 + $0x92] sm:$0xff]
        %v5030 = vld [vmem:[%s4888 + $0x9a] sm:$0xff]
        %v5031 = vld [vmem:[%s4888 + $0xaa] sm:$0xff]
        %v5032 = vld [vmem:[%s4888 + $0xb2] sm:$0xff]
        %v5033 = vld [vmem:[%s4888 + $0xc2] sm:$0xff]
        %v5034 = vld [vmem:[%s4888 + $0xca] sm:$0xff]
        %v5035 = vld [vmem:[%s4888 + $0xda] sm:$0xff]
        %v5036 = vld [vmem:[%s4888 + $0xe2] sm:$0xff]
        %v5037 = vld [vmem:[%s4888 + $0xf2] sm:$0xff]
        %v5038 = vld [vmem:[%s4888 + $0xfa] sm:$0xff]
        %v5039 = vld [vmem:[%s4888 + $0x10a] sm:$0xff]
        %v5040 = vld [vmem:[%s4888 + $0x112] sm:$0xff]
        %v5041 = vld [vmem:[%s4888 + $0x122] sm:$0xff]
        %v5042 = vld [vmem:[%s4888 + $0x12a] sm:$0xff]
        %v5043 = vld [vmem:[%s4888 + $0x13a] sm:$0xff]
        %v5044 = vld [vmem:[%s4888 + $0x142] sm:$0xff]
        %v5045 = vld [vmem:[%s4888 + $0x152] sm:$0xff]
        %v5046 = vld [vmem:[%s4888 + $0x15a] sm:$0xff]
        %v5047 = vld [vmem:[%s4888 + $0x16a] sm:$0xff]
        %v5048 = vld [vmem:[%s4888 + $0x172] sm:$0xff]
        %v5049 = vmax.f32 %v4985, %v5017
        %v5050 = vmax.f32 %v4986, %v5018
        %v5051 = vmax.f32 %v4987, %v5019
        %v5052 = vmax.f32 %v4988, %v5020
        %v5053 = vmax.f32 %v4989, %v5021
        %v5054 = vmax.f32 %v4990, %v5022
        %v5055 = vmax.f32 %v4991, %v5023
        %v5056 = vmax.f32 %v4992, %v5024
        %v5057 = vmax.f32 %v4993, %v5025
        %v5058 = vmax.f32 %v4994, %v5026
        %v5059 = vmax.f32 %v4995, %v5027
        %v5060 = vmax.f32 %v4996, %v5028
        %v5061 = vmax.f32 %v4997, %v5029
        %v5062 = vmax.f32 %v4998, %v5030
        %v5063 = vmax.f32 %v4999, %v5031
        %v5064 = vmax.f32 %v5000, %v5032
        %v5065 = vmax.f32 %v5001, %v5033
        %v5066 = vmax.f32 %v5002, %v5034
        %v5067 = vmax.f32 %v5003, %v5035
        %v5068 = vmax.f32 %v5004, %v5036
        %v5069 = vmax.f32 %v5005, %v5037
        %v5070 = vmax.f32 %v5006, %v5038
        %v5071 = vmax.f32 %v5007, %v5039
        %v5072 = vmax.f32 %v5008, %v5040
        %v5073 = vmax.f32 %v5009, %v5041
        %v5074 = vmax.f32 %v5010, %v5042
        %v5075 = vmax.f32 %v5011, %v5043
        %v5076 = vmax.f32 %v5012, %v5044
        %v5077 = vmax.f32 %v5013, %v5045
        %v5078 = vmax.f32 %v5014, %v5046
        %v5079 = vmax.f32 %v5015, %v5047
        %v5080 = vmax.f32 %v5016, %v5048
        %v5081 = vadd.f32 %v5049, %v615
        %v5082 = vadd.f32 %v5050, %v618
        %v5083 = vadd.f32 %v5051, %v623
        %v5084 = vadd.f32 %v5052, %v626
        %v5085 = vadd.f32 %v5053, %v631
        %v5086 = vadd.f32 %v5054, %v634
        %v5087 = vadd.f32 %v5055, %v639
        %v5088 = vadd.f32 %v5056, %v642
        %v5089 = vadd.f32 %v5057, %v647
        %v5090 = vadd.f32 %v5058, %v650
        %v5091 = vadd.f32 %v5059, %v655
        %v5092 = vadd.f32 %v5060, %v658
        %v5093 = vadd.f32 %v5061, %v663
        %v5094 = vadd.f32 %v5062, %v666
        %v5095 = vadd.f32 %v5063, %v671
        %v5096 = vadd.f32 %v5064, %v674
        %v5097 = vadd.f32 %v5065, %v679
        %v5098 = vadd.f32 %v5066, %v682
        %v5099 = vadd.f32 %v5067, %v687
        %v5100 = vadd.f32 %v5068, %v690
        %v5101 = vadd.f32 %v5069, %v695
        %v5102 = vadd.f32 %v5070, %v698
        %v5103 = vadd.f32 %v5071, %v703
        %v5104 = vadd.f32 %v5072, %v706
        %v5105 = vadd.f32 %v5073, %v711
        %v5106 = vadd.f32 %v5074, %v714
        %v5107 = vadd.f32 %v5075, %v719
        %v5108 = vadd.f32 %v5076, %v722
        %v5109 = vadd.f32 %v5077, %v727
        %v5110 = vadd.f32 %v5078, %v730
        %v5111 = vadd.f32 %v5079, %v735
        %v5112 = vadd.f32 %v5080, %v738
        %5113 = vst [vmem:[%s271] sm:$0xff] %v5081
        %5114 = vst [vmem:[%s271 + $0x8] sm:$0xff] %v5082
        %5115 = vst [vmem:[%s271 + $0x10] sm:$0xff] %v5083
        %5116 = vst [vmem:[%s271 + $0x18] sm:$0xff] %v5084
        %5117 = vst [vmem:[%s271 + $0x20] sm:$0xff] %v5085
        %5118 = vst [vmem:[%s271 + $0x28] sm:$0xff] %v5086
        %5119 = vst [vmem:[%s271 + $0x30] sm:$0xff] %v5087
        %5120 = vst [vmem:[%s271 + $0x38] sm:$0xff] %v5088
        %5121 = vst [vmem:[%s271 + $0x40] sm:$0xff] %v5089
        %5122 = vst [vmem:[%s271 + $0x48] sm:$0xff] %v5090
        %5123 = vst [vmem:[%s271 + $0x50] sm:$0xff] %v5091
        %5124 = vst [vmem:[%s271 + $0x58] sm:$0xff] %v5092
        %5125 = vst [vmem:[%s271 + $0x60] sm:$0xff] %v5093
        %5126 = vst [vmem:[%s271 + $0x68] sm:$0xff] %v5094
        %5127 = vst [vmem:[%s271 + $0x70] sm:$0xff] %v5095
        %5128 = vst [vmem:[%s271 + $0x78] sm:$0xff] %v5096
        %5129 = vst [vmem:[%s271 + $0x80] sm:$0xff] %v5097
        %5130 = vst [vmem:[%s271 + $0x88] sm:$0xff] %v5098
        %5131 = vst [vmem:[%s271 + $0x90] sm:$0xff] %v5099
        %5132 = vst [vmem:[%s271 + $0x98] sm:$0xff] %v5100
        %5133 = vst [vmem:[%s271 + $0xa0] sm:$0xff] %v5101
        %5134 = vst [vmem:[%s271 + $0xa8] sm:$0xff] %v5102
        %5135 = vst [vmem:[%s271 + $0xb0] sm:$0xff] %v5103
        %5136 = vst [vmem:[%s271 + $0xb8] sm:$0xff] %v5104
        %5137 = vst [vmem:[%s271 + $0xc0] sm:$0xff] %v5105
        %5138 = vst [vmem:[%s271 + $0xc8] sm:$0xff] %v5106
        %5139 = vst [vmem:[%s271 + $0xd0] sm:$0xff] %v5107
        %5140 = vst [vmem:[%s271 + $0xd8] sm:$0xff] %v5108
        %5141 = vst [vmem:[%s271 + $0xe0] sm:$0xff] %v5109
        %5142 = vst [vmem:[%s271 + $0xe8] sm:$0xff] %v5110
        %5143 = vst [vmem:[%s271 + $0xf0] sm:$0xff] %v5111
        %5144 = vst [vmem:[%s271 + $0xf8] sm:$0xff] %v5112
        %s5145 = sand.u32 %s181, 1
        %s5146 = scalar_lea.sflag [#allocation5], %s5145
        %s5147 = sand.u32 %s181, 1
        %s5148 = smul.addr %s5147, 256
        %s5149 = scalar_lea.vmem [#allocation4], %s5148
        // Predicated region
        $region49: #{tpu_custom_call.1} parent=47 // pred_check
          %p5150 = pneg %p191
        $region50: #{tpu_custom_call.1} parent=47 // pred_check_branch
          %5152 = sbr.rel (%p5150) target = $region52
        $region51: #{tpu_custom_call.1} parent=47 // pred_region
          %s5154 = ssub.s32 4096, 4096
          %5155 = vsyncadd %s5146, %s5154
          %s5156 = smul.addr %s21, 32
          %s5157 = smul.addr %s5156, 128
          %s5158 = scalar_lea.hbm %s7, %s5157
          %s5159 = sshll.u32 %s5149, 4
          %s5160 = int_to_ptr.vmem [resolvable:$true] %s5159
          %5165 = dma.vmem_to_hbm [thread:$0]  %s5160, 4096, %s5158, %s5146, 128, 128, 8
        $region52: #{tpu_custom_call.1} parent=47 // pred_fallthru
          _
      $region48: #{tpu_custom_call.1} parent=5 // pred_fallthru
        _
      %p5166 = scmp.le.s32.totalorder 2, %s16
      // Predicated region
      $region53: #{tpu_custom_call.1} parent=5 // pred_check
        %p5167 = pneg %p5166
      $region54: #{tpu_custom_call.1} parent=5 // pred_check_branch
        %5169 = sbr.rel (%p5167) target = $region56
      $region55: #{tpu_custom_call.1} parent=5 // pred_region
        %s5170 = ssub.s32 %s16, 2
        // Predicated region
        $region57: #{tpu_custom_call.1} parent=55 // pred_check
          %p5171 = pneg %p197
        $region58: #{tpu_custom_call.1} parent=55 // pred_check_branch
          %5173 = sbr.rel (%p5171) target = $region60
        $region59: #{tpu_custom_call.1} parent=55 // pred_region
          %s5174 = sand.u32 %s182, 1
          %s5175 = scalar_lea.sflag [#allocation5], %s5174
          %s5176 = sand.u32 %s182, 1
          %s5177 = smul.addr %s5176, 256
          %s5178 = scalar_lea.vmem [#allocation4], %s5177
          %5179 = dma.done %s5175, 4096
        $region60: #{tpu_custom_call.1} parent=55 // pred_fallthru
          _
      $region56: #{tpu_custom_call.1} parent=5 // pred_fallthru
        _
    $region6: #{tpu_custom_call.1} parent=1 // loop_footer
      %s20 = sadd.s32 1, %s16
    $region7: #{tpu_custom_call.1} parent=1 // loop_footer_branch
      %15 = sbr.rel target = $region3
    $region8: #{tpu_custom_call.1} parent=1 // loop_exit
      _
    %5180 = vsyncpa [#allocation5], 1
    %s5181 = scalar_lea.sflag [#allocation5], 1
    %5182 = vsyncpa %s5181, 1

</llo_original>
